<compile_context>
chip_gen: v5e
topology: v5e:2x2
jax: 0.10.0
libtpu: 0.0.40
codegen_flags: <defaults>
</compile_context>

<pallas_src>
import jax
import jax.numpy as jnp
import numpy as np
from jax.experimental import pallas as pl
from jax.experimental.pallas import tpu as pltpu

INPUT_SIZE = 28 * 28      # nn.Flatten() of (N, 1, 28, 28); decoder Unflatten -> (1, 28, 28)
LATENT_SIZE = 15
LATENT_PAD = 16           # latent padded to a full bf16 sublane pack (pads are exact zeros)
HIDDEN = 400
MAX_TILE_N = 512          # batch rows per grid step, upper bound

PARAM_ORDER = ("w1", "b1", "w2", "b2", "w3", "b3", "wh", "bh",
               "dw1", "db1", "dw2", "db2", "dw3", "db3", "dw4", "db4")


def _vae_kernel(x_ref, eps_ref,
                w1_ref, b1_ref, w2_ref, b2_ref, w3_ref, b3_ref,
                wh_ref, bh_ref,
                dw1_ref, db1_ref, dw2_ref, db2_ref, dw3_ref, db3_ref,
                dw4_ref, db4_ref,
                xhat_ref, heads_ref):
    f32 = jnp.float32
    bf16 = jnp.bfloat16

    def dense(h, w_ref, b_ref, relu):
        # bf16 x bf16 MXU matmul with f32 accumulation; bias add / ReLU in f32.
        y = jnp.dot(h.astype(bf16), w_ref[...], preferred_element_type=f32)
        y = y + b_ref[...]
        return jnp.maximum(y, 0.0) if relu else y

    # ---- encoder: Linear(784,400)+ReLU -> Linear(400,400)+ReLU -> Linear(400,400)+ReLU
    h = dense(x_ref[...], w1_ref, b1_ref, relu=True)
    h = dense(h, w2_ref, b2_ref, relu=True)
    h = dense(h, w3_ref, b3_ref, relu=True)

    # ---- fused, zero-padded mu/logvar head: one (400, 32) matmul, written once
    heads = dense(h, wh_ref, bh_ref, relu=False)          # (TILE_N, 2 * LATENT_PAD)
    heads_ref[...] = heads                                # mu / logvar sliced in the wrapper

    mu_p = heads[:, :LATENT_PAD]
    logvar_p = heads[:, LATENT_PAD:]

    # ---- reparametrize: z = sigma * eps + mu,  sigma = exp(0.5 * logvar)
    # Padding column 15 is exactly zero (zero head weights/bias, zero eps column).
    z = jnp.exp(0.5 * logvar_p) * eps_ref[...] + mu_p

    # ---- decoder: Linear(15->400)+ReLU x3 -> Linear(400,784) + Sigmoid
    d = dense(z, dw1_ref, db1_ref, relu=True)
    d = dense(d, dw2_ref, db2_ref, relu=True)
    d = dense(d, dw3_ref, db3_ref, relu=True)
    logits = dense(d, dw4_ref, db4_ref, relu=False)
    # sigmoid via EUP exp + approximate EUP reciprocal (VALU stays free).
    x_hat = pl.reciprocal(1.0 + jnp.exp(-logits), approx=True)
    xhat_ref[...] = x_hat.astype(xhat_ref.dtype)


def _round_up(n, m):
    return -(-n // m) * m


def _pick_tile_n(n):
    """Small batches: one minimal 8-aligned tile (block == full array, always legal).
    Larger batches: biggest 16-aligned tile <= MAX_TILE_N that still leaves >= 2
    grid steps, so both v7x TensorCores get work via the 'parallel' batch axis."""
    n8 = max(8, _round_up(n, 8))
    if n8 <= 16:
        return n8
    return int(min(MAX_TILE_N, _round_up(n8 // 2, 16)))


def _linear(key, fan_in, fan_out):
    """Deterministic PyTorch-style Linear init: U(-1/sqrt(fan_in), 1/sqrt(fan_in))."""
    kw, kb = jax.random.split(key)
    bound = 1.0 / float(fan_in) ** 0.5
    w = jax.random.uniform(kw, (fan_in, fan_out), jnp.float32, -bound, bound)
    b = jax.random.uniform(kb, (1, fan_out), jnp.float32, -bound, bound)
    return w, b


def init_vae_params(key):
    keys = jax.random.split(key, 9)
    pad = LATENT_PAD - LATENT_SIZE
    p = {}
    p["w1"], p["b1"] = _linear(keys[0], INPUT_SIZE, HIDDEN)
    p["w2"], p["b2"] = _linear(keys[1], HIDDEN, HIDDEN)
    p["w3"], p["b3"] = _linear(keys[2], HIDDEN, HIDDEN)
    wmu, bmu = _linear(keys[3], HIDDEN, LATENT_SIZE)
    wlv, blv = _linear(keys[4], HIDDEN, LATENT_SIZE)
    # Fused zero-padded (400, 32) head: columns [mu(15) | 0 | logvar(15) | 0].
    p["wh"] = jnp.concatenate(
        [jnp.pad(wmu, ((0, 0), (0, pad))), jnp.pad(wlv, ((0, 0), (0, pad)))], axis=1)
    p["bh"] = jnp.concatenate(
        [jnp.pad(bmu, ((0, 0), (0, pad))), jnp.pad(blv, ((0, 0), (0, pad)))], axis=1)
    dw1, p["db1"] = _linear(keys[5], LATENT_SIZE, HIDDEN)
    p["dw1"] = jnp.pad(dw1, ((0, pad), (0, 0)))            # (16, 400): full bf16 sublane pack
    p["dw2"], p["db2"] = _linear(keys[6], HIDDEN, HIDDEN)
    p["dw3"], p["db3"] = _linear(keys[7], HIDDEN, HIDDEN)
    p["dw4"], p["db4"] = _linear(keys[8], HIDDEN, INPUT_SIZE)
    # bf16 weights (halve weight DMA; MXU-native); keep f32 biases.
    for k in list(p):
        if k.startswith(("w", "dw")):
            p[k] = p[k].astype(jnp.bfloat16)
    return p


def vae_forward(x, eps, params):
    """x: (N, 1, 28, 28), eps: (N, 15) ~ N(0, 1).  Returns (x_hat, mu, logvar).

    Note: tile / padding is derived from the static batch size, so each distinct
    N triggers one retrace under jit (fine for fixed-batch use).
    """
    n = x.shape[0]
    tile_n = _pick_tile_n(n)
    n_pad = _round_up(n, tile_n)

    # bf16 activation streaming: x feeds a bf16 MXU matmul anyway.
    x_flat = x.reshape(n, -1).astype(jnp.bfloat16)         # nn.Flatten()
    eps_p = jnp.pad(eps.astype(jnp.float32),
                    ((0, n_pad - n), (0, LATENT_PAD - LATENT_SIZE)))
    if n_pad != n:
        x_flat = jnp.pad(x_flat, ((0, n_pad - n), (0, 0)))

    grid = (n_pad // tile_n,)

    def row_spec(width):
        return pl.BlockSpec((tile_n, width), lambda i: (i, 0))

    def resident_spec(shape):
        # Constant block index -> weight is DMA'd once and stays VMEM-resident.
        return pl.BlockSpec(shape, lambda i: (0, 0))

    operands = [x_flat, eps_p] + [params[k] for k in PARAM_ORDER]
    in_specs = ([row_spec(INPUT_SIZE), row_spec(LATENT_PAD)]
                + [resident_spec(params[k].shape) for k in PARAM_ORDER])
    out_specs = (row_spec(INPUT_SIZE), row_spec(2 * LATENT_PAD))
    out_shape = (jax.ShapeDtypeStruct((n_pad, INPUT_SIZE), jnp.bfloat16),
                 jax.ShapeDtypeStruct((n_pad, 2 * LATENT_PAD), jnp.float32))

    xhat_flat, heads = pl.pallas_call(
        _vae_kernel,
        grid=grid,
        in_specs=in_specs,
        out_specs=out_specs,
        out_shape=out_shape,
        compiler_params=pltpu.CompilerParams(
            dimension_semantics=("parallel",),
            vmem_limit_bytes=32 << 20),
    )(*operands)

    x_hat = xhat_flat[:n].astype(jnp.float32).reshape(n, 1, 28, 28)   # nn.Unflatten
    mu = heads[:n, :LATENT_SIZE]
    logvar = heads[:n, LATENT_PAD:LATENT_PAD + LATENT_SIZE]
    return x_hat, mu, logvar


def vae_reference(x, eps, params):
    """Plain-JAX reference with the same (bf16 weight, f32 accum) numerics,
    using the logical (un-padded) weights sliced out of the fused/padded ones."""
    f32, bf16 = jnp.float32, jnp.bfloat16

    def dense(h, w, b, relu):
        y = jnp.dot(h.astype(bf16), w.astype(bf16), preferred_element_type=f32)
        y = y + b.astype(f32)
        return jnp.maximum(y, 0.0) if relu else y

    n = x.shape[0]
    h = x.reshape(n, -1).astype(f32)
    h = dense(h, params["w1"], params["b1"], True)
    h = dense(h, params["w2"], params["b2"], True)
    h = dense(h, params["w3"], params["b3"], True)
    mu = dense(h, params["wh"][:, :LATENT_SIZE], params["bh"][:, :LATENT_SIZE], False)
    logvar = dense(h, params["wh"][:, LATENT_PAD:LATENT_PAD + LATENT_SIZE],
                   params["bh"][:, LATENT_PAD:LATENT_PAD + LATENT_SIZE], False)
    z = jnp.sqrt(jnp.exp(logvar)) * eps + mu               # original reparametrize formulation
    d = dense(z, params["dw1"][:LATENT_SIZE], params["db1"], True)
    d = dense(d, params["dw2"], params["db2"], True)
    d = dense(d, params["dw3"], params["db3"], True)
    x_hat = jax.nn.sigmoid(dense(d, params["dw4"], params["db4"], False))
    return x_hat.reshape(n, 1, 28, 28), mu, logvar


if __name__ == "__main__":
    key = jax.random.PRNGKey(0)
    k_param, k_x, k_eps = jax.random.split(key, 3)

    params = init_vae_params(k_param)

    N = 2
    x = jax.random.uniform(k_x, (N, 1, 28, 28), jnp.float32)
    # torch.randn_like(mu): epsilon is sampled outside the kernel (deterministic)
    # and fed in, so the reparameterization is reproducible.
    eps = jax.random.normal(k_eps, (N, LATENT_SIZE), jnp.float32)

    x_hat, mu, logvar = jax.jit(vae_forward)(x, eps, params)
    jax.block_until_ready((x_hat, mu, logvar))

    assert x_hat.shape == (N, 1, 28, 28)
    assert mu.shape == (N, LATENT_SIZE)
    assert logvar.shape == (N, LATENT_SIZE)

    rx, rm, rl = vae_reference(x, eps, params)
    np.testing.assert_allclose(np.asarray(x_hat), np.asarray(rx), rtol=1e-2, atol=1e-2)
    np.testing.assert_allclose(np.asarray(mu), np.asarray(rm), rtol=1e-2, atol=1e-2)
    np.testing.assert_allclose(np.asarray(logvar), np.asarray(rl), rtol=1e-2, atol=1e-2)

    print("KERNEL_OK")
</pallas_src>

<mosaic_0001>
module attributes {stable_mosaic.version = 11 : i64} {
  func.func @_vae_kernel(%arg0: i32, %arg1: memref<8x784xbf16, #tpu.memory_space<vmem>>, %arg2: memref<8x16xf32, #tpu.memory_space<vmem>>, %arg3: memref<784x400xbf16, #tpu.memory_space<vmem>>, %arg4: memref<1x400xf32, #tpu.memory_space<vmem>>, %arg5: memref<400x400xbf16, #tpu.memory_space<vmem>>, %arg6: memref<1x400xf32, #tpu.memory_space<vmem>>, %arg7: memref<400x400xbf16, #tpu.memory_space<vmem>>, %arg8: memref<1x400xf32, #tpu.memory_space<vmem>>, %arg9: memref<400x32xbf16, #tpu.memory_space<vmem>>, %arg10: memref<1x32xf32, #tpu.memory_space<vmem>>, %arg11: memref<16x400xbf16, #tpu.memory_space<vmem>>, %arg12: memref<1x400xf32, #tpu.memory_space<vmem>>, %arg13: memref<400x400xbf16, #tpu.memory_space<vmem>>, %arg14: memref<1x400xf32, #tpu.memory_space<vmem>>, %arg15: memref<400x400xbf16, #tpu.memory_space<vmem>>, %arg16: memref<1x400xf32, #tpu.memory_space<vmem>>, %arg17: memref<400x784xbf16, #tpu.memory_space<vmem>>, %arg18: memref<1x784xf32, #tpu.memory_space<vmem>>, %arg19: memref<8x784xbf16, #tpu.memory_space<vmem>>, %arg20: memref<8x32xf32, #tpu.memory_space<vmem>>) attributes {dimension_semantics = [#tpu.dimension_semantics<parallel>], iteration_bounds = array<i64: 1>, scalar_prefetch = 0 : i64, scratch_operands = 0 : i64, tpu.core_type = #tpu.core_type<tc>, window_params = [{transform_indices = @transform_0, window_bounds = array<i64: 8, 784>}, {transform_indices = @transform_1, window_bounds = array<i64: 8, 16>}, {pipeline_mode = #tpu.pipeline_mode<synchronous>, transform_indices = @transform_2, window_bounds = array<i64: 784, 400>}, {pipeline_mode = #tpu.pipeline_mode<synchronous>, transform_indices = @transform_3, window_bounds = array<i64: 1, 400>}, {pipeline_mode = #tpu.pipeline_mode<synchronous>, transform_indices = @transform_4, window_bounds = array<i64: 400, 400>}, {pipeline_mode = #tpu.pipeline_mode<synchronous>, transform_indices = @transform_5, window_bounds = array<i64: 1, 400>}, {pipeline_mode = #tpu.pipeline_mode<synchronous>, transform_indices = @transform_6, window_bounds = array<i64: 400, 400>}, {pipeline_mode = #tpu.pipeline_mode<synchronous>, transform_indices = @transform_7, window_bounds = array<i64: 1, 400>}, {pipeline_mode = #tpu.pipeline_mode<synchronous>, transform_indices = @transform_8, window_bounds = array<i64: 400, 32>}, {pipeline_mode = #tpu.pipeline_mode<synchronous>, transform_indices = @transform_9, window_bounds = array<i64: 1, 32>}, {pipeline_mode = #tpu.pipeline_mode<synchronous>, transform_indices = @transform_10, window_bounds = array<i64: 16, 400>}, {pipeline_mode = #tpu.pipeline_mode<synchronous>, transform_indices = @transform_11, window_bounds = array<i64: 1, 400>}, {pipeline_mode = #tpu.pipeline_mode<synchronous>, transform_indices = @transform_12, window_bounds = array<i64: 400, 400>}, {pipeline_mode = #tpu.pipeline_mode<synchronous>, transform_indices = @transform_13, window_bounds = array<i64: 1, 400>}, {pipeline_mode = #tpu.pipeline_mode<synchronous>, transform_indices = @transform_14, window_bounds = array<i64: 400, 400>}, {pipeline_mode = #tpu.pipeline_mode<synchronous>, transform_indices = @transform_15, window_bounds = array<i64: 1, 400>}, {pipeline_mode = #tpu.pipeline_mode<synchronous>, transform_indices = @transform_16, window_bounds = array<i64: 400, 784>}, {pipeline_mode = #tpu.pipeline_mode<synchronous>, transform_indices = @transform_17, window_bounds = array<i64: 1, 784>}, {transform_indices = @transform_18, window_bounds = array<i64: 8, 784>}, {transform_indices = @transform_19, window_bounds = array<i64: 8, 32>}]} {
    %c0 = arith.constant 0 : index
    %c0_0 = arith.constant 0 : index
    %0 = vector.load %arg1[%c0, %c0_0] : memref<8x784xbf16, #tpu.memory_space<vmem>>, vector<8x784xbf16>
    %c0_1 = arith.constant 0 : index
    %c0_2 = arith.constant 0 : index
    %1 = vector.load %arg3[%c0_1, %c0_2] : memref<784x400xbf16, #tpu.memory_space<vmem>>, vector<784x400xbf16>
    %cst = arith.constant dense<0.000000e+00> : vector<8x400xf32>
    %2 = tpu.matmul %0, %1, %cst {dimension_numbers = #tpu.dot_dimension_numbers<[1], [0], [0], [1], [0, 0, 1, 1], [], []>} : vector<8x784xbf16>, vector<784x400xbf16>, vector<8x400xf32> -> vector<8x400xf32>
    %c0_3 = arith.constant 0 : index
    %c0_4 = arith.constant 0 : index
    %3 = vector.load %arg4[%c0_3, %c0_4] : memref<1x400xf32, #tpu.memory_space<vmem>>, vector<1x400xf32>
    %4 = vector.broadcast %3 : vector<1x400xf32> to vector<8x400xf32>
    %5 = arith.addf %2, %4 : vector<8x400xf32>
    %cst_5 = arith.constant 0.000000e+00 : f32
    %6 = vector.broadcast %cst_5 : f32 to vector<8x400xf32>
    %7 = arith.maximumf %5, %6 : vector<8x400xf32>
    %8 = arith.truncf %7 : vector<8x400xf32> to vector<8x400xbf16>
    %c0_6 = arith.constant 0 : index
    %c0_7 = arith.constant 0 : index
    %9 = vector.load %arg5[%c0_6, %c0_7] : memref<400x400xbf16, #tpu.memory_space<vmem>>, vector<400x400xbf16>
    %cst_8 = arith.constant dense<0.000000e+00> : vector<8x400xf32>
    %10 = tpu.matmul %8, %9, %cst_8 {dimension_numbers = #tpu.dot_dimension_numbers<[1], [0], [0], [1], [0, 0, 1, 1], [], []>} : vector<8x400xbf16>, vector<400x400xbf16>, vector<8x400xf32> -> vector<8x400xf32>
    %c0_9 = arith.constant 0 : index
    %c0_10 = arith.constant 0 : index
    %11 = vector.load %arg6[%c0_9, %c0_10] : memref<1x400xf32, #tpu.memory_space<vmem>>, vector<1x400xf32>
    %12 = vector.broadcast %11 : vector<1x400xf32> to vector<8x400xf32>
    %13 = arith.addf %10, %12 : vector<8x400xf32>
    %cst_11 = arith.constant 0.000000e+00 : f32
    %14 = vector.broadcast %cst_11 : f32 to vector<8x400xf32>
    %15 = arith.maximumf %13, %14 : vector<8x400xf32>
    %16 = arith.truncf %15 : vector<8x400xf32> to vector<8x400xbf16>
    %c0_12 = arith.constant 0 : index
    %c0_13 = arith.constant 0 : index
    %17 = vector.load %arg7[%c0_12, %c0_13] : memref<400x400xbf16, #tpu.memory_space<vmem>>, vector<400x400xbf16>
    %cst_14 = arith.constant dense<0.000000e+00> : vector<8x400xf32>
    %18 = tpu.matmul %16, %17, %cst_14 {dimension_numbers = #tpu.dot_dimension_numbers<[1], [0], [0], [1], [0, 0, 1, 1], [], []>} : vector<8x400xbf16>, vector<400x400xbf16>, vector<8x400xf32> -> vector<8x400xf32>
    %c0_15 = arith.constant 0 : index
    %c0_16 = arith.constant 0 : index
    %19 = vector.load %arg8[%c0_15, %c0_16] : memref<1x400xf32, #tpu.memory_space<vmem>>, vector<1x400xf32>
    %20 = vector.broadcast %19 : vector<1x400xf32> to vector<8x400xf32>
    %21 = arith.addf %18, %20 : vector<8x400xf32>
    %cst_17 = arith.constant 0.000000e+00 : f32
    %22 = vector.broadcast %cst_17 : f32 to vector<8x400xf32>
    %23 = arith.maximumf %21, %22 : vector<8x400xf32>
    %24 = arith.truncf %23 : vector<8x400xf32> to vector<8x400xbf16>
    %c0_18 = arith.constant 0 : index
    %c0_19 = arith.constant 0 : index
    %25 = vector.load %arg9[%c0_18, %c0_19] : memref<400x32xbf16, #tpu.memory_space<vmem>>, vector<400x32xbf16>
    %cst_20 = arith.constant dense<0.000000e+00> : vector<8x32xf32>
    %26 = tpu.matmul %24, %25, %cst_20 {dimension_numbers = #tpu.dot_dimension_numbers<[1], [0], [0], [1], [0, 0, 1, 1], [], []>} : vector<8x400xbf16>, vector<400x32xbf16>, vector<8x32xf32> -> vector<8x32xf32>
    %c0_21 = arith.constant 0 : index
    %c0_22 = arith.constant 0 : index
    %27 = vector.load %arg10[%c0_21, %c0_22] : memref<1x32xf32, #tpu.memory_space<vmem>>, vector<1x32xf32>
    %28 = vector.broadcast %27 : vector<1x32xf32> to vector<8x32xf32>
    %29 = arith.addf %26, %28 : vector<8x32xf32>
    %c0_23 = arith.constant 0 : index
    %c0_24 = arith.constant 0 : index
    %30 = vector.load %arg20[%c0_23, %c0_24] : memref<8x32xf32, #tpu.memory_space<vmem>>, vector<8x32xf32>
    tpu.vector_store %arg20[%c0_23, %c0_24], %29 {strides = array<i32>} : memref<8x32xf32, #tpu.memory_space<vmem>>, vector<8x32xf32>,
    %31 = vector.extract_strided_slice %29 {offsets = [0, 0], sizes = [8, 16], strides = [1, 1]} : vector<8x32xf32> to vector<8x16xf32>
    %32 = vector.extract_strided_slice %29 {offsets = [0, 16], sizes = [8, 16], strides = [1, 1]} : vector<8x32xf32> to vector<8x16xf32>
    %cst_25 = arith.constant 5.000000e-01 : f32
    %33 = vector.broadcast %cst_25 : f32 to vector<8x16xf32>
    %34 = arith.mulf %33, %32 : vector<8x16xf32>
    %35 = math.exp %34 : vector<8x16xf32>
    %c0_26 = arith.constant 0 : index
    %c0_27 = arith.constant 0 : index
    %36 = vector.load %arg2[%c0_26, %c0_27] : memref<8x16xf32, #tpu.memory_space<vmem>>, vector<8x16xf32>
    %37 = arith.mulf %35, %36 : vector<8x16xf32>
    %38 = arith.addf %37, %31 : vector<8x16xf32>
    %39 = arith.truncf %38 : vector<8x16xf32> to vector<8x16xbf16>
    %c0_28 = arith.constant 0 : index
    %c0_29 = arith.constant 0 : index
    %40 = vector.load %arg11[%c0_28, %c0_29] : memref<16x400xbf16, #tpu.memory_space<vmem>>, vector<16x400xbf16>
    %cst_30 = arith.constant dense<0.000000e+00> : vector<8x400xf32>
    %41 = tpu.matmul %39, %40, %cst_30 {dimension_numbers = #tpu.dot_dimension_numbers<[1], [0], [0], [1], [0, 0, 1, 1], [], []>} : vector<8x16xbf16>, vector<16x400xbf16>, vector<8x400xf32> -> vector<8x400xf32>
    %c0_31 = arith.constant 0 : index
    %c0_32 = arith.constant 0 : index
    %42 = vector.load %arg12[%c0_31, %c0_32] : memref<1x400xf32, #tpu.memory_space<vmem>>, vector<1x400xf32>
    %43 = vector.broadcast %42 : vector<1x400xf32> to vector<8x400xf32>
    %44 = arith.addf %41, %43 : vector<8x400xf32>
    %cst_33 = arith.constant 0.000000e+00 : f32
    %45 = vector.broadcast %cst_33 : f32 to vector<8x400xf32>
    %46 = arith.maximumf %44, %45 : vector<8x400xf32>
    %47 = arith.truncf %46 : vector<8x400xf32> to vector<8x400xbf16>
    %c0_34 = arith.constant 0 : index
    %c0_35 = arith.constant 0 : index
    %48 = vector.load %arg13[%c0_34, %c0_35] : memref<400x400xbf16, #tpu.memory_space<vmem>>, vector<400x400xbf16>
    %cst_36 = arith.constant dense<0.000000e+00> : vector<8x400xf32>
    %49 = tpu.matmul %47, %48, %cst_36 {dimension_numbers = #tpu.dot_dimension_numbers<[1], [0], [0], [1], [0, 0, 1, 1], [], []>} : vector<8x400xbf16>, vector<400x400xbf16>, vector<8x400xf32> -> vector<8x400xf32>
    %c0_37 = arith.constant 0 : index
    %c0_38 = arith.constant 0 : index
    %50 = vector.load %arg14[%c0_37, %c0_38] : memref<1x400xf32, #tpu.memory_space<vmem>>, vector<1x400xf32>
    %51 = vector.broadcast %50 : vector<1x400xf32> to vector<8x400xf32>
    %52 = arith.addf %49, %51 : vector<8x400xf32>
    %cst_39 = arith.constant 0.000000e+00 : f32
    %53 = vector.broadcast %cst_39 : f32 to vector<8x400xf32>
    %54 = arith.maximumf %52, %53 : vector<8x400xf32>
    %55 = arith.truncf %54 : vector<8x400xf32> to vector<8x400xbf16>
    %c0_40 = arith.constant 0 : index
    %c0_41 = arith.constant 0 : index
    %56 = vector.load %arg15[%c0_40, %c0_41] : memref<400x400xbf16, #tpu.memory_space<vmem>>, vector<400x400xbf16>
    %cst_42 = arith.constant dense<0.000000e+00> : vector<8x400xf32>
    %57 = tpu.matmul %55, %56, %cst_42 {dimension_numbers = #tpu.dot_dimension_numbers<[1], [0], [0], [1], [0, 0, 1, 1], [], []>} : vector<8x400xbf16>, vector<400x400xbf16>, vector<8x400xf32> -> vector<8x400xf32>
    %c0_43 = arith.constant 0 : index
    %c0_44 = arith.constant 0 : index
    %58 = vector.load %arg16[%c0_43, %c0_44] : memref<1x400xf32, #tpu.memory_space<vmem>>, vector<1x400xf32>
    %59 = vector.broadcast %58 : vector<1x400xf32> to vector<8x400xf32>
    %60 = arith.addf %57, %59 : vector<8x400xf32>
    %cst_45 = arith.constant 0.000000e+00 : f32
    %61 = vector.broadcast %cst_45 : f32 to vector<8x400xf32>
    %62 = arith.maximumf %60, %61 : vector<8x400xf32>
    %63 = arith.truncf %62 : vector<8x400xf32> to vector<8x400xbf16>
    %c0_46 = arith.constant 0 : index
    %c0_47 = arith.constant 0 : index
    %64 = vector.load %arg17[%c0_46, %c0_47] : memref<400x784xbf16, #tpu.memory_space<vmem>>, vector<400x784xbf16>
    %cst_48 = arith.constant dense<0.000000e+00> : vector<8x784xf32>
    %65 = tpu.matmul %63, %64, %cst_48 {dimension_numbers = #tpu.dot_dimension_numbers<[1], [0], [0], [1], [0, 0, 1, 1], [], []>} : vector<8x400xbf16>, vector<400x784xbf16>, vector<8x784xf32> -> vector<8x784xf32>
    %c0_49 = arith.constant 0 : index
    %c0_50 = arith.constant 0 : index
    %66 = vector.load %arg18[%c0_49, %c0_50] : memref<1x784xf32, #tpu.memory_space<vmem>>, vector<1x784xf32>
    %67 = vector.broadcast %66 : vector<1x784xf32> to vector<8x784xf32>
    %68 = arith.addf %65, %67 : vector<8x784xf32>
    %cst_51 = arith.constant 0.000000e+00 : f32
    %69 = vector.broadcast %cst_51 : f32 to vector<8x784xf32>
    %70 = arith.subf %69, %68 : vector<8x784xf32>
    %71 = math.exp %70 : vector<8x784xf32>
    %cst_52 = arith.constant 1.000000e+00 : f32
    %72 = vector.broadcast %cst_52 : f32 to vector<8x784xf32>
    %73 = arith.addf %72, %71 : vector<8x784xf32>
    %74 = tpu.reciprocal %73 {approx = true} : vector<8x784xf32> -> vector<8x784xf32>
    %75 = arith.truncf %74 : vector<8x784xf32> to vector<8x784xbf16>
    %c0_53 = arith.constant 0 : index
    %c0_54 = arith.constant 0 : index
    %76 = vector.load %arg19[%c0_53, %c0_54] : memref<8x784xbf16, #tpu.memory_space<vmem>>, vector<8x784xbf16>
    tpu.vector_store %arg19[%c0_53, %c0_54], %75 {strides = array<i32>} : memref<8x784xbf16, #tpu.memory_space<vmem>>, vector<8x784xbf16>,
    return
  }
  func.func @transform_0(%arg0: i32) -> (i32, i32) {
    %c0_i32 = arith.constant 0 : i32
    %c0_i32_0 = arith.constant 0 : i32
    return %arg0, %c0_i32 : i32, i32
  }
  func.func @transform_1(%arg0: i32) -> (i32, i32) {
    %c0_i32 = arith.constant 0 : i32
    %c0_i32_0 = arith.constant 0 : i32
    return %arg0, %c0_i32 : i32, i32
  }
  func.func @transform_2(%arg0: i32) -> (i32, i32) {
    %c0_i32 = arith.constant 0 : i32
    %c0_i32_0 = arith.constant 0 : i32
    %c0_i32_1 = arith.constant 0 : i32
    return %c0_i32, %c0_i32_0 : i32, i32
  }
  func.func @transform_3(%arg0: i32) -> (i32, i32) {
    %c0_i32 = arith.constant 0 : i32
    %c0_i32_0 = arith.constant 0 : i32
    %c0_i32_1 = arith.constant 0 : i32
    return %c0_i32, %c0_i32_0 : i32, i32
  }
  func.func @transform_4(%arg0: i32) -> (i32, i32) {
    %c0_i32 = arith.constant 0 : i32
    %c0_i32_0 = arith.constant 0 : i32
    %c0_i32_1 = arith.constant 0 : i32
    return %c0_i32, %c0_i32_0 : i32, i32
  }
  func.func @transform_5(%arg0: i32) -> (i32, i32) {
    %c0_i32 = arith.constant 0 : i32
    %c0_i32_0 = arith.constant 0 : i32
    %c0_i32_1 = arith.constant 0 : i32
    return %c0_i32, %c0_i32_0 : i32, i32
  }
  func.func @transform_6(%arg0: i32) -> (i32, i32) {
    %c0_i32 = arith.constant 0 : i32
    %c0_i32_0 = arith.constant 0 : i32
    %c0_i32_1 = arith.constant 0 : i32
    return %c0_i32, %c0_i32_0 : i32, i32
  }
  func.func @transform_7(%arg0: i32) -> (i32, i32) {
    %c0_i32 = arith.constant 0 : i32
    %c0_i32_0 = arith.constant 0 : i32
    %c0_i32_1 = arith.constant 0 : i32
    return %c0_i32, %c0_i32_0 : i32, i32
  }
  func.func @transform_8(%arg0: i32) -> (i32, i32) {
    %c0_i32 = arith.constant 0 : i32
    %c0_i32_0 = arith.constant 0 : i32
    %c0_i32_1 = arith.constant 0 : i32
    return %c0_i32, %c0_i32_0 : i32, i32
  }
  func.func @transform_9(%arg0: i32) -> (i32, i32) {
    %c0_i32 = arith.constant 0 : i32
    %c0_i32_0 = arith.constant 0 : i32
    %c0_i32_1 = arith.constant 0 : i32
    return %c0_i32, %c0_i32_0 : i32, i32
  }
  func.func @transform_10(%arg0: i32) -> (i32, i32) {
    %c0_i32 = arith.constant 0 : i32
    %c0_i32_0 = arith.constant 0 : i32
    %c0_i32_1 = arith.constant 0 : i32
    return %c0_i32, %c0_i32_0 : i32, i32
  }
  func.func @transform_11(%arg0: i32) -> (i32, i32) {
    %c0_i32 = arith.constant 0 : i32
    %c0_i32_0 = arith.constant 0 : i32
    %c0_i32_1 = arith.constant 0 : i32
    return %c0_i32, %c0_i32_0 : i32, i32
  }
  func.func @transform_12(%arg0: i32) -> (i32, i32) {
    %c0_i32 = arith.constant 0 : i32
    %c0_i32_0 = arith.constant 0 : i32
    %c0_i32_1 = arith.constant 0 : i32
    return %c0_i32, %c0_i32_0 : i32, i32
  }
  func.func @transform_13(%arg0: i32) -> (i32, i32) {
    %c0_i32 = arith.constant 0 : i32
    %c0_i32_0 = arith.constant 0 : i32
    %c0_i32_1 = arith.constant 0 : i32
    return %c0_i32, %c0_i32_0 : i32, i32
  }
  func.func @transform_14(%arg0: i32) -> (i32, i32) {
    %c0_i32 = arith.constant 0 : i32
    %c0_i32_0 = arith.constant 0 : i32
    %c0_i32_1 = arith.constant 0 : i32
    return %c0_i32, %c0_i32_0 : i32, i32
  }
  func.func @transform_15(%arg0: i32) -> (i32, i32) {
    %c0_i32 = arith.constant 0 : i32
    %c0_i32_0 = arith.constant 0 : i32
    %c0_i32_1 = arith.constant 0 : i32
    return %c0_i32, %c0_i32_0 : i32, i32
  }
  func.func @transform_16(%arg0: i32) -> (i32, i32) {
    %c0_i32 = arith.constant 0 : i32
    %c0_i32_0 = arith.constant 0 : i32
    %c0_i32_1 = arith.constant 0 : i32
    return %c0_i32, %c0_i32_0 : i32, i32
  }
  func.func @transform_17(%arg0: i32) -> (i32, i32) {
    %c0_i32 = arith.constant 0 : i32
    %c0_i32_0 = arith.constant 0 : i32
    %c0_i32_1 = arith.constant 0 : i32
    return %c0_i32, %c0_i32_0 : i32, i32
  }
  func.func @transform_18(%arg0: i32) -> (i32, i32) {
    %c0_i32 = arith.constant 0 : i32
    %c0_i32_0 = arith.constant 0 : i32
    return %arg0, %c0_i32 : i32, i32
  }
  func.func @transform_19(%arg0: i32) -> (i32, i32) {
    %c0_i32 = arith.constant 0 : i32
    %c0_i32_0 = arith.constant 0 : i32
    return %arg0, %c0_i32 : i32, i32
  }
}

</mosaic_0001>

<llo_original>
// kernel: vae_forward.1
$region0: #{vae_forward.1}
  #allocation0 [shape = 'u32[]', space=smem, size = 0x4, offset = 0x4, fixed_abs, tag = 'smem constant byte address 0x4 - core index']
  #allocation1 [shape = 'u32[72,128]{1,0:T(1,128)}', space=vmem, size = 0x9000, scoped, tag = 'internal scratch']
  %s0 = inlined_call_operand.vmem [shape: bf16[8,784], index: 0, kind: input, shape index: {}]
  %s1 = inlined_call_operand.vmem [shape: f32[8,16], index: 1, kind: input, shape index: {}]
  %s2 = inlined_call_operand.vmem [shape: bf16[784,400], index: 2, kind: input, shape index: {}]
  %s3 = inlined_call_operand.vmem [shape: f32[1,400], index: 3, kind: input, shape index: {}]
  %s4 = inlined_call_operand.vmem [shape: bf16[400,400], index: 4, kind: input, shape index: {}]
  %s5 = inlined_call_operand.vmem [shape: f32[1,400], index: 5, kind: input, shape index: {}]
  %s6 = inlined_call_operand.vmem [shape: bf16[400,400], index: 6, kind: input, shape index: {}]
  %s7 = inlined_call_operand.vmem [shape: f32[1,400], index: 7, kind: input, shape index: {}]
  %s8 = inlined_call_operand.vmem [shape: bf16[400,32], index: 8, kind: input, shape index: {}]
  %s9 = inlined_call_operand.vmem [shape: f32[1,32], index: 9, kind: input, shape index: {}]
  %s10 = inlined_call_operand.vmem [shape: bf16[16,400], index: 10, kind: input, shape index: {}]
  %s11 = inlined_call_operand.vmem [shape: f32[1,400], index: 11, kind: input, shape index: {}]
  %s12 = inlined_call_operand.hbm [shape: bf16[400,400], index: 12, kind: input, shape index: {}]
  %s13 = inlined_call_operand.vmem [shape: f32[1,400], index: 13, kind: input, shape index: {}]
  %s14 = inlined_call_operand.hbm [shape: bf16[400,400], index: 14, kind: input, shape index: {}]
  %s15 = inlined_call_operand.vmem [shape: f32[1,400], index: 15, kind: input, shape index: {}]
  %s16 = inlined_call_operand.vmem [shape: bf16[400,784], index: 16, kind: input, shape index: {}]
  %s17 = inlined_call_operand.vmem [shape: f32[1,784], index: 17, kind: input, shape index: {}]
  %s18 = inlined_call_operand.vmem [shape: bf16[8,784], index: 18, kind: output, shape index: {0}]
  %s19 = inlined_call_operand.vmem [shape: f32[8,32], index: 19, kind: output, shape index: {1}]
  %20 = xla_tuple %s18, %s19
  %s21 = sld [smem:[#allocation0]]
  $region98: #{vae_forward.1} parent=0
    _
  %s23 = ssub.s32 1, %s21
  %s24 = scalar_select 0, %s23, %s21
  $region1: #{vae_forward.1} parent=0
    #allocation2 [shape = 'u8[409600]{0}', space=vmem, size = 0x64000, scoped, tag = 'input window, operand 12, single buffered']
    #allocation3 [shape = 's32[1]{0}', space=sflag, size = 0x4, scoped, tag = 'scoped memory for vae_forward.1']
    #allocation4 [shape = 'u8[409600]{0}', space=vmem, size = 0x64000, scoped, tag = 'input window, operand 14, single buffered']
    #allocation5 [shape = 's32[1]{0}', space=sflag, size = 0x4, scoped, tag = 'scoped memory for vae_forward.1']
    %25 = vsyncpa [#allocation3], 0
    %26 = vsyncpa [#allocation5], 0
    // Predicated region
    $region2: #{vae_forward.1} parent=1 // pred_check
      _
    $region3: #{vae_forward.1} parent=1 // pred_check_branch
      %28 = sbr.rel (0) target = $region5
    $region4: #{vae_forward.1} parent=1 // pred_region
      _
    $region5: #{vae_forward.1} parent=1 // pred_fallthru
      _
    // Predicated region
    $region6: #{vae_forward.1} parent=1 // pred_check
      _
    $region7: #{vae_forward.1} parent=1 // pred_check_branch
      %30 = sbr.rel (0) target = $region9
    $region8: #{vae_forward.1} parent=1 // pred_region
      _
    $region9: #{vae_forward.1} parent=1 // pred_fallthru
      _
    // Predicated region
    $region10: #{vae_forward.1} parent=1 // pred_check
      _
    $region11: #{vae_forward.1} parent=1 // pred_check_branch
      %32 = sbr.rel (0) target = $region13
    $region12: #{vae_forward.1} parent=1 // pred_region
      _
    $region13: #{vae_forward.1} parent=1 // pred_fallthru
      _
    // Predicated region
    $region14: #{vae_forward.1} parent=1 // pred_check
      _
    $region15: #{vae_forward.1} parent=1 // pred_check_branch
      %34 = sbr.rel (0) target = $region17
    $region16: #{vae_forward.1} parent=1 // pred_region
      _
    $region17: #{vae_forward.1} parent=1 // pred_fallthru
      _
    // Predicated region
    $region18: #{vae_forward.1} parent=1 // pred_check
      _
    $region19: #{vae_forward.1} parent=1 // pred_check_branch
      %36 = sbr.rel (0) target = $region21
    $region20: #{vae_forward.1} parent=1 // pred_region
      _
    $region21: #{vae_forward.1} parent=1 // pred_fallthru
      _
    // Predicated region
    $region22: #{vae_forward.1} parent=1 // pred_check
      _
    $region23: #{vae_forward.1} parent=1 // pred_check_branch
      %38 = sbr.rel (0) target = $region25
    $region24: #{vae_forward.1} parent=1 // pred_region
      _
    $region25: #{vae_forward.1} parent=1 // pred_fallthru
      _
    // Predicated region
    $region26: #{vae_forward.1} parent=1 // pred_check
      _
    $region27: #{vae_forward.1} parent=1 // pred_check_branch
      %40 = sbr.rel (0) target = $region29
    $region28: #{vae_forward.1} parent=1 // pred_region
      _
    $region29: #{vae_forward.1} parent=1 // pred_fallthru
      _
    // Predicated region
    $region30: #{vae_forward.1} parent=1 // pred_check
      _
    $region31: #{vae_forward.1} parent=1 // pred_check_branch
      %42 = sbr.rel (0) target = $region33
    $region32: #{vae_forward.1} parent=1 // pred_region
      _
    $region33: #{vae_forward.1} parent=1 // pred_fallthru
      _
    // Predicated region
    $region34: #{vae_forward.1} parent=1 // pred_check
      _
    $region35: #{vae_forward.1} parent=1 // pred_check_branch
      %44 = sbr.rel (0) target = $region37
    $region36: #{vae_forward.1} parent=1 // pred_region
      _
    $region37: #{vae_forward.1} parent=1 // pred_fallthru
      _
    // Predicated region
    $region38: #{vae_forward.1} parent=1 // pred_check
      _
    $region39: #{vae_forward.1} parent=1 // pred_check_branch
      %46 = sbr.rel (0) target = $region41
    $region40: #{vae_forward.1} parent=1 // pred_region
      _
    $region41: #{vae_forward.1} parent=1 // pred_fallthru
      _
    // Predicated region
    $region42: #{vae_forward.1} parent=1 // pred_check
      _
    $region43: #{vae_forward.1} parent=1 // pred_check_branch
      %48 = sbr.rel (0) target = $region45
    $region44: #{vae_forward.1} parent=1 // pred_region
      _
    $region45: #{vae_forward.1} parent=1 // pred_fallthru
      _
    // Predicated region
    $region46: #{vae_forward.1} parent=1 // pred_check
      _
    $region47: #{vae_forward.1} parent=1 // pred_check_branch
      %50 = sbr.rel (0) target = $region49
    $region48: #{vae_forward.1} parent=1 // pred_region
      _
    $region49: #{vae_forward.1} parent=1 // pred_fallthru
      _
    // Predicated region
    $region50: #{vae_forward.1} parent=1 // pred_check
      _
    $region51: #{vae_forward.1} parent=1 // pred_check_branch
      %52 = sbr.rel (0) target = $region53
    $region52: #{vae_forward.1} parent=1 // pred_region
      %54 = vsyncadd [#allocation3], 0
      %s55 = sshll.u32 %s12, 4
      %s56 = int_to_ptr.hbm [resolvable:$true] %s55
      %s57 = sshll.u32 [#allocation2], 4
      %s58 = int_to_ptr.vmem [resolvable:$true] %s57
      %63 = dma.hbm_to_vmem [thread:$0]  %s56, 12800, %s58, [#allocation3], 256, 256, 16
    $region53: #{vae_forward.1} parent=1 // pred_fallthru
      _
    // Predicated region
    $region54: #{vae_forward.1} parent=1 // pred_check
      _
    $region55: #{vae_forward.1} parent=1 // pred_check_branch
      %65 = sbr.rel (0) target = $region57
    $region56: #{vae_forward.1} parent=1 // pred_region
      _
    $region57: #{vae_forward.1} parent=1 // pred_fallthru
      _
    // Predicated region
    $region58: #{vae_forward.1} parent=1 // pred_check
      _
    $region59: #{vae_forward.1} parent=1 // pred_check_branch
      %67 = sbr.rel (0) target = $region61
    $region60: #{vae_forward.1} parent=1 // pred_region
      %69 = vsyncadd [#allocation5], 0
      %s70 = sshll.u32 %s14, 4
      %s71 = int_to_ptr.hbm [resolvable:$true] %s70
      %s72 = sshll.u32 [#allocation4], 4
      %s73 = int_to_ptr.vmem [resolvable:$true] %s72
      %78 = dma.hbm_to_vmem [thread:$0]  %s71, 12800, %s73, [#allocation5], 256, 256, 16
    $region61: #{vae_forward.1} parent=1 // pred_fallthru
      _
    // Predicated region
    $region62: #{vae_forward.1} parent=1 // pred_check
      _
    $region63: #{vae_forward.1} parent=1 // pred_check_branch
      %80 = sbr.rel (0) target = $region65
    $region64: #{vae_forward.1} parent=1 // pred_region
      _
    $region65: #{vae_forward.1} parent=1 // pred_fallthru
      _
    // Predicated region
    $region66: #{vae_forward.1} parent=1 // pred_check
      _
    $region67: #{vae_forward.1} parent=1 // pred_check_branch
      %82 = sbr.rel (0) target = $region69
    $region68: #{vae_forward.1} parent=1 // pred_region
      _
    $region69: #{vae_forward.1} parent=1 // pred_fallthru
      _
    // Predicated region
    $region70: #{vae_forward.1} parent=1 // pred_check
      _
    $region71: #{vae_forward.1} parent=1 // pred_check_branch
      %84 = sbr.rel (0) target = $region73
    $region72: #{vae_forward.1} parent=1 // pred_region
      _
    $region73: #{vae_forward.1} parent=1 // pred_fallthru
      _
    // Predicated region
    $region74: #{vae_forward.1} parent=1 // pred_check
      _
    $region75: #{vae_forward.1} parent=1 // pred_check_branch
      %86 = sbr.rel (0) target = $region77
    $region76: #{vae_forward.1} parent=1 // pred_region
      %88 = dma.done [#allocation3], 12800
    $region77: #{vae_forward.1} parent=1 // pred_fallthru
      _
    // Predicated region
    $region78: #{vae_forward.1} parent=1 // pred_check
      _
    $region79: #{vae_forward.1} parent=1 // pred_check_branch
      %90 = sbr.rel (0) target = $region81
    $region80: #{vae_forward.1} parent=1 // pred_region
      %92 = dma.done [#allocation5], 12800
    $region81: #{vae_forward.1} parent=1 // pred_fallthru
      _
    %v94 = vld [vmem:[%s0] sm:$0xff]
    %v95 = vld [vmem:[%s0 + $0x8] sm:$0xff]
    %v96 = vld [vmem:[%s0 + $0x10] sm:$0xff]
    %v97 = vld [vmem:[%s0 + $0x18] sm:$0xf]
    %v98 = vld [vmem:[%s2] sm:$0xff]
    %v99 = vld [vmem:[%s2 + $0x8] sm:$0xff]
    %v100 = vld [vmem:[%s2 + $0x10] sm:$0xff]
    %v101 = vld [vmem:[%s2 + $0x18] sm:$0xff]
    %v102 = vld [vmem:[%s2 + $0x20] sm:$0xff]
    %v103 = vld [vmem:[%s2 + $0x28] sm:$0xff]
    %v104 = vld [vmem:[%s2 + $0x30] sm:$0xff]
    %v105 = vld [vmem:[%s2 + $0x38] sm:$0xff]
    %v106 = vld [vmem:[%s2 + $0x40] sm:$0xff]
    %v107 = vld [vmem:[%s2 + $0x48] sm:$0xff]
    %v108 = vld [vmem:[%s2 + $0x50] sm:$0xff]
    %v109 = vld [vmem:[%s2 + $0x58] sm:$0xff]
    %v110 = vld [vmem:[%s2 + $0x60] sm:$0xff]
    %v111 = vld [vmem:[%s2 + $0x68] sm:$0xff]
    %v112 = vld [vmem:[%s2 + $0x70] sm:$0xff]
    %v113 = vld [vmem:[%s2 + $0x78] sm:$0xff]
    %v114 = vld [vmem:[%s2 + $0x80] sm:$0xff]
    %v115 = vld [vmem:[%s2 + $0x88] sm:$0xff]
    %v116 = vld [vmem:[%s2 + $0x90] sm:$0xff]
    %v117 = vld [vmem:[%s2 + $0x98] sm:$0xff]
    %v118 = vld [vmem:[%s2 + $0xa0] sm:$0xff]
    %v119 = vld [vmem:[%s2 + $0xa8] sm:$0xff]
    %v120 = vld [vmem:[%s2 + $0xb0] sm:$0xff]
    %v121 = vld [vmem:[%s2 + $0xb8] sm:$0xff]
    %v122 = vld [vmem:[%s2 + $0xc0] sm:$0xff]
    %v123 = vld [vmem:[%s2 + $0xc8] sm:$0xff]
    %v124 = vld [vmem:[%s2 + $0xd0] sm:$0xff]
    %v125 = vld [vmem:[%s2 + $0xd8] sm:$0xff]
    %v126 = vld [vmem:[%s2 + $0xe0] sm:$0xff]
    %v127 = vld [vmem:[%s2 + $0xe8] sm:$0xff]
    %v128 = vld [vmem:[%s2 + $0xf0] sm:$0xff]
    %v129 = vld [vmem:[%s2 + $0xf8] sm:$0xff]
    %v130 = vld [vmem:[%s2 + $0x100] sm:$0xff]
    %v131 = vld [vmem:[%s2 + $0x108] sm:$0xff]
    %v132 = vld [vmem:[%s2 + $0x110] sm:$0xff]
    %v133 = vld [vmem:[%s2 + $0x118] sm:$0xff]
    %v134 = vld [vmem:[%s2 + $0x120] sm:$0xff]
    %v135 = vld [vmem:[%s2 + $0x128] sm:$0xff]
    %v136 = vld [vmem:[%s2 + $0x130] sm:$0xff]
    %v137 = vld [vmem:[%s2 + $0x138] sm:$0xff]
    %v138 = vld [vmem:[%s2 + $0x140] sm:$0xff]
    %v139 = vld [vmem:[%s2 + $0x148] sm:$0xff]
    %v140 = vld [vmem:[%s2 + $0x150] sm:$0xff]
    %v141 = vld [vmem:[%s2 + $0x158] sm:$0xff]
    %v142 = vld [vmem:[%s2 + $0x160] sm:$0xff]
    %v143 = vld [vmem:[%s2 + $0x168] sm:$0xff]
    %v144 = vld [vmem:[%s2 + $0x170] sm:$0xff]
    %v145 = vld [vmem:[%s2 + $0x178] sm:$0xff]
    %v146 = vld [vmem:[%s2 + $0x180] sm:$0xff]
    %v147 = vld [vmem:[%s2 + $0x188] sm:$0xff]
    %v148 = vld [vmem:[%s2 + $0x190] sm:$0xff]
    %v149 = vld [vmem:[%s2 + $0x198] sm:$0xff]
    %v150 = vld [vmem:[%s2 + $0x1a0] sm:$0xff]
    %v151 = vld [vmem:[%s2 + $0x1a8] sm:$0xff]
    %v152 = vld [vmem:[%s2 + $0x1b0] sm:$0xff]
    %v153 = vld [vmem:[%s2 + $0x1b8] sm:$0xff]
    %v154 = vld [vmem:[%s2 + $0x1c0] sm:$0xff]
    %v155 = vld [vmem:[%s2 + $0x1c8] sm:$0xff]
    %v156 = vld [vmem:[%s2 + $0x1d0] sm:$0xff]
    %v157 = vld [vmem:[%s2 + $0x1d8] sm:$0xff]
    %v158 = vld [vmem:[%s2 + $0x1e0] sm:$0xff]
    %v159 = vld [vmem:[%s2 + $0x1e8] sm:$0xff]
    %v160 = vld [vmem:[%s2 + $0x1f0] sm:$0xff]
    %v161 = vld [vmem:[%s2 + $0x1f8] sm:$0xff]
    %v162 = vld [vmem:[%s2 + $0x200] sm:$0xff]
    %v163 = vld [vmem:[%s2 + $0x208] sm:$0xff]
    %v164 = vld [vmem:[%s2 + $0x210] sm:$0xff]
    %v165 = vld [vmem:[%s2 + $0x218] sm:$0xff]
    %v166 = vld [vmem:[%s2 + $0x220] sm:$0xff]
    %v167 = vld [vmem:[%s2 + $0x228] sm:$0xff]
    %v168 = vld [vmem:[%s2 + $0x230] sm:$0xff]
    %v169 = vld [vmem:[%s2 + $0x238] sm:$0xff]
    %v170 = vld [vmem:[%s2 + $0x240] sm:$0xff]
    %v171 = vld [vmem:[%s2 + $0x248] sm:$0xff]
    %v172 = vld [vmem:[%s2 + $0x250] sm:$0xff]
    %v173 = vld [vmem:[%s2 + $0x258] sm:$0xff]
    %v174 = vld [vmem:[%s2 + $0x260] sm:$0xff]
    %v175 = vld [vmem:[%s2 + $0x268] sm:$0xff]
    %v176 = vld [vmem:[%s2 + $0x270] sm:$0xff]
    %v177 = vld [vmem:[%s2 + $0x278] sm:$0xff]
    %v178 = vld [vmem:[%s2 + $0x280] sm:$0xff]
    %v179 = vld [vmem:[%s2 + $0x288] sm:$0xff]
    %v180 = vld [vmem:[%s2 + $0x290] sm:$0xff]
    %v181 = vld [vmem:[%s2 + $0x298] sm:$0xff]
    %v182 = vld [vmem:[%s2 + $0x2a0] sm:$0xff]
    %v183 = vld [vmem:[%s2 + $0x2a8] sm:$0xff]
    %v184 = vld [vmem:[%s2 + $0x2b0] sm:$0xff]
    %v185 = vld [vmem:[%s2 + $0x2b8] sm:$0xff]
    %v186 = vld [vmem:[%s2 + $0x2c0] sm:$0xff]
    %v187 = vld [vmem:[%s2 + $0x2c8] sm:$0xff]
    %v188 = vld [vmem:[%s2 + $0x2d0] sm:$0xff]
    %v189 = vld [vmem:[%s2 + $0x2d8] sm:$0xff]
    %v190 = vld [vmem:[%s2 + $0x2e0] sm:$0xff]
    %v191 = vld [vmem:[%s2 + $0x2e8] sm:$0xff]
    %v192 = vld [vmem:[%s2 + $0x2f0] sm:$0xff]
    %v193 = vld [vmem:[%s2 + $0x2f8] sm:$0xff]
    %v194 = vld [vmem:[%s2 + $0x300] sm:$0xff]
    %v195 = vld [vmem:[%s2 + $0x308] sm:$0xff]
    %v196 = vld [vmem:[%s2 + $0x310] sm:$0xff]
    %v197 = vld [vmem:[%s2 + $0x318] sm:$0xff]
    %v198 = vld [vmem:[%s2 + $0x320] sm:$0xff]
    %v199 = vld [vmem:[%s2 + $0x328] sm:$0xff]
    %v200 = vld [vmem:[%s2 + $0x330] sm:$0xff]
    %v201 = vld [vmem:[%s2 + $0x338] sm:$0xff]
    %v202 = vld [vmem:[%s2 + $0x340] sm:$0xff]
    %v203 = vld [vmem:[%s2 + $0x348] sm:$0xff]
    %v204 = vld [vmem:[%s2 + $0x350] sm:$0xff]
    %v205 = vld [vmem:[%s2 + $0x358] sm:$0xff]
    %v206 = vld [vmem:[%s2 + $0x360] sm:$0xff]
    %v207 = vld [vmem:[%s2 + $0x368] sm:$0xff]
    %v208 = vld [vmem:[%s2 + $0x370] sm:$0xff]
    %v209 = vld [vmem:[%s2 + $0x378] sm:$0xff]
    %v210 = vld [vmem:[%s2 + $0x380] sm:$0xff]
    %v211 = vld [vmem:[%s2 + $0x388] sm:$0xff]
    %v212 = vld [vmem:[%s2 + $0x390] sm:$0xff]
    %v213 = vld [vmem:[%s2 + $0x398] sm:$0xff]
    %v214 = vld [vmem:[%s2 + $0x3a0] sm:$0xff]
    %v215 = vld [vmem:[%s2 + $0x3a8] sm:$0xff]
    %v216 = vld [vmem:[%s2 + $0x3b0] sm:$0xff]
    %v217 = vld [vmem:[%s2 + $0x3b8] sm:$0xff]
    %v218 = vld [vmem:[%s2 + $0x3c0] sm:$0xff]
    %v219 = vld [vmem:[%s2 + $0x3c8] sm:$0xff]
    %v220 = vld [vmem:[%s2 + $0x3d0] sm:$0xff]
    %v221 = vld [vmem:[%s2 + $0x3d8] sm:$0xff]
    %v222 = vld [vmem:[%s2 + $0x3e0] sm:$0xff]
    %v223 = vld [vmem:[%s2 + $0x3e8] sm:$0xff]
    %v224 = vld [vmem:[%s2 + $0x3f0] sm:$0xff]
    %v225 = vld [vmem:[%s2 + $0x3f8] sm:$0xff]
    %v226 = vld [vmem:[%s2 + $0x400] sm:$0xff]
    %v227 = vld [vmem:[%s2 + $0x408] sm:$0xff]
    %v228 = vld [vmem:[%s2 + $0x410] sm:$0xff]
    %v229 = vld [vmem:[%s2 + $0x418] sm:$0xff]
    %v230 = vld [vmem:[%s2 + $0x420] sm:$0xff]
    %v231 = vld [vmem:[%s2 + $0x428] sm:$0xff]
    %v232 = vld [vmem:[%s2 + $0x430] sm:$0xff]
    %v233 = vld [vmem:[%s2 + $0x438] sm:$0xff]
    %v234 = vld [vmem:[%s2 + $0x440] sm:$0xff]
    %v235 = vld [vmem:[%s2 + $0x448] sm:$0xff]
    %v236 = vld [vmem:[%s2 + $0x450] sm:$0xff]
    %v237 = vld [vmem:[%s2 + $0x458] sm:$0xff]
    %v238 = vld [vmem:[%s2 + $0x460] sm:$0xff]
    %v239 = vld [vmem:[%s2 + $0x468] sm:$0xff]
    %v240 = vld [vmem:[%s2 + $0x470] sm:$0xff]
    %v241 = vld [vmem:[%s2 + $0x478] sm:$0xff]
    %v242 = vld [vmem:[%s2 + $0x480] sm:$0xff]
    %v243 = vld [vmem:[%s2 + $0x488] sm:$0xff]
    %v244 = vld [vmem:[%s2 + $0x490] sm:$0xff]
    %v245 = vld [vmem:[%s2 + $0x498] sm:$0xff]
    %v246 = vld [vmem:[%s2 + $0x4a0] sm:$0xff]
    %v247 = vld [vmem:[%s2 + $0x4a8] sm:$0xff]
    %v248 = vld [vmem:[%s2 + $0x4b0] sm:$0xff]
    %v249 = vld [vmem:[%s2 + $0x4b8] sm:$0xff]
    %v250 = vld [vmem:[%s2 + $0x4c0] sm:$0xff]
    %v251 = vld [vmem:[%s2 + $0x4c8] sm:$0xff]
    %v252 = vld [vmem:[%s2 + $0x4d0] sm:$0xff]
    %v253 = vld [vmem:[%s2 + $0x4d8] sm:$0xff]
    %v254 = vld [vmem:[%s2 + $0x4e0] sm:$0xff]
    %v255 = vld [vmem:[%s2 + $0x4e8] sm:$0xff]
    %v256 = vld [vmem:[%s2 + $0x4f0] sm:$0xff]
    %v257 = vld [vmem:[%s2 + $0x4f8] sm:$0xff]
    %v258 = vld [vmem:[%s2 + $0x500] sm:$0xff]
    %v259 = vld [vmem:[%s2 + $0x508] sm:$0xff]
    %v260 = vld [vmem:[%s2 + $0x510] sm:$0xff]
    %v261 = vld [vmem:[%s2 + $0x518] sm:$0xff]
    %v262 = vld [vmem:[%s2 + $0x520] sm:$0xff]
    %v263 = vld [vmem:[%s2 + $0x528] sm:$0xff]
    %v264 = vld [vmem:[%s2 + $0x530] sm:$0xff]
    %v265 = vld [vmem:[%s2 + $0x538] sm:$0xff]
    %v266 = vld [vmem:[%s2 + $0x540] sm:$0xff]
    %v267 = vld [vmem:[%s2 + $0x548] sm:$0xff]
    %v268 = vld [vmem:[%s2 + $0x550] sm:$0xff]
    %v269 = vld [vmem:[%s2 + $0x558] sm:$0xff]
    %v270 = vld [vmem:[%s2 + $0x560] sm:$0xff]
    %v271 = vld [vmem:[%s2 + $0x568] sm:$0xff]
    %v272 = vld [vmem:[%s2 + $0x570] sm:$0xff]
    %v273 = vld [vmem:[%s2 + $0x578] sm:$0xff]
    %v274 = vld [vmem:[%s2 + $0x580] sm:$0xff]
    %v275 = vld [vmem:[%s2 + $0x588] sm:$0xff]
    %v276 = vld [vmem:[%s2 + $0x590] sm:$0xff]
    %v277 = vld [vmem:[%s2 + $0x598] sm:$0xff]
    %v278 = vld [vmem:[%s2 + $0x5a0] sm:$0xff]
    %v279 = vld [vmem:[%s2 + $0x5a8] sm:$0xff]
    %v280 = vld [vmem:[%s2 + $0x5b0] sm:$0xff]
    %v281 = vld [vmem:[%s2 + $0x5b8] sm:$0xff]
    %v282 = vld [vmem:[%s2 + $0x5c0] sm:$0xff]
    %v283 = vld [vmem:[%s2 + $0x5c8] sm:$0xff]
    %v284 = vld [vmem:[%s2 + $0x5d0] sm:$0xff]
    %v285 = vld [vmem:[%s2 + $0x5d8] sm:$0xff]
    %v286 = vld [vmem:[%s2 + $0x5e0] sm:$0xff]
    %v287 = vld [vmem:[%s2 + $0x5e8] sm:$0xff]
    %v288 = vld [vmem:[%s2 + $0x5f0] sm:$0xff]
    %v289 = vld [vmem:[%s2 + $0x5f8] sm:$0xff]
    %v290 = vld [vmem:[%s2 + $0x600] sm:$0xff]
    %v291 = vld [vmem:[%s2 + $0x608] sm:$0xff]
    %v292 = vld [vmem:[%s2 + $0x610] sm:$0xff]
    %v293 = vld [vmem:[%s2 + $0x618] sm:$0xff]
    %v294 = vld [vmem:[%s3] sm:$0xf]
    %v296 = vperm.slane %v294, 0
    %v297 = vperm.slane %v294, 1
    %v298 = vperm.slane %v294, 2
    %v299 = vperm.slane %v294, 3
    %v308 = vunpack.c.l.b16 %v94
    %v309 = vunpack.c.h.b16 %v94
    %v310 = vunpack.c.l.b16 %v95
    %v311 = vunpack.c.h.b16 %v95
    %v312 = vunpack.c.l.b16 %v96
    %v313 = vunpack.c.h.b16 %v96
    %v314 = vunpack.c.l.b16 %v97
    %v315 = vpack.c.b16 %v308, %v308
    %v316 = vpack.c.b16 %v309, %v309
    %v317 = vpack.c.b16 %v310, %v310
    %v318 = vpack.c.b16 %v311, %v311
    %v319 = vpack.c.b16 %v312, %v312
    %v320 = vpack.c.b16 %v313, %v313
    %v321 = vpack.c.b16 %v314, %v314
    %v524 = vunpack.c.l.b16 %v98
    %v525 = vunpack.c.h.b16 %v98
    %v526 = vunpack.c.l.b16 %v99
    %v527 = vunpack.c.h.b16 %v99
    %v528 = vunpack.c.l.b16 %v100
    %v529 = vunpack.c.h.b16 %v100
    %v530 = vunpack.c.l.b16 %v101
    %v531 = vunpack.c.h.b16 %v101
    %v532 = vunpack.c.l.b16 %v102
    %v533 = vunpack.c.h.b16 %v102
    %v534 = vunpack.c.l.b16 %v103
    %v535 = vunpack.c.h.b16 %v103
    %v536 = vunpack.c.l.b16 %v104
    %v537 = vunpack.c.h.b16 %v104
    %v538 = vunpack.c.l.b16 %v105
    %v539 = vunpack.c.h.b16 %v105
    %v540 = vunpack.c.l.b16 %v106
    %v541 = vunpack.c.h.b16 %v106
    %v542 = vunpack.c.l.b16 %v107
    %v543 = vunpack.c.h.b16 %v107
    %v544 = vunpack.c.l.b16 %v108
    %v545 = vunpack.c.h.b16 %v108
    %v546 = vunpack.c.l.b16 %v109
    %v547 = vunpack.c.h.b16 %v109
    %v548 = vunpack.c.l.b16 %v110
    %v549 = vunpack.c.h.b16 %v110
    %v550 = vunpack.c.l.b16 %v111
    %v551 = vunpack.c.h.b16 %v111
    %v552 = vunpack.c.l.b16 %v112
    %v553 = vunpack.c.h.b16 %v112
    %v554 = vunpack.c.l.b16 %v113
    %v555 = vunpack.c.h.b16 %v113
    %v556 = vunpack.c.l.b16 %v114
    %v557 = vunpack.c.h.b16 %v114
    %v558 = vunpack.c.l.b16 %v115
    %v559 = vunpack.c.h.b16 %v115
    %v560 = vunpack.c.l.b16 %v116
    %v561 = vunpack.c.h.b16 %v116
    %v562 = vunpack.c.l.b16 %v117
    %v563 = vunpack.c.h.b16 %v117
    %v564 = vunpack.c.l.b16 %v118
    %v565 = vunpack.c.h.b16 %v118
    %v566 = vunpack.c.l.b16 %v119
    %v567 = vunpack.c.h.b16 %v119
    %v568 = vunpack.c.l.b16 %v120
    %v569 = vunpack.c.h.b16 %v120
    %v570 = vunpack.c.l.b16 %v121
    %v571 = vunpack.c.h.b16 %v121
    %v572 = vunpack.c.l.b16 %v122
    %v573 = vunpack.c.h.b16 %v122
    %v574 = vunpack.c.l.b16 %v123
    %v575 = vunpack.c.h.b16 %v123
    %v576 = vunpack.c.l.b16 %v124
    %v577 = vunpack.c.h.b16 %v124
    %v578 = vunpack.c.l.b16 %v125
    %v579 = vunpack.c.h.b16 %v125
    %v580 = vunpack.c.l.b16 %v126
    %v581 = vunpack.c.h.b16 %v126
    %v582 = vunpack.c.l.b16 %v127
    %v583 = vunpack.c.h.b16 %v127
    %v584 = vunpack.c.l.b16 %v128
    %v585 = vunpack.c.h.b16 %v128
    %v586 = vunpack.c.l.b16 %v129
    %v587 = vunpack.c.h.b16 %v129
    %v588 = vunpack.c.l.b16 %v130
    %v589 = vunpack.c.h.b16 %v130
    %v590 = vunpack.c.l.b16 %v131
    %v591 = vunpack.c.h.b16 %v131
    %v592 = vunpack.c.l.b16 %v132
    %v593 = vunpack.c.h.b16 %v132
    %v594 = vunpack.c.l.b16 %v133
    %v595 = vunpack.c.h.b16 %v133
    %v596 = vunpack.c.l.b16 %v134
    %v597 = vunpack.c.h.b16 %v134
    %v598 = vunpack.c.l.b16 %v135
    %v599 = vunpack.c.h.b16 %v135
    %v600 = vunpack.c.l.b16 %v136
    %v601 = vunpack.c.h.b16 %v136
    %v602 = vunpack.c.l.b16 %v137
    %v603 = vunpack.c.h.b16 %v137
    %v604 = vunpack.c.l.b16 %v138
    %v605 = vunpack.c.h.b16 %v138
    %v606 = vunpack.c.l.b16 %v139
    %v607 = vunpack.c.h.b16 %v139
    %v608 = vunpack.c.l.b16 %v140
    %v609 = vunpack.c.h.b16 %v140
    %v610 = vunpack.c.l.b16 %v141
    %v611 = vunpack.c.h.b16 %v141
    %v612 = vunpack.c.l.b16 %v142
    %v613 = vunpack.c.h.b16 %v142
    %v614 = vunpack.c.l.b16 %v143
    %v615 = vunpack.c.h.b16 %v143
    %v616 = vunpack.c.l.b16 %v144
    %v617 = vunpack.c.h.b16 %v144
    %v618 = vunpack.c.l.b16 %v145
    %v619 = vunpack.c.h.b16 %v145
    %v620 = vunpack.c.l.b16 %v146
    %v621 = vunpack.c.h.b16 %v146
    %v622 = vunpack.c.l.b16 %v147
    %v623 = vunpack.c.h.b16 %v147
    %v624 = vunpack.c.l.b16 %v148
    %v625 = vunpack.c.h.b16 %v148
    %v626 = vunpack.c.l.b16 %v149
    %v627 = vunpack.c.h.b16 %v149
    %v628 = vunpack.c.l.b16 %v150
    %v629 = vunpack.c.h.b16 %v150
    %v630 = vunpack.c.l.b16 %v151
    %v631 = vunpack.c.h.b16 %v151
    %v632 = vunpack.c.l.b16 %v152
    %v633 = vunpack.c.h.b16 %v152
    %v634 = vunpack.c.l.b16 %v153
    %v635 = vunpack.c.h.b16 %v153
    %v636 = vunpack.c.l.b16 %v154
    %v637 = vunpack.c.h.b16 %v154
    %v638 = vunpack.c.l.b16 %v155
    %v639 = vunpack.c.h.b16 %v155
    %v640 = vunpack.c.l.b16 %v156
    %v641 = vunpack.c.h.b16 %v156
    %v642 = vunpack.c.l.b16 %v157
    %v643 = vunpack.c.h.b16 %v157
    %v644 = vunpack.c.l.b16 %v158
    %v645 = vunpack.c.h.b16 %v158
    %v646 = vunpack.c.l.b16 %v159
    %v647 = vunpack.c.h.b16 %v159
    %v648 = vunpack.c.l.b16 %v160
    %v649 = vunpack.c.h.b16 %v160
    %v650 = vunpack.c.l.b16 %v161
    %v651 = vunpack.c.h.b16 %v161
    %v652 = vunpack.c.l.b16 %v162
    %v653 = vunpack.c.h.b16 %v162
    %v654 = vunpack.c.l.b16 %v163
    %v655 = vunpack.c.h.b16 %v163
    %v656 = vunpack.c.l.b16 %v164
    %v657 = vunpack.c.h.b16 %v164
    %v658 = vunpack.c.l.b16 %v165
    %v659 = vunpack.c.h.b16 %v165
    %v660 = vunpack.c.l.b16 %v166
    %v661 = vunpack.c.h.b16 %v166
    %v662 = vunpack.c.l.b16 %v167
    %v663 = vunpack.c.h.b16 %v167
    %v664 = vunpack.c.l.b16 %v168
    %v665 = vunpack.c.h.b16 %v168
    %v666 = vunpack.c.l.b16 %v169
    %v667 = vunpack.c.h.b16 %v169
    %v668 = vunpack.c.l.b16 %v170
    %v669 = vunpack.c.h.b16 %v170
    %v670 = vunpack.c.l.b16 %v171
    %v671 = vunpack.c.h.b16 %v171
    %v672 = vunpack.c.l.b16 %v172
    %v673 = vunpack.c.h.b16 %v172
    %v674 = vunpack.c.l.b16 %v173
    %v675 = vunpack.c.h.b16 %v173
    %v676 = vunpack.c.l.b16 %v174
    %v677 = vunpack.c.h.b16 %v174
    %v678 = vunpack.c.l.b16 %v175
    %v679 = vunpack.c.h.b16 %v175
    %v680 = vunpack.c.l.b16 %v176
    %v681 = vunpack.c.h.b16 %v176
    %v682 = vunpack.c.l.b16 %v177
    %v683 = vunpack.c.h.b16 %v177
    %v684 = vunpack.c.l.b16 %v178
    %v685 = vunpack.c.h.b16 %v178
    %v686 = vunpack.c.l.b16 %v179
    %v687 = vunpack.c.h.b16 %v179
    %v688 = vunpack.c.l.b16 %v180
    %v689 = vunpack.c.h.b16 %v180
    %v690 = vunpack.c.l.b16 %v181
    %v691 = vunpack.c.h.b16 %v181
    %v692 = vunpack.c.l.b16 %v182
    %v693 = vunpack.c.h.b16 %v182
    %v694 = vunpack.c.l.b16 %v183
    %v695 = vunpack.c.h.b16 %v183
    %v696 = vunpack.c.l.b16 %v184
    %v697 = vunpack.c.h.b16 %v184
    %v698 = vunpack.c.l.b16 %v185
    %v699 = vunpack.c.h.b16 %v185
    %v700 = vunpack.c.l.b16 %v186
    %v701 = vunpack.c.h.b16 %v186
    %v702 = vunpack.c.l.b16 %v187
    %v703 = vunpack.c.h.b16 %v187
    %v704 = vunpack.c.l.b16 %v188
    %v705 = vunpack.c.h.b16 %v188
    %v706 = vunpack.c.l.b16 %v189
    %v707 = vunpack.c.h.b16 %v189
    %v708 = vunpack.c.l.b16 %v190
    %v709 = vunpack.c.h.b16 %v190
    %v710 = vunpack.c.l.b16 %v191
    %v711 = vunpack.c.h.b16 %v191
    %v712 = vunpack.c.l.b16 %v192
    %v713 = vunpack.c.h.b16 %v192
    %v714 = vunpack.c.l.b16 %v193
    %v715 = vunpack.c.h.b16 %v193
    %v716 = vunpack.c.l.b16 %v194
    %v717 = vunpack.c.h.b16 %v194
    %v718 = vunpack.c.l.b16 %v195
    %v719 = vunpack.c.h.b16 %v195
    %v720 = vunpack.c.l.b16 %v196
    %v721 = vunpack.c.h.b16 %v196
    %v722 = vunpack.c.l.b16 %v197
    %v723 = vunpack.c.h.b16 %v197
    %v724 = vunpack.c.l.b16 %v198
    %v725 = vunpack.c.h.b16 %v198
    %v726 = vunpack.c.l.b16 %v199
    %v727 = vunpack.c.h.b16 %v199
    %v728 = vunpack.c.l.b16 %v200
    %v729 = vunpack.c.h.b16 %v200
    %v730 = vunpack.c.l.b16 %v201
    %v731 = vunpack.c.h.b16 %v201
    %v732 = vunpack.c.l.b16 %v202
    %v733 = vunpack.c.h.b16 %v202
    %v734 = vunpack.c.l.b16 %v203
    %v735 = vunpack.c.h.b16 %v203
    %v736 = vunpack.c.l.b16 %v204
    %v737 = vunpack.c.h.b16 %v204
    %v738 = vunpack.c.l.b16 %v205
    %v739 = vunpack.c.h.b16 %v205
    %v740 = vunpack.c.l.b16 %v206
    %v741 = vunpack.c.h.b16 %v206
    %v742 = vunpack.c.l.b16 %v207
    %v743 = vunpack.c.h.b16 %v207
    %v744 = vunpack.c.l.b16 %v208
    %v745 = vunpack.c.h.b16 %v208
    %v746 = vunpack.c.l.b16 %v209
    %v747 = vunpack.c.h.b16 %v209
    %v748 = vunpack.c.l.b16 %v210
    %v749 = vunpack.c.h.b16 %v210
    %v750 = vunpack.c.l.b16 %v211
    %v751 = vunpack.c.h.b16 %v211
    %v752 = vunpack.c.l.b16 %v212
    %v753 = vunpack.c.h.b16 %v212
    %v754 = vunpack.c.l.b16 %v213
    %v755 = vunpack.c.h.b16 %v213
    %v756 = vunpack.c.l.b16 %v214
    %v757 = vunpack.c.h.b16 %v214
    %v758 = vunpack.c.l.b16 %v215
    %v759 = vunpack.c.h.b16 %v215
    %v760 = vunpack.c.l.b16 %v216
    %v761 = vunpack.c.h.b16 %v216
    %v762 = vunpack.c.l.b16 %v217
    %v763 = vunpack.c.h.b16 %v217
    %v764 = vunpack.c.l.b16 %v218
    %v765 = vunpack.c.h.b16 %v218
    %v766 = vunpack.c.l.b16 %v219
    %v767 = vunpack.c.h.b16 %v219
    %v768 = vunpack.c.l.b16 %v220
    %v769 = vunpack.c.h.b16 %v220
    %v770 = vunpack.c.l.b16 %v221
    %v771 = vunpack.c.h.b16 %v221
    %v772 = vunpack.c.l.b16 %v222
    %v773 = vunpack.c.h.b16 %v222
    %v774 = vunpack.c.l.b16 %v223
    %v775 = vunpack.c.h.b16 %v223
    %v776 = vunpack.c.l.b16 %v224
    %v777 = vunpack.c.h.b16 %v224
    %v778 = vunpack.c.l.b16 %v225
    %v779 = vunpack.c.h.b16 %v225
    %v780 = vunpack.c.l.b16 %v226
    %v781 = vunpack.c.h.b16 %v226
    %v782 = vunpack.c.l.b16 %v227
    %v783 = vunpack.c.h.b16 %v227
    %v784 = vunpack.c.l.b16 %v228
    %v785 = vunpack.c.h.b16 %v228
    %v786 = vunpack.c.l.b16 %v229
    %v787 = vunpack.c.h.b16 %v229
    %v788 = vunpack.c.l.b16 %v230
    %v789 = vunpack.c.h.b16 %v230
    %v790 = vunpack.c.l.b16 %v231
    %v791 = vunpack.c.h.b16 %v231
    %v792 = vunpack.c.l.b16 %v232
    %v793 = vunpack.c.h.b16 %v232
    %v794 = vunpack.c.l.b16 %v233
    %v795 = vunpack.c.h.b16 %v233
    %v796 = vunpack.c.l.b16 %v234
    %v797 = vunpack.c.h.b16 %v234
    %v798 = vunpack.c.l.b16 %v235
    %v799 = vunpack.c.h.b16 %v235
    %v800 = vunpack.c.l.b16 %v236
    %v801 = vunpack.c.h.b16 %v236
    %v802 = vunpack.c.l.b16 %v237
    %v803 = vunpack.c.h.b16 %v237
    %v804 = vunpack.c.l.b16 %v238
    %v805 = vunpack.c.h.b16 %v238
    %v806 = vunpack.c.l.b16 %v239
    %v807 = vunpack.c.h.b16 %v239
    %v808 = vunpack.c.l.b16 %v240
    %v809 = vunpack.c.h.b16 %v240
    %v810 = vunpack.c.l.b16 %v241
    %v811 = vunpack.c.h.b16 %v241
    %v812 = vunpack.c.l.b16 %v242
    %v813 = vunpack.c.h.b16 %v242
    %v814 = vunpack.c.l.b16 %v243
    %v815 = vunpack.c.h.b16 %v243
    %v816 = vunpack.c.l.b16 %v244
    %v817 = vunpack.c.h.b16 %v244
    %v818 = vunpack.c.l.b16 %v245
    %v819 = vunpack.c.h.b16 %v245
    %v820 = vunpack.c.l.b16 %v246
    %v821 = vunpack.c.h.b16 %v246
    %v822 = vunpack.c.l.b16 %v247
    %v823 = vunpack.c.h.b16 %v247
    %v824 = vunpack.c.l.b16 %v248
    %v825 = vunpack.c.h.b16 %v248
    %v826 = vunpack.c.l.b16 %v249
    %v827 = vunpack.c.h.b16 %v249
    %v828 = vunpack.c.l.b16 %v250
    %v829 = vunpack.c.h.b16 %v250
    %v830 = vunpack.c.l.b16 %v251
    %v831 = vunpack.c.h.b16 %v251
    %v832 = vunpack.c.l.b16 %v252
    %v833 = vunpack.c.h.b16 %v252
    %v834 = vunpack.c.l.b16 %v253
    %v835 = vunpack.c.h.b16 %v253
    %v836 = vunpack.c.l.b16 %v254
    %v837 = vunpack.c.h.b16 %v254
    %v838 = vunpack.c.l.b16 %v255
    %v839 = vunpack.c.h.b16 %v255
    %v840 = vunpack.c.l.b16 %v256
    %v841 = vunpack.c.h.b16 %v256
    %v842 = vunpack.c.l.b16 %v257
    %v843 = vunpack.c.h.b16 %v257
    %v844 = vunpack.c.l.b16 %v258
    %v845 = vunpack.c.h.b16 %v258
    %v846 = vunpack.c.l.b16 %v259
    %v847 = vunpack.c.h.b16 %v259
    %v848 = vunpack.c.l.b16 %v260
    %v849 = vunpack.c.h.b16 %v260
    %v850 = vunpack.c.l.b16 %v261
    %v851 = vunpack.c.h.b16 %v261
    %v852 = vunpack.c.l.b16 %v262
    %v853 = vunpack.c.h.b16 %v262
    %v854 = vunpack.c.l.b16 %v263
    %v855 = vunpack.c.h.b16 %v263
    %v856 = vunpack.c.l.b16 %v264
    %v857 = vunpack.c.h.b16 %v264
    %v858 = vunpack.c.l.b16 %v265
    %v859 = vunpack.c.h.b16 %v265
    %v860 = vunpack.c.l.b16 %v266
    %v861 = vunpack.c.h.b16 %v266
    %v862 = vunpack.c.l.b16 %v267
    %v863 = vunpack.c.h.b16 %v267
    %v864 = vunpack.c.l.b16 %v268
    %v865 = vunpack.c.h.b16 %v268
    %v866 = vunpack.c.l.b16 %v269
    %v867 = vunpack.c.h.b16 %v269
    %v868 = vunpack.c.l.b16 %v270
    %v869 = vunpack.c.h.b16 %v270
    %v870 = vunpack.c.l.b16 %v271
    %v871 = vunpack.c.h.b16 %v271
    %v872 = vunpack.c.l.b16 %v272
    %v873 = vunpack.c.h.b16 %v272
    %v874 = vunpack.c.l.b16 %v273
    %v875 = vunpack.c.h.b16 %v273
    %v876 = vunpack.c.l.b16 %v274
    %v877 = vunpack.c.h.b16 %v274
    %v878 = vunpack.c.l.b16 %v275
    %v879 = vunpack.c.h.b16 %v275
    %v880 = vunpack.c.l.b16 %v276
    %v881 = vunpack.c.h.b16 %v276
    %v882 = vunpack.c.l.b16 %v277
    %v883 = vunpack.c.h.b16 %v277
    %v884 = vunpack.c.l.b16 %v278
    %v885 = vunpack.c.h.b16 %v278
    %v886 = vunpack.c.l.b16 %v279
    %v887 = vunpack.c.h.b16 %v279
    %v888 = vunpack.c.l.b16 %v280
    %v889 = vunpack.c.h.b16 %v280
    %v890 = vunpack.c.l.b16 %v281
    %v891 = vunpack.c.h.b16 %v281
    %v892 = vunpack.c.l.b16 %v282
    %v893 = vunpack.c.h.b16 %v282
    %v894 = vunpack.c.l.b16 %v283
    %v895 = vunpack.c.h.b16 %v283
    %v896 = vunpack.c.l.b16 %v284
    %v897 = vunpack.c.h.b16 %v284
    %v898 = vunpack.c.l.b16 %v285
    %v899 = vunpack.c.h.b16 %v285
    %v900 = vunpack.c.l.b16 %v286
    %v901 = vunpack.c.h.b16 %v286
    %v902 = vunpack.c.l.b16 %v287
    %v903 = vunpack.c.h.b16 %v287
    %v904 = vunpack.c.l.b16 %v288
    %v905 = vunpack.c.h.b16 %v288
    %v906 = vunpack.c.l.b16 %v289
    %v907 = vunpack.c.h.b16 %v289
    %v908 = vunpack.c.l.b16 %v290
    %v909 = vunpack.c.h.b16 %v290
    %v910 = vunpack.c.l.b16 %v291
    %v911 = vunpack.c.h.b16 %v291
    %v912 = vunpack.c.l.b16 %v292
    %v913 = vunpack.c.h.b16 %v292
    %v914 = vunpack.c.l.b16 %v293
    %v915 = vunpack.c.h.b16 %v293
    %v916 = vpack.c.b16 %v528, %v524
    %v917 = vpack.c.b16 %v529, %v525
    %v918 = vpack.c.b16 %v530, %v526
    %v919 = vpack.c.b16 %v531, %v527
    %v920 = vpack.c.b16 %v536, %v532
    %v921 = vpack.c.b16 %v537, %v533
    %v922 = vpack.c.b16 %v538, %v534
    %v923 = vpack.c.b16 %v539, %v535
    %v924 = vpack.c.b16 %v544, %v540
    %v925 = vpack.c.b16 %v545, %v541
    %v926 = vpack.c.b16 %v546, %v542
    %v927 = vpack.c.b16 %v547, %v543
    %v928 = vpack.c.b16 %v552, %v548
    %v929 = vpack.c.b16 %v553, %v549
    %v930 = vpack.c.b16 %v554, %v550
    %v931 = vpack.c.b16 %v555, %v551
    %v932 = vpack.c.b16 %v560, %v556
    %v933 = vpack.c.b16 %v561, %v557
    %v934 = vpack.c.b16 %v562, %v558
    %v935 = vpack.c.b16 %v563, %v559
    %v936 = vpack.c.b16 %v568, %v564
    %v937 = vpack.c.b16 %v569, %v565
    %v938 = vpack.c.b16 %v570, %v566
    %v939 = vpack.c.b16 %v571, %v567
    %v940 = vpack.c.b16 %v576, %v572
    %v941 = vpack.c.b16 %v577, %v573
    %v942 = vpack.c.b16 %v578, %v574
    %v943 = vpack.c.b16 %v579, %v575
    %v944 = vpack.c.b16 %v584, %v580
    %v945 = vpack.c.b16 %v585, %v581
    %v946 = vpack.c.b16 %v586, %v582
    %v947 = vpack.c.b16 %v587, %v583
    %v948 = vpack.c.b16 %v592, %v588
    %v949 = vpack.c.b16 %v593, %v589
    %v950 = vpack.c.b16 %v594, %v590
    %v951 = vpack.c.b16 %v595, %v591
    %v952 = vpack.c.b16 %v600, %v596
    %v953 = vpack.c.b16 %v601, %v597
    %v954 = vpack.c.b16 %v602, %v598
    %v955 = vpack.c.b16 %v603, %v599
    %v956 = vpack.c.b16 %v608, %v604
    %v957 = vpack.c.b16 %v609, %v605
    %v958 = vpack.c.b16 %v610, %v606
    %v959 = vpack.c.b16 %v611, %v607
    %v960 = vpack.c.b16 %v616, %v612
    %v961 = vpack.c.b16 %v617, %v613
    %v962 = vpack.c.b16 %v618, %v614
    %v963 = vpack.c.b16 %v619, %v615
    %v964 = vpack.c.b16 %v624, %v620
    %v965 = vpack.c.b16 %v625, %v621
    %v966 = vpack.c.b16 %v626, %v622
    %v967 = vpack.c.b16 %v627, %v623
    %v968 = vpack.c.b16 %v632, %v628
    %v969 = vpack.c.b16 %v633, %v629
    %v970 = vpack.c.b16 %v634, %v630
    %v971 = vpack.c.b16 %v635, %v631
    %v972 = vpack.c.b16 %v640, %v636
    %v973 = vpack.c.b16 %v641, %v637
    %v974 = vpack.c.b16 %v642, %v638
    %v975 = vpack.c.b16 %v643, %v639
    %v976 = vpack.c.b16 %v648, %v644
    %v977 = vpack.c.b16 %v649, %v645
    %v978 = vpack.c.b16 %v650, %v646
    %v979 = vpack.c.b16 %v651, %v647
    %v980 = vpack.c.b16 %v656, %v652
    %v981 = vpack.c.b16 %v657, %v653
    %v982 = vpack.c.b16 %v658, %v654
    %v983 = vpack.c.b16 %v659, %v655
    %v984 = vpack.c.b16 %v664, %v660
    %v985 = vpack.c.b16 %v665, %v661
    %v986 = vpack.c.b16 %v666, %v662
    %v987 = vpack.c.b16 %v667, %v663
    %v988 = vpack.c.b16 %v672, %v668
    %v989 = vpack.c.b16 %v673, %v669
    %v990 = vpack.c.b16 %v674, %v670
    %v991 = vpack.c.b16 %v675, %v671
    %v992 = vpack.c.b16 %v680, %v676
    %v993 = vpack.c.b16 %v681, %v677
    %v994 = vpack.c.b16 %v682, %v678
    %v995 = vpack.c.b16 %v683, %v679
    %v996 = vpack.c.b16 %v688, %v684
    %v997 = vpack.c.b16 %v689, %v685
    %v998 = vpack.c.b16 %v690, %v686
    %v999 = vpack.c.b16 %v691, %v687
    %v1000 = vpack.c.b16 %v696, %v692
    %v1001 = vpack.c.b16 %v697, %v693
    %v1002 = vpack.c.b16 %v698, %v694
    %v1003 = vpack.c.b16 %v699, %v695
    %v1004 = vpack.c.b16 %v704, %v700
    %v1005 = vpack.c.b16 %v705, %v701
    %v1006 = vpack.c.b16 %v706, %v702
    %v1007 = vpack.c.b16 %v707, %v703
    %v1008 = vpack.c.b16 %v712, %v708
    %v1009 = vpack.c.b16 %v713, %v709
    %v1010 = vpack.c.b16 %v714, %v710
    %v1011 = vpack.c.b16 %v715, %v711
    %v1012 = vpack.c.b16 %v720, %v716
    %v1013 = vpack.c.b16 %v721, %v717
    %v1014 = vpack.c.b16 %v722, %v718
    %v1015 = vpack.c.b16 %v723, %v719
    %v1016 = vpack.c.b16 %v728, %v724
    %v1017 = vpack.c.b16 %v729, %v725
    %v1018 = vpack.c.b16 %v730, %v726
    %v1019 = vpack.c.b16 %v731, %v727
    %v1020 = vpack.c.b16 %v736, %v732
    %v1021 = vpack.c.b16 %v737, %v733
    %v1022 = vpack.c.b16 %v738, %v734
    %v1023 = vpack.c.b16 %v739, %v735
    %v1024 = vpack.c.b16 %v744, %v740
    %v1025 = vpack.c.b16 %v745, %v741
    %v1026 = vpack.c.b16 %v746, %v742
    %v1027 = vpack.c.b16 %v747, %v743
    %v1028 = vpack.c.b16 %v752, %v748
    %v1029 = vpack.c.b16 %v753, %v749
    %v1030 = vpack.c.b16 %v754, %v750
    %v1031 = vpack.c.b16 %v755, %v751
    %v1032 = vpack.c.b16 %v760, %v756
    %v1033 = vpack.c.b16 %v761, %v757
    %v1034 = vpack.c.b16 %v762, %v758
    %v1035 = vpack.c.b16 %v763, %v759
    %v1036 = vpack.c.b16 %v768, %v764
    %v1037 = vpack.c.b16 %v769, %v765
    %v1038 = vpack.c.b16 %v770, %v766
    %v1039 = vpack.c.b16 %v771, %v767
    %v1040 = vpack.c.b16 %v776, %v772
    %v1041 = vpack.c.b16 %v777, %v773
    %v1042 = vpack.c.b16 %v778, %v774
    %v1043 = vpack.c.b16 %v779, %v775
    %v1044 = vpack.c.b16 %v784, %v780
    %v1045 = vpack.c.b16 %v785, %v781
    %v1046 = vpack.c.b16 %v786, %v782
    %v1047 = vpack.c.b16 %v787, %v783
    %v1048 = vpack.c.b16 %v792, %v788
    %v1049 = vpack.c.b16 %v793, %v789
    %v1050 = vpack.c.b16 %v794, %v790
    %v1051 = vpack.c.b16 %v795, %v791
    %v1052 = vpack.c.b16 %v800, %v796
    %v1053 = vpack.c.b16 %v801, %v797
    %v1054 = vpack.c.b16 %v802, %v798
    %v1055 = vpack.c.b16 %v803, %v799
    %v1056 = vpack.c.b16 %v808, %v804
    %v1057 = vpack.c.b16 %v809, %v805
    %v1058 = vpack.c.b16 %v810, %v806
    %v1059 = vpack.c.b16 %v811, %v807
    %v1060 = vpack.c.b16 %v816, %v812
    %v1061 = vpack.c.b16 %v817, %v813
    %v1062 = vpack.c.b16 %v818, %v814
    %v1063 = vpack.c.b16 %v819, %v815
    %v1064 = vpack.c.b16 %v824, %v820
    %v1065 = vpack.c.b16 %v825, %v821
    %v1066 = vpack.c.b16 %v826, %v822
    %v1067 = vpack.c.b16 %v827, %v823
    %v1068 = vpack.c.b16 %v832, %v828
    %v1069 = vpack.c.b16 %v833, %v829
    %v1070 = vpack.c.b16 %v834, %v830
    %v1071 = vpack.c.b16 %v835, %v831
    %v1072 = vpack.c.b16 %v840, %v836
    %v1073 = vpack.c.b16 %v841, %v837
    %v1074 = vpack.c.b16 %v842, %v838
    %v1075 = vpack.c.b16 %v843, %v839
    %v1076 = vpack.c.b16 %v848, %v844
    %v1077 = vpack.c.b16 %v849, %v845
    %v1078 = vpack.c.b16 %v850, %v846
    %v1079 = vpack.c.b16 %v851, %v847
    %v1080 = vpack.c.b16 %v856, %v852
    %v1081 = vpack.c.b16 %v857, %v853
    %v1082 = vpack.c.b16 %v858, %v854
    %v1083 = vpack.c.b16 %v859, %v855
    %v1084 = vpack.c.b16 %v864, %v860
    %v1085 = vpack.c.b16 %v865, %v861
    %v1086 = vpack.c.b16 %v866, %v862
    %v1087 = vpack.c.b16 %v867, %v863
    %v1088 = vpack.c.b16 %v872, %v868
    %v1089 = vpack.c.b16 %v873, %v869
    %v1090 = vpack.c.b16 %v874, %v870
    %v1091 = vpack.c.b16 %v875, %v871
    %v1092 = vpack.c.b16 %v880, %v876
    %v1093 = vpack.c.b16 %v881, %v877
    %v1094 = vpack.c.b16 %v882, %v878
    %v1095 = vpack.c.b16 %v883, %v879
    %v1096 = vpack.c.b16 %v888, %v884
    %v1097 = vpack.c.b16 %v889, %v885
    %v1098 = vpack.c.b16 %v890, %v886
    %v1099 = vpack.c.b16 %v891, %v887
    %v1100 = vpack.c.b16 %v896, %v892
    %v1101 = vpack.c.b16 %v897, %v893
    %v1102 = vpack.c.b16 %v898, %v894
    %v1103 = vpack.c.b16 %v899, %v895
    %v1104 = vpack.c.b16 %v904, %v900
    %v1105 = vpack.c.b16 %v905, %v901
    %v1106 = vpack.c.b16 %v906, %v902
    %v1107 = vpack.c.b16 %v907, %v903
    %v1108 = vpack.c.b16 %v912, %v908
    %v1109 = vpack.c.b16 %v913, %v909
    %v1110 = vpack.c.b16 %v914, %v910
    %v1111 = vpack.c.b16 %v915, %v911
    %vm1308 = vcmask 130048
    %v1310 = vsel %vm1308, %v321, 0
    %1312 = vmatpush.bf16.msra.mxu0 %v944
    %1313 = vmatpush.bf16.msra.mxu0 %v940
    %1314 = vmatpush.bf16.msra.mxu0 %v936
    %1315 = vmatpush.bf16.msra.mxu0 %v932
    %1316 = vmatpush.bf16.msra.mxu0 %v928
    %1317 = vmatpush.bf16.msra.mxu0 %v924
    %1318 = vmatpush.bf16.msra.mxu0 %v920
    %1319 = vmatpush.bf16.msra.mxu0 %v916
    %1320 = vmatmul.bf16.gmra.mxu0 %v315
    %v1321 = vpop.f32.mrf.mxu0
    %v1322 = vadd.f32 %v296, %v1321
    %v1323 = vpop.f32.mrf.mxu0
    %1324 = vdwg.mxu0
    %1325 = vmatpush.bf16.msra.mxu0 %v976
    %1326 = vmatpush.bf16.msra.mxu0 %v972
    %1327 = vmatpush.bf16.msra.mxu0 %v968
    %1328 = vmatpush.bf16.msra.mxu0 %v964
    %1329 = vmatpush.bf16.msra.mxu0 %v960
    %1330 = vmatpush.bf16.msra.mxu0 %v956
    %1331 = vmatpush.bf16.msra.mxu0 %v952
    %1332 = vmatpush.bf16.msra.mxu0 %v948
    %1333 = vmatmul.bf16.gmra.mxu0 %v316
    %v1334 = vpop.f32.mrf.mxu0
    %v1335 = vadd.f32 %v1322, %v1334
    %v1336 = vpop.f32.mrf.mxu0
    %1337 = vdwg.mxu0
    %1338 = vmatpush.bf16.msra.mxu0 %v1008
    %1339 = vmatpush.bf16.msra.mxu0 %v1004
    %1340 = vmatpush.bf16.msra.mxu0 %v1000
    %1341 = vmatpush.bf16.msra.mxu0 %v996
    %1342 = vmatpush.bf16.msra.mxu0 %v992
    %1343 = vmatpush.bf16.msra.mxu0 %v988
    %1344 = vmatpush.bf16.msra.mxu0 %v984
    %1345 = vmatpush.bf16.msra.mxu0 %v980
    %1346 = vmatmul.bf16.gmra.mxu0 %v317
    %v1347 = vpop.f32.mrf.mxu0
    %v1348 = vadd.f32 %v1335, %v1347
    %v1349 = vpop.f32.mrf.mxu0
    %1350 = vdwg.mxu0
    %1351 = vmatpush.bf16.msra.mxu0 %v1040
    %1352 = vmatpush.bf16.msra.mxu0 %v1036
    %1353 = vmatpush.bf16.msra.mxu0 %v1032
    %1354 = vmatpush.bf16.msra.mxu0 %v1028
    %1355 = vmatpush.bf16.msra.mxu0 %v1024
    %1356 = vmatpush.bf16.msra.mxu0 %v1020
    %1357 = vmatpush.bf16.msra.mxu0 %v1016
    %1358 = vmatpush.bf16.msra.mxu0 %v1012
    %1359 = vmatmul.bf16.gmra.mxu0 %v318
    %v1360 = vpop.f32.mrf.mxu0
    %v1361 = vadd.f32 %v1348, %v1360
    %v1362 = vpop.f32.mrf.mxu0
    %1363 = vdwg.mxu0
    %1364 = vmatpush.bf16.msra.mxu0 %v1072
    %1365 = vmatpush.bf16.msra.mxu0 %v1068
    %1366 = vmatpush.bf16.msra.mxu0 %v1064
    %1367 = vmatpush.bf16.msra.mxu0 %v1060
    %1368 = vmatpush.bf16.msra.mxu0 %v1056
    %1369 = vmatpush.bf16.msra.mxu0 %v1052
    %1370 = vmatpush.bf16.msra.mxu0 %v1048
    %1371 = vmatpush.bf16.msra.mxu0 %v1044
    %1372 = vmatmul.bf16.gmra.mxu0 %v319
    %v1373 = vpop.f32.mrf.mxu0
    %v1374 = vadd.f32 %v1361, %v1373
    %v1375 = vpop.f32.mrf.mxu0
    %1376 = vdwg.mxu0
    %1377 = vmatpush.bf16.msra.mxu0 %v1104
    %1378 = vmatpush.bf16.msra.mxu0 %v1100
    %1379 = vmatpush.bf16.msra.mxu0 %v1096
    %1380 = vmatpush.bf16.msra.mxu0 %v1092
    %1381 = vmatpush.bf16.msra.mxu0 %v1088
    %1382 = vmatpush.bf16.msra.mxu0 %v1084
    %1383 = vmatpush.bf16.msra.mxu0 %v1080
    %1384 = vmatpush.bf16.msra.mxu0 %v1076
    %1385 = vmatmul.bf16.gmra.mxu0 %v320
    %v1386 = vpop.f32.mrf.mxu0
    %v1387 = vadd.f32 %v1374, %v1386
    %v1388 = vpop.f32.mrf.mxu0
    %1389 = vdwg.mxu0
    %1390 = vmatpush.bf16.msra.mxu0 0
    %1391 = vmatpush.bf16.msra.mxu0 0
    %1392 = vmatpush.bf16.msra.mxu0 0
    %1393 = vmatpush.bf16.msra.mxu0 0
    %1394 = vmatpush.bf16.msra.mxu0 0
    %1395 = vmatpush.bf16.msra.mxu0 0
    %1396 = vmatpush.bf16.msra.mxu0 0
    %1397 = vmatpush.bf16.msra.mxu0 %v1108
    %1398 = vmatmul.bf16.gmra.mxu0 %v1310
    %v1399 = vpop.f32.mrf.mxu0
    %v1400 = vadd.f32 %v1387, %v1399
    %v1401 = vpop.f32.mrf.mxu0
    %1402 = vdwg.mxu0
    %1403 = vmatpush.bf16.msra.mxu0 %v945
    %1404 = vmatpush.bf16.msra.mxu0 %v941
    %1405 = vmatpush.bf16.msra.mxu0 %v937
    %1406 = vmatpush.bf16.msra.mxu0 %v933
    %1407 = vmatpush.bf16.msra.mxu0 %v929
    %1408 = vmatpush.bf16.msra.mxu0 %v925
    %1409 = vmatpush.bf16.msra.mxu0 %v921
    %1410 = vmatpush.bf16.msra.mxu0 %v917
    %1411 = vmatmul.bf16.gmra.mxu0 %v315
    %v1412 = vpop.f32.mrf.mxu0
    %v1413 = vadd.f32 %v297, %v1412
    %v1414 = vpop.f32.mrf.mxu0
    %1415 = vdwg.mxu0
    %1416 = vmatpush.bf16.msra.mxu0 %v977
    %1417 = vmatpush.bf16.msra.mxu0 %v973
    %1418 = vmatpush.bf16.msra.mxu0 %v969
    %1419 = vmatpush.bf16.msra.mxu0 %v965
    %1420 = vmatpush.bf16.msra.mxu0 %v961
    %1421 = vmatpush.bf16.msra.mxu0 %v957
    %1422 = vmatpush.bf16.msra.mxu0 %v953
    %1423 = vmatpush.bf16.msra.mxu0 %v949
    %1424 = vmatmul.bf16.gmra.mxu0 %v316
    %v1425 = vpop.f32.mrf.mxu0
    %v1426 = vadd.f32 %v1413, %v1425
    %v1427 = vpop.f32.mrf.mxu0
    %1428 = vdwg.mxu0
    %1429 = vmatpush.bf16.msra.mxu0 %v1009
    %1430 = vmatpush.bf16.msra.mxu0 %v1005
    %1431 = vmatpush.bf16.msra.mxu0 %v1001
    %1432 = vmatpush.bf16.msra.mxu0 %v997
    %1433 = vmatpush.bf16.msra.mxu0 %v993
    %1434 = vmatpush.bf16.msra.mxu0 %v989
    %1435 = vmatpush.bf16.msra.mxu0 %v985
    %1436 = vmatpush.bf16.msra.mxu0 %v981
    %1437 = vmatmul.bf16.gmra.mxu0 %v317
    %v1438 = vpop.f32.mrf.mxu0
    %v1439 = vadd.f32 %v1426, %v1438
    %v1440 = vpop.f32.mrf.mxu0
    %1441 = vdwg.mxu0
    %1442 = vmatpush.bf16.msra.mxu0 %v1041
    %1443 = vmatpush.bf16.msra.mxu0 %v1037
    %1444 = vmatpush.bf16.msra.mxu0 %v1033
    %1445 = vmatpush.bf16.msra.mxu0 %v1029
    %1446 = vmatpush.bf16.msra.mxu0 %v1025
    %1447 = vmatpush.bf16.msra.mxu0 %v1021
    %1448 = vmatpush.bf16.msra.mxu0 %v1017
    %1449 = vmatpush.bf16.msra.mxu0 %v1013
    %1450 = vmatmul.bf16.gmra.mxu0 %v318
    %v1451 = vpop.f32.mrf.mxu0
    %v1452 = vadd.f32 %v1439, %v1451
    %v1453 = vpop.f32.mrf.mxu0
    %1454 = vdwg.mxu0
    %1455 = vmatpush.bf16.msra.mxu0 %v1073
    %1456 = vmatpush.bf16.msra.mxu0 %v1069
    %1457 = vmatpush.bf16.msra.mxu0 %v1065
    %1458 = vmatpush.bf16.msra.mxu0 %v1061
    %1459 = vmatpush.bf16.msra.mxu0 %v1057
    %1460 = vmatpush.bf16.msra.mxu0 %v1053
    %1461 = vmatpush.bf16.msra.mxu0 %v1049
    %1462 = vmatpush.bf16.msra.mxu0 %v1045
    %1463 = vmatmul.bf16.gmra.mxu0 %v319
    %v1464 = vpop.f32.mrf.mxu0
    %v1465 = vadd.f32 %v1452, %v1464
    %v1466 = vpop.f32.mrf.mxu0
    %1467 = vdwg.mxu0
    %1468 = vmatpush.bf16.msra.mxu0 %v1105
    %1469 = vmatpush.bf16.msra.mxu0 %v1101
    %1470 = vmatpush.bf16.msra.mxu0 %v1097
    %1471 = vmatpush.bf16.msra.mxu0 %v1093
    %1472 = vmatpush.bf16.msra.mxu0 %v1089
    %1473 = vmatpush.bf16.msra.mxu0 %v1085
    %1474 = vmatpush.bf16.msra.mxu0 %v1081
    %1475 = vmatpush.bf16.msra.mxu0 %v1077
    %1476 = vmatmul.bf16.gmra.mxu0 %v320
    %v1477 = vpop.f32.mrf.mxu0
    %v1478 = vadd.f32 %v1465, %v1477
    %v1479 = vpop.f32.mrf.mxu0
    %1480 = vdwg.mxu0
    %1481 = vmatpush.bf16.msra.mxu0 0
    %1482 = vmatpush.bf16.msra.mxu0 0
    %1483 = vmatpush.bf16.msra.mxu0 0
    %1484 = vmatpush.bf16.msra.mxu0 0
    %1485 = vmatpush.bf16.msra.mxu0 0
    %1486 = vmatpush.bf16.msra.mxu0 0
    %1487 = vmatpush.bf16.msra.mxu0 0
    %1488 = vmatpush.bf16.msra.mxu0 %v1109
    %1489 = vmatmul.bf16.gmra.mxu0 %v1310
    %v1490 = vpop.f32.mrf.mxu0
    %v1491 = vadd.f32 %v1478, %v1490
    %v1492 = vpop.f32.mrf.mxu0
    %1493 = vdwg.mxu0
    %1494 = vmatpush.bf16.msra.mxu0 %v946
    %1495 = vmatpush.bf16.msra.mxu0 %v942
    %1496 = vmatpush.bf16.msra.mxu0 %v938
    %1497 = vmatpush.bf16.msra.mxu0 %v934
    %1498 = vmatpush.bf16.msra.mxu0 %v930
    %1499 = vmatpush.bf16.msra.mxu0 %v926
    %1500 = vmatpush.bf16.msra.mxu0 %v922
    %1501 = vmatpush.bf16.msra.mxu0 %v918
    %1502 = vmatmul.bf16.gmra.mxu0 %v315
    %v1503 = vpop.f32.mrf.mxu0
    %v1504 = vadd.f32 %v298, %v1503
    %v1505 = vpop.f32.mrf.mxu0
    %1506 = vdwg.mxu0
    %1507 = vmatpush.bf16.msra.mxu0 %v978
    %1508 = vmatpush.bf16.msra.mxu0 %v974
    %1509 = vmatpush.bf16.msra.mxu0 %v970
    %1510 = vmatpush.bf16.msra.mxu0 %v966
    %1511 = vmatpush.bf16.msra.mxu0 %v962
    %1512 = vmatpush.bf16.msra.mxu0 %v958
    %1513 = vmatpush.bf16.msra.mxu0 %v954
    %1514 = vmatpush.bf16.msra.mxu0 %v950
    %1515 = vmatmul.bf16.gmra.mxu0 %v316
    %v1516 = vpop.f32.mrf.mxu0
    %v1517 = vadd.f32 %v1504, %v1516
    %v1518 = vpop.f32.mrf.mxu0
    %1519 = vdwg.mxu0
    %1520 = vmatpush.bf16.msra.mxu0 %v1010
    %1521 = vmatpush.bf16.msra.mxu0 %v1006
    %1522 = vmatpush.bf16.msra.mxu0 %v1002
    %1523 = vmatpush.bf16.msra.mxu0 %v998
    %1524 = vmatpush.bf16.msra.mxu0 %v994
    %1525 = vmatpush.bf16.msra.mxu0 %v990
    %1526 = vmatpush.bf16.msra.mxu0 %v986
    %1527 = vmatpush.bf16.msra.mxu0 %v982
    %1528 = vmatmul.bf16.gmra.mxu0 %v317
    %v1529 = vpop.f32.mrf.mxu0
    %v1530 = vadd.f32 %v1517, %v1529
    %v1531 = vpop.f32.mrf.mxu0
    %1532 = vdwg.mxu0
    %1533 = vmatpush.bf16.msra.mxu0 %v1042
    %1534 = vmatpush.bf16.msra.mxu0 %v1038
    %1535 = vmatpush.bf16.msra.mxu0 %v1034
    %1536 = vmatpush.bf16.msra.mxu0 %v1030
    %1537 = vmatpush.bf16.msra.mxu0 %v1026
    %1538 = vmatpush.bf16.msra.mxu0 %v1022
    %1539 = vmatpush.bf16.msra.mxu0 %v1018
    %1540 = vmatpush.bf16.msra.mxu0 %v1014
    %1541 = vmatmul.bf16.gmra.mxu0 %v318
    %v1542 = vpop.f32.mrf.mxu0
    %v1543 = vadd.f32 %v1530, %v1542
    %v1544 = vpop.f32.mrf.mxu0
    %1545 = vdwg.mxu0
    %1546 = vmatpush.bf16.msra.mxu0 %v1074
    %1547 = vmatpush.bf16.msra.mxu0 %v1070
    %1548 = vmatpush.bf16.msra.mxu0 %v1066
    %1549 = vmatpush.bf16.msra.mxu0 %v1062
    %1550 = vmatpush.bf16.msra.mxu0 %v1058
    %1551 = vmatpush.bf16.msra.mxu0 %v1054
    %1552 = vmatpush.bf16.msra.mxu0 %v1050
    %1553 = vmatpush.bf16.msra.mxu0 %v1046
    %1554 = vmatmul.bf16.gmra.mxu0 %v319
    %v1555 = vpop.f32.mrf.mxu0
    %v1556 = vadd.f32 %v1543, %v1555
    %v1557 = vpop.f32.mrf.mxu0
    %1558 = vdwg.mxu0
    %1559 = vmatpush.bf16.msra.mxu0 %v1106
    %1560 = vmatpush.bf16.msra.mxu0 %v1102
    %1561 = vmatpush.bf16.msra.mxu0 %v1098
    %1562 = vmatpush.bf16.msra.mxu0 %v1094
    %1563 = vmatpush.bf16.msra.mxu0 %v1090
    %1564 = vmatpush.bf16.msra.mxu0 %v1086
    %1565 = vmatpush.bf16.msra.mxu0 %v1082
    %1566 = vmatpush.bf16.msra.mxu0 %v1078
    %1567 = vmatmul.bf16.gmra.mxu0 %v320
    %v1568 = vpop.f32.mrf.mxu0
    %v1569 = vadd.f32 %v1556, %v1568
    %v1570 = vpop.f32.mrf.mxu0
    %1571 = vdwg.mxu0
    %1572 = vmatpush.bf16.msra.mxu0 0
    %1573 = vmatpush.bf16.msra.mxu0 0
    %1574 = vmatpush.bf16.msra.mxu0 0
    %1575 = vmatpush.bf16.msra.mxu0 0
    %1576 = vmatpush.bf16.msra.mxu0 0
    %1577 = vmatpush.bf16.msra.mxu0 0
    %1578 = vmatpush.bf16.msra.mxu0 0
    %1579 = vmatpush.bf16.msra.mxu0 %v1110
    %1580 = vmatmul.bf16.gmra.mxu0 %v1310
    %v1581 = vpop.f32.mrf.mxu0
    %v1582 = vadd.f32 %v1569, %v1581
    %v1583 = vpop.f32.mrf.mxu0
    %1584 = vdwg.mxu0
    %1585 = vmatpush.bf16.msra.mxu0 %v947
    %1586 = vmatpush.bf16.msra.mxu0 %v943
    %1587 = vmatpush.bf16.msra.mxu0 %v939
    %1588 = vmatpush.bf16.msra.mxu0 %v935
    %1589 = vmatpush.bf16.msra.mxu0 %v931
    %1590 = vmatpush.bf16.msra.mxu0 %v927
    %1591 = vmatpush.bf16.msra.mxu0 %v923
    %1592 = vmatpush.bf16.msra.mxu0 %v919
    %1593 = vmatmul.bf16.gmra.mxu0 %v315
    %v1594 = vpop.f32.mrf.mxu0
    %v1595 = vadd.f32 %v299, %v1594
    %v1596 = vpop.f32.mrf.mxu0
    %1597 = vdwg.mxu0
    %1598 = vmatpush.bf16.msra.mxu0 %v979
    %1599 = vmatpush.bf16.msra.mxu0 %v975
    %1600 = vmatpush.bf16.msra.mxu0 %v971
    %1601 = vmatpush.bf16.msra.mxu0 %v967
    %1602 = vmatpush.bf16.msra.mxu0 %v963
    %1603 = vmatpush.bf16.msra.mxu0 %v959
    %1604 = vmatpush.bf16.msra.mxu0 %v955
    %1605 = vmatpush.bf16.msra.mxu0 %v951
    %1606 = vmatmul.bf16.gmra.mxu0 %v316
    %v1607 = vpop.f32.mrf.mxu0
    %v1608 = vadd.f32 %v1595, %v1607
    %v1609 = vpop.f32.mrf.mxu0
    %1610 = vdwg.mxu0
    %1611 = vmatpush.bf16.msra.mxu0 %v1011
    %1612 = vmatpush.bf16.msra.mxu0 %v1007
    %1613 = vmatpush.bf16.msra.mxu0 %v1003
    %1614 = vmatpush.bf16.msra.mxu0 %v999
    %1615 = vmatpush.bf16.msra.mxu0 %v995
    %1616 = vmatpush.bf16.msra.mxu0 %v991
    %1617 = vmatpush.bf16.msra.mxu0 %v987
    %1618 = vmatpush.bf16.msra.mxu0 %v983
    %1619 = vmatmul.bf16.gmra.mxu0 %v317
    %v1620 = vpop.f32.mrf.mxu0
    %v1621 = vadd.f32 %v1608, %v1620
    %v1622 = vpop.f32.mrf.mxu0
    %1623 = vdwg.mxu0
    %1624 = vmatpush.bf16.msra.mxu0 %v1043
    %1625 = vmatpush.bf16.msra.mxu0 %v1039
    %1626 = vmatpush.bf16.msra.mxu0 %v1035
    %1627 = vmatpush.bf16.msra.mxu0 %v1031
    %1628 = vmatpush.bf16.msra.mxu0 %v1027
    %1629 = vmatpush.bf16.msra.mxu0 %v1023
    %1630 = vmatpush.bf16.msra.mxu0 %v1019
    %1631 = vmatpush.bf16.msra.mxu0 %v1015
    %1632 = vmatmul.bf16.gmra.mxu0 %v318
    %v1633 = vpop.f32.mrf.mxu0
    %v1634 = vadd.f32 %v1621, %v1633
    %v1635 = vpop.f32.mrf.mxu0
    %1636 = vdwg.mxu0
    %1637 = vmatpush.bf16.msra.mxu0 %v1075
    %1638 = vmatpush.bf16.msra.mxu0 %v1071
    %1639 = vmatpush.bf16.msra.mxu0 %v1067
    %1640 = vmatpush.bf16.msra.mxu0 %v1063
    %1641 = vmatpush.bf16.msra.mxu0 %v1059
    %1642 = vmatpush.bf16.msra.mxu0 %v1055
    %1643 = vmatpush.bf16.msra.mxu0 %v1051
    %1644 = vmatpush.bf16.msra.mxu0 %v1047
    %1645 = vmatmul.bf16.gmra.mxu0 %v319
    %v1646 = vpop.f32.mrf.mxu0
    %v1647 = vadd.f32 %v1634, %v1646
    %v1648 = vpop.f32.mrf.mxu0
    %1649 = vdwg.mxu0
    %1650 = vmatpush.bf16.msra.mxu0 %v1107
    %1651 = vmatpush.bf16.msra.mxu0 %v1103
    %1652 = vmatpush.bf16.msra.mxu0 %v1099
    %1653 = vmatpush.bf16.msra.mxu0 %v1095
    %1654 = vmatpush.bf16.msra.mxu0 %v1091
    %1655 = vmatpush.bf16.msra.mxu0 %v1087
    %1656 = vmatpush.bf16.msra.mxu0 %v1083
    %1657 = vmatpush.bf16.msra.mxu0 %v1079
    %1658 = vmatmul.bf16.gmra.mxu0 %v320
    %v1659 = vpop.f32.mrf.mxu0
    %v1660 = vadd.f32 %v1647, %v1659
    %v1661 = vpop.f32.mrf.mxu0
    %1662 = vdwg.mxu0
    %1663 = vmatpush.bf16.msra.mxu0 0
    %1664 = vmatpush.bf16.msra.mxu0 0
    %1665 = vmatpush.bf16.msra.mxu0 0
    %1666 = vmatpush.bf16.msra.mxu0 0
    %1667 = vmatpush.bf16.msra.mxu0 0
    %1668 = vmatpush.bf16.msra.mxu0 0
    %1669 = vmatpush.bf16.msra.mxu0 0
    %1670 = vmatpush.bf16.msra.mxu0 %v1111
    %1671 = vmatmul.bf16.gmra.mxu0 %v1310
    %v1672 = vpop.f32.mrf.mxu0
    %v1673 = vadd.f32 %v1660, %v1672
    %v1674 = vpop.f32.mrf.mxu0
    %1675 = vdwg.mxu0
    %v1676 = vmax.f32 %v1400, 0.0
    %v1677 = vmax.f32 %v1491, 0.0
    %v1678 = vmax.f32 %v1582, 0.0
    %v1679 = vmax.f32 %v1673, 0.0
    %v1680 = vpack.c.bf16 %v1676, %v1676
    %v1681 = vpack.c.bf16 %v1677, %v1677
    %v1682 = vpack.c.bf16 %v1678, %v1678
    %v1683 = vpack.c.bf16 %v1679, %v1679
    %v1684 = vld [vmem:[%s4] sm:$0xff]
    %v1685 = vld [vmem:[%s4 + $0x8] sm:$0xff]
    %v1686 = vld [vmem:[%s4 + $0x10] sm:$0xff]
    %v1687 = vld [vmem:[%s4 + $0x18] sm:$0xff]
    %v1688 = vld [vmem:[%s4 + $0x20] sm:$0xff]
    %v1689 = vld [vmem:[%s4 + $0x28] sm:$0xff]
    %v1690 = vld [vmem:[%s4 + $0x30] sm:$0xff]
    %v1691 = vld [vmem:[%s4 + $0x38] sm:$0xff]
    %v1692 = vld [vmem:[%s4 + $0x40] sm:$0xff]
    %v1693 = vld [vmem:[%s4 + $0x48] sm:$0xff]
    %v1694 = vld [vmem:[%s4 + $0x50] sm:$0xff]
    %v1695 = vld [vmem:[%s4 + $0x58] sm:$0xff]
    %v1696 = vld [vmem:[%s4 + $0x60] sm:$0xff]
    %v1697 = vld [vmem:[%s4 + $0x68] sm:$0xff]
    %v1698 = vld [vmem:[%s4 + $0x70] sm:$0xff]
    %v1699 = vld [vmem:[%s4 + $0x78] sm:$0xff]
    %v1700 = vld [vmem:[%s4 + $0x80] sm:$0xff]
    %v1701 = vld [vmem:[%s4 + $0x88] sm:$0xff]
    %v1702 = vld [vmem:[%s4 + $0x90] sm:$0xff]
    %v1703 = vld [vmem:[%s4 + $0x98] sm:$0xff]
    %v1704 = vld [vmem:[%s4 + $0xa0] sm:$0xff]
    %v1705 = vld [vmem:[%s4 + $0xa8] sm:$0xff]
    %v1706 = vld [vmem:[%s4 + $0xb0] sm:$0xff]
    %v1707 = vld [vmem:[%s4 + $0xb8] sm:$0xff]
    %v1708 = vld [vmem:[%s4 + $0xc0] sm:$0xff]
    %v1709 = vld [vmem:[%s4 + $0xc8] sm:$0xff]
    %v1710 = vld [vmem:[%s4 + $0xd0] sm:$0xff]
    %v1711 = vld [vmem:[%s4 + $0xd8] sm:$0xff]
    %v1712 = vld [vmem:[%s4 + $0xe0] sm:$0xff]
    %v1713 = vld [vmem:[%s4 + $0xe8] sm:$0xff]
    %v1714 = vld [vmem:[%s4 + $0xf0] sm:$0xff]
    %v1715 = vld [vmem:[%s4 + $0xf8] sm:$0xff]
    %v1716 = vld [vmem:[%s4 + $0x100] sm:$0xff]
    %v1717 = vld [vmem:[%s4 + $0x108] sm:$0xff]
    %v1718 = vld [vmem:[%s4 + $0x110] sm:$0xff]
    %v1719 = vld [vmem:[%s4 + $0x118] sm:$0xff]
    %v1720 = vld [vmem:[%s4 + $0x120] sm:$0xff]
    %v1721 = vld [vmem:[%s4 + $0x128] sm:$0xff]
    %v1722 = vld [vmem:[%s4 + $0x130] sm:$0xff]
    %v1723 = vld [vmem:[%s4 + $0x138] sm:$0xff]
    %v1724 = vld [vmem:[%s4 + $0x140] sm:$0xff]
    %v1725 = vld [vmem:[%s4 + $0x148] sm:$0xff]
    %v1726 = vld [vmem:[%s4 + $0x150] sm:$0xff]
    %v1727 = vld [vmem:[%s4 + $0x158] sm:$0xff]
    %v1728 = vld [vmem:[%s4 + $0x160] sm:$0xff]
    %v1729 = vld [vmem:[%s4 + $0x168] sm:$0xff]
    %v1730 = vld [vmem:[%s4 + $0x170] sm:$0xff]
    %v1731 = vld [vmem:[%s4 + $0x178] sm:$0xff]
    %v1732 = vld [vmem:[%s4 + $0x180] sm:$0xff]
    %v1733 = vld [vmem:[%s4 + $0x188] sm:$0xff]
    %v1734 = vld [vmem:[%s4 + $0x190] sm:$0xff]
    %v1735 = vld [vmem:[%s4 + $0x198] sm:$0xff]
    %v1736 = vld [vmem:[%s4 + $0x1a0] sm:$0xff]
    %v1737 = vld [vmem:[%s4 + $0x1a8] sm:$0xff]
    %v1738 = vld [vmem:[%s4 + $0x1b0] sm:$0xff]
    %v1739 = vld [vmem:[%s4 + $0x1b8] sm:$0xff]
    %v1740 = vld [vmem:[%s4 + $0x1c0] sm:$0xff]
    %v1741 = vld [vmem:[%s4 + $0x1c8] sm:$0xff]
    %v1742 = vld [vmem:[%s4 + $0x1d0] sm:$0xff]
    %v1743 = vld [vmem:[%s4 + $0x1d8] sm:$0xff]
    %v1744 = vld [vmem:[%s4 + $0x1e0] sm:$0xff]
    %v1745 = vld [vmem:[%s4 + $0x1e8] sm:$0xff]
    %v1746 = vld [vmem:[%s4 + $0x1f0] sm:$0xff]
    %v1747 = vld [vmem:[%s4 + $0x1f8] sm:$0xff]
    %v1748 = vld [vmem:[%s4 + $0x200] sm:$0xff]
    %v1749 = vld [vmem:[%s4 + $0x208] sm:$0xff]
    %v1750 = vld [vmem:[%s4 + $0x210] sm:$0xff]
    %v1751 = vld [vmem:[%s4 + $0x218] sm:$0xff]
    %v1752 = vld [vmem:[%s4 + $0x220] sm:$0xff]
    %v1753 = vld [vmem:[%s4 + $0x228] sm:$0xff]
    %v1754 = vld [vmem:[%s4 + $0x230] sm:$0xff]
    %v1755 = vld [vmem:[%s4 + $0x238] sm:$0xff]
    %v1756 = vld [vmem:[%s4 + $0x240] sm:$0xff]
    %v1757 = vld [vmem:[%s4 + $0x248] sm:$0xff]
    %v1758 = vld [vmem:[%s4 + $0x250] sm:$0xff]
    %v1759 = vld [vmem:[%s4 + $0x258] sm:$0xff]
    %v1760 = vld [vmem:[%s4 + $0x260] sm:$0xff]
    %v1761 = vld [vmem:[%s4 + $0x268] sm:$0xff]
    %v1762 = vld [vmem:[%s4 + $0x270] sm:$0xff]
    %v1763 = vld [vmem:[%s4 + $0x278] sm:$0xff]
    %v1764 = vld [vmem:[%s4 + $0x280] sm:$0xff]
    %v1765 = vld [vmem:[%s4 + $0x288] sm:$0xff]
    %v1766 = vld [vmem:[%s4 + $0x290] sm:$0xff]
    %v1767 = vld [vmem:[%s4 + $0x298] sm:$0xff]
    %v1768 = vld [vmem:[%s4 + $0x2a0] sm:$0xff]
    %v1769 = vld [vmem:[%s4 + $0x2a8] sm:$0xff]
    %v1770 = vld [vmem:[%s4 + $0x2b0] sm:$0xff]
    %v1771 = vld [vmem:[%s4 + $0x2b8] sm:$0xff]
    %v1772 = vld [vmem:[%s4 + $0x2c0] sm:$0xff]
    %v1773 = vld [vmem:[%s4 + $0x2c8] sm:$0xff]
    %v1774 = vld [vmem:[%s4 + $0x2d0] sm:$0xff]
    %v1775 = vld [vmem:[%s4 + $0x2d8] sm:$0xff]
    %v1776 = vld [vmem:[%s4 + $0x2e0] sm:$0xff]
    %v1777 = vld [vmem:[%s4 + $0x2e8] sm:$0xff]
    %v1778 = vld [vmem:[%s4 + $0x2f0] sm:$0xff]
    %v1779 = vld [vmem:[%s4 + $0x2f8] sm:$0xff]
    %v1780 = vld [vmem:[%s4 + $0x300] sm:$0xff]
    %v1781 = vld [vmem:[%s4 + $0x308] sm:$0xff]
    %v1782 = vld [vmem:[%s4 + $0x310] sm:$0xff]
    %v1783 = vld [vmem:[%s4 + $0x318] sm:$0xff]
    %v1784 = vld [vmem:[%s5] sm:$0xf]
    %v1786 = vperm.slane %v1784, 0
    %v1787 = vperm.slane %v1784, 1
    %v1788 = vperm.slane %v1784, 2
    %v1789 = vperm.slane %v1784, 3
    %v1894 = vunpack.c.l.b16 %v1684
    %v1895 = vunpack.c.h.b16 %v1684
    %v1896 = vunpack.c.l.b16 %v1685
    %v1897 = vunpack.c.h.b16 %v1685
    %v1898 = vunpack.c.l.b16 %v1686
    %v1899 = vunpack.c.h.b16 %v1686
    %v1900 = vunpack.c.l.b16 %v1687
    %v1901 = vunpack.c.h.b16 %v1687
    %v1902 = vunpack.c.l.b16 %v1688
    %v1903 = vunpack.c.h.b16 %v1688
    %v1904 = vunpack.c.l.b16 %v1689
    %v1905 = vunpack.c.h.b16 %v1689
    %v1906 = vunpack.c.l.b16 %v1690
    %v1907 = vunpack.c.h.b16 %v1690
    %v1908 = vunpack.c.l.b16 %v1691
    %v1909 = vunpack.c.h.b16 %v1691
    %v1910 = vunpack.c.l.b16 %v1692
    %v1911 = vunpack.c.h.b16 %v1692
    %v1912 = vunpack.c.l.b16 %v1693
    %v1913 = vunpack.c.h.b16 %v1693
    %v1914 = vunpack.c.l.b16 %v1694
    %v1915 = vunpack.c.h.b16 %v1694
    %v1916 = vunpack.c.l.b16 %v1695
    %v1917 = vunpack.c.h.b16 %v1695
    %v1918 = vunpack.c.l.b16 %v1696
    %v1919 = vunpack.c.h.b16 %v1696
    %v1920 = vunpack.c.l.b16 %v1697
    %v1921 = vunpack.c.h.b16 %v1697
    %v1922 = vunpack.c.l.b16 %v1698
    %v1923 = vunpack.c.h.b16 %v1698
    %v1924 = vunpack.c.l.b16 %v1699
    %v1925 = vunpack.c.h.b16 %v1699
    %v1926 = vunpack.c.l.b16 %v1700
    %v1927 = vunpack.c.h.b16 %v1700
    %v1928 = vunpack.c.l.b16 %v1701
    %v1929 = vunpack.c.h.b16 %v1701
    %v1930 = vunpack.c.l.b16 %v1702
    %v1931 = vunpack.c.h.b16 %v1702
    %v1932 = vunpack.c.l.b16 %v1703
    %v1933 = vunpack.c.h.b16 %v1703
    %v1934 = vunpack.c.l.b16 %v1704
    %v1935 = vunpack.c.h.b16 %v1704
    %v1936 = vunpack.c.l.b16 %v1705
    %v1937 = vunpack.c.h.b16 %v1705
    %v1938 = vunpack.c.l.b16 %v1706
    %v1939 = vunpack.c.h.b16 %v1706
    %v1940 = vunpack.c.l.b16 %v1707
    %v1941 = vunpack.c.h.b16 %v1707
    %v1942 = vunpack.c.l.b16 %v1708
    %v1943 = vunpack.c.h.b16 %v1708
    %v1944 = vunpack.c.l.b16 %v1709
    %v1945 = vunpack.c.h.b16 %v1709
    %v1946 = vunpack.c.l.b16 %v1710
    %v1947 = vunpack.c.h.b16 %v1710
    %v1948 = vunpack.c.l.b16 %v1711
    %v1949 = vunpack.c.h.b16 %v1711
    %v1950 = vunpack.c.l.b16 %v1712
    %v1951 = vunpack.c.h.b16 %v1712
    %v1952 = vunpack.c.l.b16 %v1713
    %v1953 = vunpack.c.h.b16 %v1713
    %v1954 = vunpack.c.l.b16 %v1714
    %v1955 = vunpack.c.h.b16 %v1714
    %v1956 = vunpack.c.l.b16 %v1715
    %v1957 = vunpack.c.h.b16 %v1715
    %v1958 = vunpack.c.l.b16 %v1716
    %v1959 = vunpack.c.h.b16 %v1716
    %v1960 = vunpack.c.l.b16 %v1717
    %v1961 = vunpack.c.h.b16 %v1717
    %v1962 = vunpack.c.l.b16 %v1718
    %v1963 = vunpack.c.h.b16 %v1718
    %v1964 = vunpack.c.l.b16 %v1719
    %v1965 = vunpack.c.h.b16 %v1719
    %v1966 = vunpack.c.l.b16 %v1720
    %v1967 = vunpack.c.h.b16 %v1720
    %v1968 = vunpack.c.l.b16 %v1721
    %v1969 = vunpack.c.h.b16 %v1721
    %v1970 = vunpack.c.l.b16 %v1722
    %v1971 = vunpack.c.h.b16 %v1722
    %v1972 = vunpack.c.l.b16 %v1723
    %v1973 = vunpack.c.h.b16 %v1723
    %v1974 = vunpack.c.l.b16 %v1724
    %v1975 = vunpack.c.h.b16 %v1724
    %v1976 = vunpack.c.l.b16 %v1725
    %v1977 = vunpack.c.h.b16 %v1725
    %v1978 = vunpack.c.l.b16 %v1726
    %v1979 = vunpack.c.h.b16 %v1726
    %v1980 = vunpack.c.l.b16 %v1727
    %v1981 = vunpack.c.h.b16 %v1727
    %v1982 = vunpack.c.l.b16 %v1728
    %v1983 = vunpack.c.h.b16 %v1728
    %v1984 = vunpack.c.l.b16 %v1729
    %v1985 = vunpack.c.h.b16 %v1729
    %v1986 = vunpack.c.l.b16 %v1730
    %v1987 = vunpack.c.h.b16 %v1730
    %v1988 = vunpack.c.l.b16 %v1731
    %v1989 = vunpack.c.h.b16 %v1731
    %v1990 = vunpack.c.l.b16 %v1732
    %v1991 = vunpack.c.h.b16 %v1732
    %v1992 = vunpack.c.l.b16 %v1733
    %v1993 = vunpack.c.h.b16 %v1733
    %v1994 = vunpack.c.l.b16 %v1734
    %v1995 = vunpack.c.h.b16 %v1734
    %v1996 = vunpack.c.l.b16 %v1735
    %v1997 = vunpack.c.h.b16 %v1735
    %v1998 = vunpack.c.l.b16 %v1736
    %v1999 = vunpack.c.h.b16 %v1736
    %v2000 = vunpack.c.l.b16 %v1737
    %v2001 = vunpack.c.h.b16 %v1737
    %v2002 = vunpack.c.l.b16 %v1738
    %v2003 = vunpack.c.h.b16 %v1738
    %v2004 = vunpack.c.l.b16 %v1739
    %v2005 = vunpack.c.h.b16 %v1739
    %v2006 = vunpack.c.l.b16 %v1740
    %v2007 = vunpack.c.h.b16 %v1740
    %v2008 = vunpack.c.l.b16 %v1741
    %v2009 = vunpack.c.h.b16 %v1741
    %v2010 = vunpack.c.l.b16 %v1742
    %v2011 = vunpack.c.h.b16 %v1742
    %v2012 = vunpack.c.l.b16 %v1743
    %v2013 = vunpack.c.h.b16 %v1743
    %v2014 = vunpack.c.l.b16 %v1744
    %v2015 = vunpack.c.h.b16 %v1744
    %v2016 = vunpack.c.l.b16 %v1745
    %v2017 = vunpack.c.h.b16 %v1745
    %v2018 = vunpack.c.l.b16 %v1746
    %v2019 = vunpack.c.h.b16 %v1746
    %v2020 = vunpack.c.l.b16 %v1747
    %v2021 = vunpack.c.h.b16 %v1747
    %v2022 = vunpack.c.l.b16 %v1748
    %v2023 = vunpack.c.h.b16 %v1748
    %v2024 = vunpack.c.l.b16 %v1749
    %v2025 = vunpack.c.h.b16 %v1749
    %v2026 = vunpack.c.l.b16 %v1750
    %v2027 = vunpack.c.h.b16 %v1750
    %v2028 = vunpack.c.l.b16 %v1751
    %v2029 = vunpack.c.h.b16 %v1751
    %v2030 = vunpack.c.l.b16 %v1752
    %v2031 = vunpack.c.h.b16 %v1752
    %v2032 = vunpack.c.l.b16 %v1753
    %v2033 = vunpack.c.h.b16 %v1753
    %v2034 = vunpack.c.l.b16 %v1754
    %v2035 = vunpack.c.h.b16 %v1754
    %v2036 = vunpack.c.l.b16 %v1755
    %v2037 = vunpack.c.h.b16 %v1755
    %v2038 = vunpack.c.l.b16 %v1756
    %v2039 = vunpack.c.h.b16 %v1756
    %v2040 = vunpack.c.l.b16 %v1757
    %v2041 = vunpack.c.h.b16 %v1757
    %v2042 = vunpack.c.l.b16 %v1758
    %v2043 = vunpack.c.h.b16 %v1758
    %v2044 = vunpack.c.l.b16 %v1759
    %v2045 = vunpack.c.h.b16 %v1759
    %v2046 = vunpack.c.l.b16 %v1760
    %v2047 = vunpack.c.h.b16 %v1760
    %v2048 = vunpack.c.l.b16 %v1761
    %v2049 = vunpack.c.h.b16 %v1761
    %v2050 = vunpack.c.l.b16 %v1762
    %v2051 = vunpack.c.h.b16 %v1762
    %v2052 = vunpack.c.l.b16 %v1763
    %v2053 = vunpack.c.h.b16 %v1763
    %v2054 = vunpack.c.l.b16 %v1764
    %v2055 = vunpack.c.h.b16 %v1764
    %v2056 = vunpack.c.l.b16 %v1765
    %v2057 = vunpack.c.h.b16 %v1765
    %v2058 = vunpack.c.l.b16 %v1766
    %v2059 = vunpack.c.h.b16 %v1766
    %v2060 = vunpack.c.l.b16 %v1767
    %v2061 = vunpack.c.h.b16 %v1767
    %v2062 = vunpack.c.l.b16 %v1768
    %v2063 = vunpack.c.h.b16 %v1768
    %v2064 = vunpack.c.l.b16 %v1769
    %v2065 = vunpack.c.h.b16 %v1769
    %v2066 = vunpack.c.l.b16 %v1770
    %v2067 = vunpack.c.h.b16 %v1770
    %v2068 = vunpack.c.l.b16 %v1771
    %v2069 = vunpack.c.h.b16 %v1771
    %v2070 = vunpack.c.l.b16 %v1772
    %v2071 = vunpack.c.h.b16 %v1772
    %v2072 = vunpack.c.l.b16 %v1773
    %v2073 = vunpack.c.h.b16 %v1773
    %v2074 = vunpack.c.l.b16 %v1774
    %v2075 = vunpack.c.h.b16 %v1774
    %v2076 = vunpack.c.l.b16 %v1775
    %v2077 = vunpack.c.h.b16 %v1775
    %v2078 = vunpack.c.l.b16 %v1776
    %v2079 = vunpack.c.h.b16 %v1776
    %v2080 = vunpack.c.l.b16 %v1777
    %v2081 = vunpack.c.h.b16 %v1777
    %v2082 = vunpack.c.l.b16 %v1778
    %v2083 = vunpack.c.h.b16 %v1778
    %v2084 = vunpack.c.l.b16 %v1779
    %v2085 = vunpack.c.h.b16 %v1779
    %v2086 = vunpack.c.l.b16 %v1780
    %v2087 = vunpack.c.h.b16 %v1780
    %v2088 = vunpack.c.l.b16 %v1781
    %v2089 = vunpack.c.h.b16 %v1781
    %v2090 = vunpack.c.l.b16 %v1782
    %v2091 = vunpack.c.h.b16 %v1782
    %v2092 = vunpack.c.l.b16 %v1783
    %v2093 = vunpack.c.h.b16 %v1783
    %v2094 = vpack.c.b16 %v1898, %v1894
    %v2095 = vpack.c.b16 %v1899, %v1895
    %v2096 = vpack.c.b16 %v1900, %v1896
    %v2097 = vpack.c.b16 %v1901, %v1897
    %v2098 = vpack.c.b16 %v1906, %v1902
    %v2099 = vpack.c.b16 %v1907, %v1903
    %v2100 = vpack.c.b16 %v1908, %v1904
    %v2101 = vpack.c.b16 %v1909, %v1905
    %v2102 = vpack.c.b16 %v1914, %v1910
    %v2103 = vpack.c.b16 %v1915, %v1911
    %v2104 = vpack.c.b16 %v1916, %v1912
    %v2105 = vpack.c.b16 %v1917, %v1913
    %v2106 = vpack.c.b16 %v1922, %v1918
    %v2107 = vpack.c.b16 %v1923, %v1919
    %v2108 = vpack.c.b16 %v1924, %v1920
    %v2109 = vpack.c.b16 %v1925, %v1921
    %v2110 = vpack.c.b16 %v1930, %v1926
    %v2111 = vpack.c.b16 %v1931, %v1927
    %v2112 = vpack.c.b16 %v1932, %v1928
    %v2113 = vpack.c.b16 %v1933, %v1929
    %v2114 = vpack.c.b16 %v1938, %v1934
    %v2115 = vpack.c.b16 %v1939, %v1935
    %v2116 = vpack.c.b16 %v1940, %v1936
    %v2117 = vpack.c.b16 %v1941, %v1937
    %v2118 = vpack.c.b16 %v1946, %v1942
    %v2119 = vpack.c.b16 %v1947, %v1943
    %v2120 = vpack.c.b16 %v1948, %v1944
    %v2121 = vpack.c.b16 %v1949, %v1945
    %v2122 = vpack.c.b16 %v1954, %v1950
    %v2123 = vpack.c.b16 %v1955, %v1951
    %v2124 = vpack.c.b16 %v1956, %v1952
    %v2125 = vpack.c.b16 %v1957, %v1953
    %v2126 = vpack.c.b16 %v1962, %v1958
    %v2127 = vpack.c.b16 %v1963, %v1959
    %v2128 = vpack.c.b16 %v1964, %v1960
    %v2129 = vpack.c.b16 %v1965, %v1961
    %v2130 = vpack.c.b16 %v1970, %v1966
    %v2131 = vpack.c.b16 %v1971, %v1967
    %v2132 = vpack.c.b16 %v1972, %v1968
    %v2133 = vpack.c.b16 %v1973, %v1969
    %v2134 = vpack.c.b16 %v1978, %v1974
    %v2135 = vpack.c.b16 %v1979, %v1975
    %v2136 = vpack.c.b16 %v1980, %v1976
    %v2137 = vpack.c.b16 %v1981, %v1977
    %v2138 = vpack.c.b16 %v1986, %v1982
    %v2139 = vpack.c.b16 %v1987, %v1983
    %v2140 = vpack.c.b16 %v1988, %v1984
    %v2141 = vpack.c.b16 %v1989, %v1985
    %v2142 = vpack.c.b16 %v1994, %v1990
    %v2143 = vpack.c.b16 %v1995, %v1991
    %v2144 = vpack.c.b16 %v1996, %v1992
    %v2145 = vpack.c.b16 %v1997, %v1993
    %v2146 = vpack.c.b16 %v2002, %v1998
    %v2147 = vpack.c.b16 %v2003, %v1999
    %v2148 = vpack.c.b16 %v2004, %v2000
    %v2149 = vpack.c.b16 %v2005, %v2001
    %v2150 = vpack.c.b16 %v2010, %v2006
    %v2151 = vpack.c.b16 %v2011, %v2007
    %v2152 = vpack.c.b16 %v2012, %v2008
    %v2153 = vpack.c.b16 %v2013, %v2009
    %v2154 = vpack.c.b16 %v2018, %v2014
    %v2155 = vpack.c.b16 %v2019, %v2015
    %v2156 = vpack.c.b16 %v2020, %v2016
    %v2157 = vpack.c.b16 %v2021, %v2017
    %v2158 = vpack.c.b16 %v2026, %v2022
    %v2159 = vpack.c.b16 %v2027, %v2023
    %v2160 = vpack.c.b16 %v2028, %v2024
    %v2161 = vpack.c.b16 %v2029, %v2025
    %v2162 = vpack.c.b16 %v2034, %v2030
    %v2163 = vpack.c.b16 %v2035, %v2031
    %v2164 = vpack.c.b16 %v2036, %v2032
    %v2165 = vpack.c.b16 %v2037, %v2033
    %v2166 = vpack.c.b16 %v2042, %v2038
    %v2167 = vpack.c.b16 %v2043, %v2039
    %v2168 = vpack.c.b16 %v2044, %v2040
    %v2169 = vpack.c.b16 %v2045, %v2041
    %v2170 = vpack.c.b16 %v2050, %v2046
    %v2171 = vpack.c.b16 %v2051, %v2047
    %v2172 = vpack.c.b16 %v2052, %v2048
    %v2173 = vpack.c.b16 %v2053, %v2049
    %v2174 = vpack.c.b16 %v2058, %v2054
    %v2175 = vpack.c.b16 %v2059, %v2055
    %v2176 = vpack.c.b16 %v2060, %v2056
    %v2177 = vpack.c.b16 %v2061, %v2057
    %v2178 = vpack.c.b16 %v2066, %v2062
    %v2179 = vpack.c.b16 %v2067, %v2063
    %v2180 = vpack.c.b16 %v2068, %v2064
    %v2181 = vpack.c.b16 %v2069, %v2065
    %v2182 = vpack.c.b16 %v2074, %v2070
    %v2183 = vpack.c.b16 %v2075, %v2071
    %v2184 = vpack.c.b16 %v2076, %v2072
    %v2185 = vpack.c.b16 %v2077, %v2073
    %v2186 = vpack.c.b16 %v2082, %v2078
    %v2187 = vpack.c.b16 %v2083, %v2079
    %v2188 = vpack.c.b16 %v2084, %v2080
    %v2189 = vpack.c.b16 %v2085, %v2081
    %v2190 = vpack.c.b16 %v2090, %v2086
    %v2191 = vpack.c.b16 %v2091, %v2087
    %v2192 = vpack.c.b16 %v2092, %v2088
    %v2193 = vpack.c.b16 %v2093, %v2089
    %v2295 = vsel %vm1308, %v1683, 0
    %2297 = vmatpush.bf16.msra.mxu0 %v2122
    %2298 = vmatpush.bf16.msra.mxu0 %v2118
    %2299 = vmatpush.bf16.msra.mxu0 %v2114
    %2300 = vmatpush.bf16.msra.mxu0 %v2110
    %2301 = vmatpush.bf16.msra.mxu0 %v2106
    %2302 = vmatpush.bf16.msra.mxu0 %v2102
    %2303 = vmatpush.bf16.msra.mxu0 %v2098
    %2304 = vmatpush.bf16.msra.mxu0 %v2094
    %2305 = vmatmul.bf16.gmra.mxu0 %v1680
    %v2306 = vpop.f32.mrf.mxu0
    %v2307 = vadd.f32 %v1786, %v2306
    %v2308 = vpop.f32.mrf.mxu0
    %2309 = vdwg.mxu0
    %2310 = vmatpush.bf16.msra.mxu0 %v2154
    %2311 = vmatpush.bf16.msra.mxu0 %v2150
    %2312 = vmatpush.bf16.msra.mxu0 %v2146
    %2313 = vmatpush.bf16.msra.mxu0 %v2142
    %2314 = vmatpush.bf16.msra.mxu0 %v2138
    %2315 = vmatpush.bf16.msra.mxu0 %v2134
    %2316 = vmatpush.bf16.msra.mxu0 %v2130
    %2317 = vmatpush.bf16.msra.mxu0 %v2126
    %2318 = vmatmul.bf16.gmra.mxu0 %v1681
    %v2319 = vpop.f32.mrf.mxu0
    %v2320 = vadd.f32 %v2307, %v2319
    %v2321 = vpop.f32.mrf.mxu0
    %2322 = vdwg.mxu0
    %2323 = vmatpush.bf16.msra.mxu0 %v2186
    %2324 = vmatpush.bf16.msra.mxu0 %v2182
    %2325 = vmatpush.bf16.msra.mxu0 %v2178
    %2326 = vmatpush.bf16.msra.mxu0 %v2174
    %2327 = vmatpush.bf16.msra.mxu0 %v2170
    %2328 = vmatpush.bf16.msra.mxu0 %v2166
    %2329 = vmatpush.bf16.msra.mxu0 %v2162
    %2330 = vmatpush.bf16.msra.mxu0 %v2158
    %2331 = vmatmul.bf16.gmra.mxu0 %v1682
    %v2332 = vpop.f32.mrf.mxu0
    %v2333 = vadd.f32 %v2320, %v2332
    %v2334 = vpop.f32.mrf.mxu0
    %2335 = vdwg.mxu0
    %2336 = vmatpush.bf16.msra.mxu0 0
    %2337 = vmatpush.bf16.msra.mxu0 0
    %2338 = vmatpush.bf16.msra.mxu0 0
    %2339 = vmatpush.bf16.msra.mxu0 0
    %2340 = vmatpush.bf16.msra.mxu0 0
    %2341 = vmatpush.bf16.msra.mxu0 0
    %2342 = vmatpush.bf16.msra.mxu0 0
    %2343 = vmatpush.bf16.msra.mxu0 %v2190
    %2344 = vmatmul.bf16.gmra.mxu0 %v2295
    %v2345 = vpop.f32.mrf.mxu0
    %v2346 = vadd.f32 %v2333, %v2345
    %v2347 = vpop.f32.mrf.mxu0
    %2348 = vdwg.mxu0
    %2349 = vmatpush.bf16.msra.mxu0 %v2123
    %2350 = vmatpush.bf16.msra.mxu0 %v2119
    %2351 = vmatpush.bf16.msra.mxu0 %v2115
    %2352 = vmatpush.bf16.msra.mxu0 %v2111
    %2353 = vmatpush.bf16.msra.mxu0 %v2107
    %2354 = vmatpush.bf16.msra.mxu0 %v2103
    %2355 = vmatpush.bf16.msra.mxu0 %v2099
    %2356 = vmatpush.bf16.msra.mxu0 %v2095
    %2357 = vmatmul.bf16.gmra.mxu0 %v1680
    %v2358 = vpop.f32.mrf.mxu0
    %v2359 = vadd.f32 %v1787, %v2358
    %v2360 = vpop.f32.mrf.mxu0
    %2361 = vdwg.mxu0
    %2362 = vmatpush.bf16.msra.mxu0 %v2155
    %2363 = vmatpush.bf16.msra.mxu0 %v2151
    %2364 = vmatpush.bf16.msra.mxu0 %v2147
    %2365 = vmatpush.bf16.msra.mxu0 %v2143
    %2366 = vmatpush.bf16.msra.mxu0 %v2139
    %2367 = vmatpush.bf16.msra.mxu0 %v2135
    %2368 = vmatpush.bf16.msra.mxu0 %v2131
    %2369 = vmatpush.bf16.msra.mxu0 %v2127
    %2370 = vmatmul.bf16.gmra.mxu0 %v1681
    %v2371 = vpop.f32.mrf.mxu0
    %v2372 = vadd.f32 %v2359, %v2371
    %v2373 = vpop.f32.mrf.mxu0
    %2374 = vdwg.mxu0
    %2375 = vmatpush.bf16.msra.mxu0 %v2187
    %2376 = vmatpush.bf16.msra.mxu0 %v2183
    %2377 = vmatpush.bf16.msra.mxu0 %v2179
    %2378 = vmatpush.bf16.msra.mxu0 %v2175
    %2379 = vmatpush.bf16.msra.mxu0 %v2171
    %2380 = vmatpush.bf16.msra.mxu0 %v2167
    %2381 = vmatpush.bf16.msra.mxu0 %v2163
    %2382 = vmatpush.bf16.msra.mxu0 %v2159
    %2383 = vmatmul.bf16.gmra.mxu0 %v1682
    %v2384 = vpop.f32.mrf.mxu0
    %v2385 = vadd.f32 %v2372, %v2384
    %v2386 = vpop.f32.mrf.mxu0
    %2387 = vdwg.mxu0
    %2388 = vmatpush.bf16.msra.mxu0 0
    %2389 = vmatpush.bf16.msra.mxu0 0
    %2390 = vmatpush.bf16.msra.mxu0 0
    %2391 = vmatpush.bf16.msra.mxu0 0
    %2392 = vmatpush.bf16.msra.mxu0 0
    %2393 = vmatpush.bf16.msra.mxu0 0
    %2394 = vmatpush.bf16.msra.mxu0 0
    %2395 = vmatpush.bf16.msra.mxu0 %v2191
    %2396 = vmatmul.bf16.gmra.mxu0 %v2295
    %v2397 = vpop.f32.mrf.mxu0
    %v2398 = vadd.f32 %v2385, %v2397
    %v2399 = vpop.f32.mrf.mxu0
    %2400 = vdwg.mxu0
    %2401 = vmatpush.bf16.msra.mxu0 %v2124
    %2402 = vmatpush.bf16.msra.mxu0 %v2120
    %2403 = vmatpush.bf16.msra.mxu0 %v2116
    %2404 = vmatpush.bf16.msra.mxu0 %v2112
    %2405 = vmatpush.bf16.msra.mxu0 %v2108
    %2406 = vmatpush.bf16.msra.mxu0 %v2104
    %2407 = vmatpush.bf16.msra.mxu0 %v2100
    %2408 = vmatpush.bf16.msra.mxu0 %v2096
    %2409 = vmatmul.bf16.gmra.mxu0 %v1680
    %v2410 = vpop.f32.mrf.mxu0
    %v2411 = vadd.f32 %v1788, %v2410
    %v2412 = vpop.f32.mrf.mxu0
    %2413 = vdwg.mxu0
    %2414 = vmatpush.bf16.msra.mxu0 %v2156
    %2415 = vmatpush.bf16.msra.mxu0 %v2152
    %2416 = vmatpush.bf16.msra.mxu0 %v2148
    %2417 = vmatpush.bf16.msra.mxu0 %v2144
    %2418 = vmatpush.bf16.msra.mxu0 %v2140
    %2419 = vmatpush.bf16.msra.mxu0 %v2136
    %2420 = vmatpush.bf16.msra.mxu0 %v2132
    %2421 = vmatpush.bf16.msra.mxu0 %v2128
    %2422 = vmatmul.bf16.gmra.mxu0 %v1681
    %v2423 = vpop.f32.mrf.mxu0
    %v2424 = vadd.f32 %v2411, %v2423
    %v2425 = vpop.f32.mrf.mxu0
    %2426 = vdwg.mxu0
    %2427 = vmatpush.bf16.msra.mxu0 %v2188
    %2428 = vmatpush.bf16.msra.mxu0 %v2184
    %2429 = vmatpush.bf16.msra.mxu0 %v2180
    %2430 = vmatpush.bf16.msra.mxu0 %v2176
    %2431 = vmatpush.bf16.msra.mxu0 %v2172
    %2432 = vmatpush.bf16.msra.mxu0 %v2168
    %2433 = vmatpush.bf16.msra.mxu0 %v2164
    %2434 = vmatpush.bf16.msra.mxu0 %v2160
    %2435 = vmatmul.bf16.gmra.mxu0 %v1682
    %v2436 = vpop.f32.mrf.mxu0
    %v2437 = vadd.f32 %v2424, %v2436
    %v2438 = vpop.f32.mrf.mxu0
    %2439 = vdwg.mxu0
    %2440 = vmatpush.bf16.msra.mxu0 0
    %2441 = vmatpush.bf16.msra.mxu0 0
    %2442 = vmatpush.bf16.msra.mxu0 0
    %2443 = vmatpush.bf16.msra.mxu0 0
    %2444 = vmatpush.bf16.msra.mxu0 0
    %2445 = vmatpush.bf16.msra.mxu0 0
    %2446 = vmatpush.bf16.msra.mxu0 0
    %2447 = vmatpush.bf16.msra.mxu0 %v2192
    %2448 = vmatmul.bf16.gmra.mxu0 %v2295
    %v2449 = vpop.f32.mrf.mxu0
    %v2450 = vadd.f32 %v2437, %v2449
    %v2451 = vpop.f32.mrf.mxu0
    %2452 = vdwg.mxu0
    %2453 = vmatpush.bf16.msra.mxu0 %v2125
    %2454 = vmatpush.bf16.msra.mxu0 %v2121
    %2455 = vmatpush.bf16.msra.mxu0 %v2117
    %2456 = vmatpush.bf16.msra.mxu0 %v2113
    %2457 = vmatpush.bf16.msra.mxu0 %v2109
    %2458 = vmatpush.bf16.msra.mxu0 %v2105
    %2459 = vmatpush.bf16.msra.mxu0 %v2101
    %2460 = vmatpush.bf16.msra.mxu0 %v2097
    %2461 = vmatmul.bf16.gmra.mxu0 %v1680
    %v2462 = vpop.f32.mrf.mxu0
    %v2463 = vadd.f32 %v1789, %v2462
    %v2464 = vpop.f32.mrf.mxu0
    %2465 = vdwg.mxu0
    %2466 = vmatpush.bf16.msra.mxu0 %v2157
    %2467 = vmatpush.bf16.msra.mxu0 %v2153
    %2468 = vmatpush.bf16.msra.mxu0 %v2149
    %2469 = vmatpush.bf16.msra.mxu0 %v2145
    %2470 = vmatpush.bf16.msra.mxu0 %v2141
    %2471 = vmatpush.bf16.msra.mxu0 %v2137
    %2472 = vmatpush.bf16.msra.mxu0 %v2133
    %2473 = vmatpush.bf16.msra.mxu0 %v2129
    %2474 = vmatmul.bf16.gmra.mxu0 %v1681
    %v2475 = vpop.f32.mrf.mxu0
    %v2476 = vadd.f32 %v2463, %v2475
    %v2477 = vpop.f32.mrf.mxu0
    %2478 = vdwg.mxu0
    %2479 = vmatpush.bf16.msra.mxu0 %v2189
    %2480 = vmatpush.bf16.msra.mxu0 %v2185
    %2481 = vmatpush.bf16.msra.mxu0 %v2181
    %2482 = vmatpush.bf16.msra.mxu0 %v2177
    %2483 = vmatpush.bf16.msra.mxu0 %v2173
    %2484 = vmatpush.bf16.msra.mxu0 %v2169
    %2485 = vmatpush.bf16.msra.mxu0 %v2165
    %2486 = vmatpush.bf16.msra.mxu0 %v2161
    %2487 = vmatmul.bf16.gmra.mxu0 %v1682
    %v2488 = vpop.f32.mrf.mxu0
    %v2489 = vadd.f32 %v2476, %v2488
    %v2490 = vpop.f32.mrf.mxu0
    %2491 = vdwg.mxu0
    %2492 = vmatpush.bf16.msra.mxu0 0
    %2493 = vmatpush.bf16.msra.mxu0 0
    %2494 = vmatpush.bf16.msra.mxu0 0
    %2495 = vmatpush.bf16.msra.mxu0 0
    %2496 = vmatpush.bf16.msra.mxu0 0
    %2497 = vmatpush.bf16.msra.mxu0 0
    %2498 = vmatpush.bf16.msra.mxu0 0
    %2499 = vmatpush.bf16.msra.mxu0 %v2193
    %2500 = vmatmul.bf16.gmra.mxu0 %v2295
    %v2501 = vpop.f32.mrf.mxu0
    %v2502 = vadd.f32 %v2489, %v2501
    %v2503 = vpop.f32.mrf.mxu0
    %2504 = vdwg.mxu0
    %v2505 = vmax.f32 %v2346, 0.0
    %v2506 = vmax.f32 %v2398, 0.0
    %v2507 = vmax.f32 %v2450, 0.0
    %v2508 = vmax.f32 %v2502, 0.0
    %v2509 = vpack.c.bf16 %v2505, %v2505
    %v2510 = vpack.c.bf16 %v2506, %v2506
    %v2511 = vpack.c.bf16 %v2507, %v2507
    %v2512 = vpack.c.bf16 %v2508, %v2508
    %v2513 = vld [vmem:[%s6] sm:$0xff]
    %v2514 = vld [vmem:[%s6 + $0x8] sm:$0xff]
    %v2515 = vld [vmem:[%s6 + $0x10] sm:$0xff]
    %v2516 = vld [vmem:[%s6 + $0x18] sm:$0xff]
    %v2517 = vld [vmem:[%s6 + $0x20] sm:$0xff]
    %v2518 = vld [vmem:[%s6 + $0x28] sm:$0xff]
    %v2519 = vld [vmem:[%s6 + $0x30] sm:$0xff]
    %v2520 = vld [vmem:[%s6 + $0x38] sm:$0xff]
    %v2521 = vld [vmem:[%s6 + $0x40] sm:$0xff]
    %v2522 = vld [vmem:[%s6 + $0x48] sm:$0xff]
    %v2523 = vld [vmem:[%s6 + $0x50] sm:$0xff]
    %v2524 = vld [vmem:[%s6 + $0x58] sm:$0xff]
    %v2525 = vld [vmem:[%s6 + $0x60] sm:$0xff]
    %v2526 = vld [vmem:[%s6 + $0x68] sm:$0xff]
    %v2527 = vld [vmem:[%s6 + $0x70] sm:$0xff]
    %v2528 = vld [vmem:[%s6 + $0x78] sm:$0xff]
    %v2529 = vld [vmem:[%s6 + $0x80] sm:$0xff]
    %v2530 = vld [vmem:[%s6 + $0x88] sm:$0xff]
    %v2531 = vld [vmem:[%s6 + $0x90] sm:$0xff]
    %v2532 = vld [vmem:[%s6 + $0x98] sm:$0xff]
    %v2533 = vld [vmem:[%s6 + $0xa0] sm:$0xff]
    %v2534 = vld [vmem:[%s6 + $0xa8] sm:$0xff]
    %v2535 = vld [vmem:[%s6 + $0xb0] sm:$0xff]
    %v2536 = vld [vmem:[%s6 + $0xb8] sm:$0xff]
    %v2537 = vld [vmem:[%s6 + $0xc0] sm:$0xff]
    %v2538 = vld [vmem:[%s6 + $0xc8] sm:$0xff]
    %v2539 = vld [vmem:[%s6 + $0xd0] sm:$0xff]
    %v2540 = vld [vmem:[%s6 + $0xd8] sm:$0xff]
    %v2541 = vld [vmem:[%s6 + $0xe0] sm:$0xff]
    %v2542 = vld [vmem:[%s6 + $0xe8] sm:$0xff]
    %v2543 = vld [vmem:[%s6 + $0xf0] sm:$0xff]
    %v2544 = vld [vmem:[%s6 + $0xf8] sm:$0xff]
    %v2545 = vld [vmem:[%s6 + $0x100] sm:$0xff]
    %v2546 = vld [vmem:[%s6 + $0x108] sm:$0xff]
    %v2547 = vld [vmem:[%s6 + $0x110] sm:$0xff]
    %v2548 = vld [vmem:[%s6 + $0x118] sm:$0xff]
    %v2549 = vld [vmem:[%s6 + $0x120] sm:$0xff]
    %v2550 = vld [vmem:[%s6 + $0x128] sm:$0xff]
    %v2551 = vld [vmem:[%s6 + $0x130] sm:$0xff]
    %v2552 = vld [vmem:[%s6 + $0x138] sm:$0xff]
    %v2553 = vld [vmem:[%s6 + $0x140] sm:$0xff]
    %v2554 = vld [vmem:[%s6 + $0x148] sm:$0xff]
    %v2555 = vld [vmem:[%s6 + $0x150] sm:$0xff]
    %v2556 = vld [vmem:[%s6 + $0x158] sm:$0xff]
    %v2557 = vld [vmem:[%s6 + $0x160] sm:$0xff]
    %v2558 = vld [vmem:[%s6 + $0x168] sm:$0xff]
    %v2559 = vld [vmem:[%s6 + $0x170] sm:$0xff]
    %v2560 = vld [vmem:[%s6 + $0x178] sm:$0xff]
    %v2561 = vld [vmem:[%s6 + $0x180] sm:$0xff]
    %v2562 = vld [vmem:[%s6 + $0x188] sm:$0xff]
    %v2563 = vld [vmem:[%s6 + $0x190] sm:$0xff]
    %v2564 = vld [vmem:[%s6 + $0x198] sm:$0xff]
    %v2565 = vld [vmem:[%s6 + $0x1a0] sm:$0xff]
    %v2566 = vld [vmem:[%s6 + $0x1a8] sm:$0xff]
    %v2567 = vld [vmem:[%s6 + $0x1b0] sm:$0xff]
    %v2568 = vld [vmem:[%s6 + $0x1b8] sm:$0xff]
    %v2569 = vld [vmem:[%s6 + $0x1c0] sm:$0xff]
    %v2570 = vld [vmem:[%s6 + $0x1c8] sm:$0xff]
    %v2571 = vld [vmem:[%s6 + $0x1d0] sm:$0xff]
    %v2572 = vld [vmem:[%s6 + $0x1d8] sm:$0xff]
    %v2573 = vld [vmem:[%s6 + $0x1e0] sm:$0xff]
    %v2574 = vld [vmem:[%s6 + $0x1e8] sm:$0xff]
    %v2575 = vld [vmem:[%s6 + $0x1f0] sm:$0xff]
    %v2576 = vld [vmem:[%s6 + $0x1f8] sm:$0xff]
    %v2577 = vld [vmem:[%s6 + $0x200] sm:$0xff]
    %v2578 = vld [vmem:[%s6 + $0x208] sm:$0xff]
    %v2579 = vld [vmem:[%s6 + $0x210] sm:$0xff]
    %v2580 = vld [vmem:[%s6 + $0x218] sm:$0xff]
    %v2581 = vld [vmem:[%s6 + $0x220] sm:$0xff]
    %v2582 = vld [vmem:[%s6 + $0x228] sm:$0xff]
    %v2583 = vld [vmem:[%s6 + $0x230] sm:$0xff]
    %v2584 = vld [vmem:[%s6 + $0x238] sm:$0xff]
    %v2585 = vld [vmem:[%s6 + $0x240] sm:$0xff]
    %v2586 = vld [vmem:[%s6 + $0x248] sm:$0xff]
    %v2587 = vld [vmem:[%s6 + $0x250] sm:$0xff]
    %v2588 = vld [vmem:[%s6 + $0x258] sm:$0xff]
    %v2589 = vld [vmem:[%s6 + $0x260] sm:$0xff]
    %v2590 = vld [vmem:[%s6 + $0x268] sm:$0xff]
    %v2591 = vld [vmem:[%s6 + $0x270] sm:$0xff]
    %v2592 = vld [vmem:[%s6 + $0x278] sm:$0xff]
    %v2593 = vld [vmem:[%s6 + $0x280] sm:$0xff]
    %v2594 = vld [vmem:[%s6 + $0x288] sm:$0xff]
    %v2595 = vld [vmem:[%s6 + $0x290] sm:$0xff]
    %v2596 = vld [vmem:[%s6 + $0x298] sm:$0xff]
    %v2597 = vld [vmem:[%s6 + $0x2a0] sm:$0xff]
    %v2598 = vld [vmem:[%s6 + $0x2a8] sm:$0xff]
    %v2599 = vld [vmem:[%s6 + $0x2b0] sm:$0xff]
    %v2600 = vld [vmem:[%s6 + $0x2b8] sm:$0xff]
    %v2601 = vld [vmem:[%s6 + $0x2c0] sm:$0xff]
    %v2602 = vld [vmem:[%s6 + $0x2c8] sm:$0xff]
    %v2603 = vld [vmem:[%s6 + $0x2d0] sm:$0xff]
    %v2604 = vld [vmem:[%s6 + $0x2d8] sm:$0xff]
    %v2605 = vld [vmem:[%s6 + $0x2e0] sm:$0xff]
    %v2606 = vld [vmem:[%s6 + $0x2e8] sm:$0xff]
    %v2607 = vld [vmem:[%s6 + $0x2f0] sm:$0xff]
    %v2608 = vld [vmem:[%s6 + $0x2f8] sm:$0xff]
    %v2609 = vld [vmem:[%s6 + $0x300] sm:$0xff]
    %v2610 = vld [vmem:[%s6 + $0x308] sm:$0xff]
    %v2611 = vld [vmem:[%s6 + $0x310] sm:$0xff]
    %v2612 = vld [vmem:[%s6 + $0x318] sm:$0xff]
    %v2613 = vld [vmem:[%s7] sm:$0xf]
    %v2615 = vperm.slane %v2613, 0
    %v2616 = vperm.slane %v2613, 1
    %v2617 = vperm.slane %v2613, 2
    %v2618 = vperm.slane %v2613, 3
    %v2723 = vunpack.c.l.b16 %v2513
    %v2724 = vunpack.c.h.b16 %v2513
    %v2725 = vunpack.c.l.b16 %v2514
    %v2726 = vunpack.c.h.b16 %v2514
    %v2727 = vunpack.c.l.b16 %v2515
    %v2728 = vunpack.c.h.b16 %v2515
    %v2729 = vunpack.c.l.b16 %v2516
    %v2730 = vunpack.c.h.b16 %v2516
    %v2731 = vunpack.c.l.b16 %v2517
    %v2732 = vunpack.c.h.b16 %v2517
    %v2733 = vunpack.c.l.b16 %v2518
    %v2734 = vunpack.c.h.b16 %v2518
    %v2735 = vunpack.c.l.b16 %v2519
    %v2736 = vunpack.c.h.b16 %v2519
    %v2737 = vunpack.c.l.b16 %v2520
    %v2738 = vunpack.c.h.b16 %v2520
    %v2739 = vunpack.c.l.b16 %v2521
    %v2740 = vunpack.c.h.b16 %v2521
    %v2741 = vunpack.c.l.b16 %v2522
    %v2742 = vunpack.c.h.b16 %v2522
    %v2743 = vunpack.c.l.b16 %v2523
    %v2744 = vunpack.c.h.b16 %v2523
    %v2745 = vunpack.c.l.b16 %v2524
    %v2746 = vunpack.c.h.b16 %v2524
    %v2747 = vunpack.c.l.b16 %v2525
    %v2748 = vunpack.c.h.b16 %v2525
    %v2749 = vunpack.c.l.b16 %v2526
    %v2750 = vunpack.c.h.b16 %v2526
    %v2751 = vunpack.c.l.b16 %v2527
    %v2752 = vunpack.c.h.b16 %v2527
    %v2753 = vunpack.c.l.b16 %v2528
    %v2754 = vunpack.c.h.b16 %v2528
    %v2755 = vunpack.c.l.b16 %v2529
    %v2756 = vunpack.c.h.b16 %v2529
    %v2757 = vunpack.c.l.b16 %v2530
    %v2758 = vunpack.c.h.b16 %v2530
    %v2759 = vunpack.c.l.b16 %v2531
    %v2760 = vunpack.c.h.b16 %v2531
    %v2761 = vunpack.c.l.b16 %v2532
    %v2762 = vunpack.c.h.b16 %v2532
    %v2763 = vunpack.c.l.b16 %v2533
    %v2764 = vunpack.c.h.b16 %v2533
    %v2765 = vunpack.c.l.b16 %v2534
    %v2766 = vunpack.c.h.b16 %v2534
    %v2767 = vunpack.c.l.b16 %v2535
    %v2768 = vunpack.c.h.b16 %v2535
    %v2769 = vunpack.c.l.b16 %v2536
    %v2770 = vunpack.c.h.b16 %v2536
    %v2771 = vunpack.c.l.b16 %v2537
    %v2772 = vunpack.c.h.b16 %v2537
    %v2773 = vunpack.c.l.b16 %v2538
    %v2774 = vunpack.c.h.b16 %v2538
    %v2775 = vunpack.c.l.b16 %v2539
    %v2776 = vunpack.c.h.b16 %v2539
    %v2777 = vunpack.c.l.b16 %v2540
    %v2778 = vunpack.c.h.b16 %v2540
    %v2779 = vunpack.c.l.b16 %v2541
    %v2780 = vunpack.c.h.b16 %v2541
    %v2781 = vunpack.c.l.b16 %v2542
    %v2782 = vunpack.c.h.b16 %v2542
    %v2783 = vunpack.c.l.b16 %v2543
    %v2784 = vunpack.c.h.b16 %v2543
    %v2785 = vunpack.c.l.b16 %v2544
    %v2786 = vunpack.c.h.b16 %v2544
    %v2787 = vunpack.c.l.b16 %v2545
    %v2788 = vunpack.c.h.b16 %v2545
    %v2789 = vunpack.c.l.b16 %v2546
    %v2790 = vunpack.c.h.b16 %v2546
    %v2791 = vunpack.c.l.b16 %v2547
    %v2792 = vunpack.c.h.b16 %v2547
    %v2793 = vunpack.c.l.b16 %v2548
    %v2794 = vunpack.c.h.b16 %v2548
    %v2795 = vunpack.c.l.b16 %v2549
    %v2796 = vunpack.c.h.b16 %v2549
    %v2797 = vunpack.c.l.b16 %v2550
    %v2798 = vunpack.c.h.b16 %v2550
    %v2799 = vunpack.c.l.b16 %v2551
    %v2800 = vunpack.c.h.b16 %v2551
    %v2801 = vunpack.c.l.b16 %v2552
    %v2802 = vunpack.c.h.b16 %v2552
    %v2803 = vunpack.c.l.b16 %v2553
    %v2804 = vunpack.c.h.b16 %v2553
    %v2805 = vunpack.c.l.b16 %v2554
    %v2806 = vunpack.c.h.b16 %v2554
    %v2807 = vunpack.c.l.b16 %v2555
    %v2808 = vunpack.c.h.b16 %v2555
    %v2809 = vunpack.c.l.b16 %v2556
    %v2810 = vunpack.c.h.b16 %v2556
    %v2811 = vunpack.c.l.b16 %v2557
    %v2812 = vunpack.c.h.b16 %v2557
    %v2813 = vunpack.c.l.b16 %v2558
    %v2814 = vunpack.c.h.b16 %v2558
    %v2815 = vunpack.c.l.b16 %v2559
    %v2816 = vunpack.c.h.b16 %v2559
    %v2817 = vunpack.c.l.b16 %v2560
    %v2818 = vunpack.c.h.b16 %v2560
    %v2819 = vunpack.c.l.b16 %v2561
    %v2820 = vunpack.c.h.b16 %v2561
    %v2821 = vunpack.c.l.b16 %v2562
    %v2822 = vunpack.c.h.b16 %v2562
    %v2823 = vunpack.c.l.b16 %v2563
    %v2824 = vunpack.c.h.b16 %v2563
    %v2825 = vunpack.c.l.b16 %v2564
    %v2826 = vunpack.c.h.b16 %v2564
    %v2827 = vunpack.c.l.b16 %v2565
    %v2828 = vunpack.c.h.b16 %v2565
    %v2829 = vunpack.c.l.b16 %v2566
    %v2830 = vunpack.c.h.b16 %v2566
    %v2831 = vunpack.c.l.b16 %v2567
    %v2832 = vunpack.c.h.b16 %v2567
    %v2833 = vunpack.c.l.b16 %v2568
    %v2834 = vunpack.c.h.b16 %v2568
    %v2835 = vunpack.c.l.b16 %v2569
    %v2836 = vunpack.c.h.b16 %v2569
    %v2837 = vunpack.c.l.b16 %v2570
    %v2838 = vunpack.c.h.b16 %v2570
    %v2839 = vunpack.c.l.b16 %v2571
    %v2840 = vunpack.c.h.b16 %v2571
    %v2841 = vunpack.c.l.b16 %v2572
    %v2842 = vunpack.c.h.b16 %v2572
    %v2843 = vunpack.c.l.b16 %v2573
    %v2844 = vunpack.c.h.b16 %v2573
    %v2845 = vunpack.c.l.b16 %v2574
    %v2846 = vunpack.c.h.b16 %v2574
    %v2847 = vunpack.c.l.b16 %v2575
    %v2848 = vunpack.c.h.b16 %v2575
    %v2849 = vunpack.c.l.b16 %v2576
    %v2850 = vunpack.c.h.b16 %v2576
    %v2851 = vunpack.c.l.b16 %v2577
    %v2852 = vunpack.c.h.b16 %v2577
    %v2853 = vunpack.c.l.b16 %v2578
    %v2854 = vunpack.c.h.b16 %v2578
    %v2855 = vunpack.c.l.b16 %v2579
    %v2856 = vunpack.c.h.b16 %v2579
    %v2857 = vunpack.c.l.b16 %v2580
    %v2858 = vunpack.c.h.b16 %v2580
    %v2859 = vunpack.c.l.b16 %v2581
    %v2860 = vunpack.c.h.b16 %v2581
    %v2861 = vunpack.c.l.b16 %v2582
    %v2862 = vunpack.c.h.b16 %v2582
    %v2863 = vunpack.c.l.b16 %v2583
    %v2864 = vunpack.c.h.b16 %v2583
    %v2865 = vunpack.c.l.b16 %v2584
    %v2866 = vunpack.c.h.b16 %v2584
    %v2867 = vunpack.c.l.b16 %v2585
    %v2868 = vunpack.c.h.b16 %v2585
    %v2869 = vunpack.c.l.b16 %v2586
    %v2870 = vunpack.c.h.b16 %v2586
    %v2871 = vunpack.c.l.b16 %v2587
    %v2872 = vunpack.c.h.b16 %v2587
    %v2873 = vunpack.c.l.b16 %v2588
    %v2874 = vunpack.c.h.b16 %v2588
    %v2875 = vunpack.c.l.b16 %v2589
    %v2876 = vunpack.c.h.b16 %v2589
    %v2877 = vunpack.c.l.b16 %v2590
    %v2878 = vunpack.c.h.b16 %v2590
    %v2879 = vunpack.c.l.b16 %v2591
    %v2880 = vunpack.c.h.b16 %v2591
    %v2881 = vunpack.c.l.b16 %v2592
    %v2882 = vunpack.c.h.b16 %v2592
    %v2883 = vunpack.c.l.b16 %v2593
    %v2884 = vunpack.c.h.b16 %v2593
    %v2885 = vunpack.c.l.b16 %v2594
    %v2886 = vunpack.c.h.b16 %v2594
    %v2887 = vunpack.c.l.b16 %v2595
    %v2888 = vunpack.c.h.b16 %v2595
    %v2889 = vunpack.c.l.b16 %v2596
    %v2890 = vunpack.c.h.b16 %v2596
    %v2891 = vunpack.c.l.b16 %v2597
    %v2892 = vunpack.c.h.b16 %v2597
    %v2893 = vunpack.c.l.b16 %v2598
    %v2894 = vunpack.c.h.b16 %v2598
    %v2895 = vunpack.c.l.b16 %v2599
    %v2896 = vunpack.c.h.b16 %v2599
    %v2897 = vunpack.c.l.b16 %v2600
    %v2898 = vunpack.c.h.b16 %v2600
    %v2899 = vunpack.c.l.b16 %v2601
    %v2900 = vunpack.c.h.b16 %v2601
    %v2901 = vunpack.c.l.b16 %v2602
    %v2902 = vunpack.c.h.b16 %v2602
    %v2903 = vunpack.c.l.b16 %v2603
    %v2904 = vunpack.c.h.b16 %v2603
    %v2905 = vunpack.c.l.b16 %v2604
    %v2906 = vunpack.c.h.b16 %v2604
    %v2907 = vunpack.c.l.b16 %v2605
    %v2908 = vunpack.c.h.b16 %v2605
    %v2909 = vunpack.c.l.b16 %v2606
    %v2910 = vunpack.c.h.b16 %v2606
    %v2911 = vunpack.c.l.b16 %v2607
    %v2912 = vunpack.c.h.b16 %v2607
    %v2913 = vunpack.c.l.b16 %v2608
    %v2914 = vunpack.c.h.b16 %v2608
    %v2915 = vunpack.c.l.b16 %v2609
    %v2916 = vunpack.c.h.b16 %v2609
    %v2917 = vunpack.c.l.b16 %v2610
    %v2918 = vunpack.c.h.b16 %v2610
    %v2919 = vunpack.c.l.b16 %v2611
    %v2920 = vunpack.c.h.b16 %v2611
    %v2921 = vunpack.c.l.b16 %v2612
    %v2922 = vunpack.c.h.b16 %v2612
    %v2923 = vpack.c.b16 %v2727, %v2723
    %v2924 = vpack.c.b16 %v2728, %v2724
    %v2925 = vpack.c.b16 %v2729, %v2725
    %v2926 = vpack.c.b16 %v2730, %v2726
    %v2927 = vpack.c.b16 %v2735, %v2731
    %v2928 = vpack.c.b16 %v2736, %v2732
    %v2929 = vpack.c.b16 %v2737, %v2733
    %v2930 = vpack.c.b16 %v2738, %v2734
    %v2931 = vpack.c.b16 %v2743, %v2739
    %v2932 = vpack.c.b16 %v2744, %v2740
    %v2933 = vpack.c.b16 %v2745, %v2741
    %v2934 = vpack.c.b16 %v2746, %v2742
    %v2935 = vpack.c.b16 %v2751, %v2747
    %v2936 = vpack.c.b16 %v2752, %v2748
    %v2937 = vpack.c.b16 %v2753, %v2749
    %v2938 = vpack.c.b16 %v2754, %v2750
    %v2939 = vpack.c.b16 %v2759, %v2755
    %v2940 = vpack.c.b16 %v2760, %v2756
    %v2941 = vpack.c.b16 %v2761, %v2757
    %v2942 = vpack.c.b16 %v2762, %v2758
    %v2943 = vpack.c.b16 %v2767, %v2763
    %v2944 = vpack.c.b16 %v2768, %v2764
    %v2945 = vpack.c.b16 %v2769, %v2765
    %v2946 = vpack.c.b16 %v2770, %v2766
    %v2947 = vpack.c.b16 %v2775, %v2771
    %v2948 = vpack.c.b16 %v2776, %v2772
    %v2949 = vpack.c.b16 %v2777, %v2773
    %v2950 = vpack.c.b16 %v2778, %v2774
    %v2951 = vpack.c.b16 %v2783, %v2779
    %v2952 = vpack.c.b16 %v2784, %v2780
    %v2953 = vpack.c.b16 %v2785, %v2781
    %v2954 = vpack.c.b16 %v2786, %v2782
    %v2955 = vpack.c.b16 %v2791, %v2787
    %v2956 = vpack.c.b16 %v2792, %v2788
    %v2957 = vpack.c.b16 %v2793, %v2789
    %v2958 = vpack.c.b16 %v2794, %v2790
    %v2959 = vpack.c.b16 %v2799, %v2795
    %v2960 = vpack.c.b16 %v2800, %v2796
    %v2961 = vpack.c.b16 %v2801, %v2797
    %v2962 = vpack.c.b16 %v2802, %v2798
    %v2963 = vpack.c.b16 %v2807, %v2803
    %v2964 = vpack.c.b16 %v2808, %v2804
    %v2965 = vpack.c.b16 %v2809, %v2805
    %v2966 = vpack.c.b16 %v2810, %v2806
    %v2967 = vpack.c.b16 %v2815, %v2811
    %v2968 = vpack.c.b16 %v2816, %v2812
    %v2969 = vpack.c.b16 %v2817, %v2813
    %v2970 = vpack.c.b16 %v2818, %v2814
    %v2971 = vpack.c.b16 %v2823, %v2819
    %v2972 = vpack.c.b16 %v2824, %v2820
    %v2973 = vpack.c.b16 %v2825, %v2821
    %v2974 = vpack.c.b16 %v2826, %v2822
    %v2975 = vpack.c.b16 %v2831, %v2827
    %v2976 = vpack.c.b16 %v2832, %v2828
    %v2977 = vpack.c.b16 %v2833, %v2829
    %v2978 = vpack.c.b16 %v2834, %v2830
    %v2979 = vpack.c.b16 %v2839, %v2835
    %v2980 = vpack.c.b16 %v2840, %v2836
    %v2981 = vpack.c.b16 %v2841, %v2837
    %v2982 = vpack.c.b16 %v2842, %v2838
    %v2983 = vpack.c.b16 %v2847, %v2843
    %v2984 = vpack.c.b16 %v2848, %v2844
    %v2985 = vpack.c.b16 %v2849, %v2845
    %v2986 = vpack.c.b16 %v2850, %v2846
    %v2987 = vpack.c.b16 %v2855, %v2851
    %v2988 = vpack.c.b16 %v2856, %v2852
    %v2989 = vpack.c.b16 %v2857, %v2853
    %v2990 = vpack.c.b16 %v2858, %v2854
    %v2991 = vpack.c.b16 %v2863, %v2859
    %v2992 = vpack.c.b16 %v2864, %v2860
    %v2993 = vpack.c.b16 %v2865, %v2861
    %v2994 = vpack.c.b16 %v2866, %v2862
    %v2995 = vpack.c.b16 %v2871, %v2867
    %v2996 = vpack.c.b16 %v2872, %v2868
    %v2997 = vpack.c.b16 %v2873, %v2869
    %v2998 = vpack.c.b16 %v2874, %v2870
    %v2999 = vpack.c.b16 %v2879, %v2875
    %v3000 = vpack.c.b16 %v2880, %v2876
    %v3001 = vpack.c.b16 %v2881, %v2877
    %v3002 = vpack.c.b16 %v2882, %v2878
    %v3003 = vpack.c.b16 %v2887, %v2883
    %v3004 = vpack.c.b16 %v2888, %v2884
    %v3005 = vpack.c.b16 %v2889, %v2885
    %v3006 = vpack.c.b16 %v2890, %v2886
    %v3007 = vpack.c.b16 %v2895, %v2891
    %v3008 = vpack.c.b16 %v2896, %v2892
    %v3009 = vpack.c.b16 %v2897, %v2893
    %v3010 = vpack.c.b16 %v2898, %v2894
    %v3011 = vpack.c.b16 %v2903, %v2899
    %v3012 = vpack.c.b16 %v2904, %v2900
    %v3013 = vpack.c.b16 %v2905, %v2901
    %v3014 = vpack.c.b16 %v2906, %v2902
    %v3015 = vpack.c.b16 %v2911, %v2907
    %v3016 = vpack.c.b16 %v2912, %v2908
    %v3017 = vpack.c.b16 %v2913, %v2909
    %v3018 = vpack.c.b16 %v2914, %v2910
    %v3019 = vpack.c.b16 %v2919, %v2915
    %v3020 = vpack.c.b16 %v2920, %v2916
    %v3021 = vpack.c.b16 %v2921, %v2917
    %v3022 = vpack.c.b16 %v2922, %v2918
    %v3124 = vsel %vm1308, %v2512, 0
    %3126 = vmatpush.bf16.msra.mxu0 %v2951
    %3127 = vmatpush.bf16.msra.mxu0 %v2947
    %3128 = vmatpush.bf16.msra.mxu0 %v2943
    %3129 = vmatpush.bf16.msra.mxu0 %v2939
    %3130 = vmatpush.bf16.msra.mxu0 %v2935
    %3131 = vmatpush.bf16.msra.mxu0 %v2931
    %3132 = vmatpush.bf16.msra.mxu0 %v2927
    %3133 = vmatpush.bf16.msra.mxu0 %v2923
    %3134 = vmatmul.bf16.gmra.mxu0 %v2509
    %v3135 = vpop.f32.mrf.mxu0
    %v3136 = vadd.f32 %v2615, %v3135
    %v3137 = vpop.f32.mrf.mxu0
    %3138 = vdwg.mxu0
    %3139 = vmatpush.bf16.msra.mxu0 %v2983
    %3140 = vmatpush.bf16.msra.mxu0 %v2979
    %3141 = vmatpush.bf16.msra.mxu0 %v2975
    %3142 = vmatpush.bf16.msra.mxu0 %v2971
    %3143 = vmatpush.bf16.msra.mxu0 %v2967
    %3144 = vmatpush.bf16.msra.mxu0 %v2963
    %3145 = vmatpush.bf16.msra.mxu0 %v2959
    %3146 = vmatpush.bf16.msra.mxu0 %v2955
    %3147 = vmatmul.bf16.gmra.mxu0 %v2510
    %v3148 = vpop.f32.mrf.mxu0
    %v3149 = vadd.f32 %v3136, %v3148
    %v3150 = vpop.f32.mrf.mxu0
    %3151 = vdwg.mxu0
    %3152 = vmatpush.bf16.msra.mxu0 %v3015
    %3153 = vmatpush.bf16.msra.mxu0 %v3011
    %3154 = vmatpush.bf16.msra.mxu0 %v3007
    %3155 = vmatpush.bf16.msra.mxu0 %v3003
    %3156 = vmatpush.bf16.msra.mxu0 %v2999
    %3157 = vmatpush.bf16.msra.mxu0 %v2995
    %3158 = vmatpush.bf16.msra.mxu0 %v2991
    %3159 = vmatpush.bf16.msra.mxu0 %v2987
    %3160 = vmatmul.bf16.gmra.mxu0 %v2511
    %v3161 = vpop.f32.mrf.mxu0
    %v3162 = vadd.f32 %v3149, %v3161
    %v3163 = vpop.f32.mrf.mxu0
    %3164 = vdwg.mxu0
    %3165 = vmatpush.bf16.msra.mxu0 0
    %3166 = vmatpush.bf16.msra.mxu0 0
    %3167 = vmatpush.bf16.msra.mxu0 0
    %3168 = vmatpush.bf16.msra.mxu0 0
    %3169 = vmatpush.bf16.msra.mxu0 0
    %3170 = vmatpush.bf16.msra.mxu0 0
    %3171 = vmatpush.bf16.msra.mxu0 0
    %3172 = vmatpush.bf16.msra.mxu0 %v3019
    %3173 = vmatmul.bf16.gmra.mxu0 %v3124
    %v3174 = vpop.f32.mrf.mxu0
    %v3175 = vadd.f32 %v3162, %v3174
    %v3176 = vpop.f32.mrf.mxu0
    %3177 = vdwg.mxu0
    %3178 = vmatpush.bf16.msra.mxu0 %v2952
    %3179 = vmatpush.bf16.msra.mxu0 %v2948
    %3180 = vmatpush.bf16.msra.mxu0 %v2944
    %3181 = vmatpush.bf16.msra.mxu0 %v2940
    %3182 = vmatpush.bf16.msra.mxu0 %v2936
    %3183 = vmatpush.bf16.msra.mxu0 %v2932
    %3184 = vmatpush.bf16.msra.mxu0 %v2928
    %3185 = vmatpush.bf16.msra.mxu0 %v2924
    %3186 = vmatmul.bf16.gmra.mxu0 %v2509
    %v3187 = vpop.f32.mrf.mxu0
    %v3188 = vadd.f32 %v2616, %v3187
    %v3189 = vpop.f32.mrf.mxu0
    %3190 = vdwg.mxu0
    %3191 = vmatpush.bf16.msra.mxu0 %v2984
    %3192 = vmatpush.bf16.msra.mxu0 %v2980
    %3193 = vmatpush.bf16.msra.mxu0 %v2976
    %3194 = vmatpush.bf16.msra.mxu0 %v2972
    %3195 = vmatpush.bf16.msra.mxu0 %v2968
    %3196 = vmatpush.bf16.msra.mxu0 %v2964
    %3197 = vmatpush.bf16.msra.mxu0 %v2960
    %3198 = vmatpush.bf16.msra.mxu0 %v2956
    %3199 = vmatmul.bf16.gmra.mxu0 %v2510
    %v3200 = vpop.f32.mrf.mxu0
    %v3201 = vadd.f32 %v3188, %v3200
    %v3202 = vpop.f32.mrf.mxu0
    %3203 = vdwg.mxu0
    %3204 = vmatpush.bf16.msra.mxu0 %v3016
    %3205 = vmatpush.bf16.msra.mxu0 %v3012
    %3206 = vmatpush.bf16.msra.mxu0 %v3008
    %3207 = vmatpush.bf16.msra.mxu0 %v3004
    %3208 = vmatpush.bf16.msra.mxu0 %v3000
    %3209 = vmatpush.bf16.msra.mxu0 %v2996
    %3210 = vmatpush.bf16.msra.mxu0 %v2992
    %3211 = vmatpush.bf16.msra.mxu0 %v2988
    %3212 = vmatmul.bf16.gmra.mxu0 %v2511
    %v3213 = vpop.f32.mrf.mxu0
    %v3214 = vadd.f32 %v3201, %v3213
    %v3215 = vpop.f32.mrf.mxu0
    %3216 = vdwg.mxu0
    %3217 = vmatpush.bf16.msra.mxu0 0
    %3218 = vmatpush.bf16.msra.mxu0 0
    %3219 = vmatpush.bf16.msra.mxu0 0
    %3220 = vmatpush.bf16.msra.mxu0 0
    %3221 = vmatpush.bf16.msra.mxu0 0
    %3222 = vmatpush.bf16.msra.mxu0 0
    %3223 = vmatpush.bf16.msra.mxu0 0
    %3224 = vmatpush.bf16.msra.mxu0 %v3020
    %3225 = vmatmul.bf16.gmra.mxu0 %v3124
    %v3226 = vpop.f32.mrf.mxu0
    %v3227 = vadd.f32 %v3214, %v3226
    %v3228 = vpop.f32.mrf.mxu0
    %3229 = vdwg.mxu0
    %3230 = vmatpush.bf16.msra.mxu0 %v2953
    %3231 = vmatpush.bf16.msra.mxu0 %v2949
    %3232 = vmatpush.bf16.msra.mxu0 %v2945
    %3233 = vmatpush.bf16.msra.mxu0 %v2941
    %3234 = vmatpush.bf16.msra.mxu0 %v2937
    %3235 = vmatpush.bf16.msra.mxu0 %v2933
    %3236 = vmatpush.bf16.msra.mxu0 %v2929
    %3237 = vmatpush.bf16.msra.mxu0 %v2925
    %3238 = vmatmul.bf16.gmra.mxu0 %v2509
    %v3239 = vpop.f32.mrf.mxu0
    %v3240 = vadd.f32 %v2617, %v3239
    %v3241 = vpop.f32.mrf.mxu0
    %3242 = vdwg.mxu0
    %3243 = vmatpush.bf16.msra.mxu0 %v2985
    %3244 = vmatpush.bf16.msra.mxu0 %v2981
    %3245 = vmatpush.bf16.msra.mxu0 %v2977
    %3246 = vmatpush.bf16.msra.mxu0 %v2973
    %3247 = vmatpush.bf16.msra.mxu0 %v2969
    %3248 = vmatpush.bf16.msra.mxu0 %v2965
    %3249 = vmatpush.bf16.msra.mxu0 %v2961
    %3250 = vmatpush.bf16.msra.mxu0 %v2957
    %3251 = vmatmul.bf16.gmra.mxu0 %v2510
    %v3252 = vpop.f32.mrf.mxu0
    %v3253 = vadd.f32 %v3240, %v3252
    %v3254 = vpop.f32.mrf.mxu0
    %3255 = vdwg.mxu0
    %3256 = vmatpush.bf16.msra.mxu0 %v3017
    %3257 = vmatpush.bf16.msra.mxu0 %v3013
    %3258 = vmatpush.bf16.msra.mxu0 %v3009
    %3259 = vmatpush.bf16.msra.mxu0 %v3005
    %3260 = vmatpush.bf16.msra.mxu0 %v3001
    %3261 = vmatpush.bf16.msra.mxu0 %v2997
    %3262 = vmatpush.bf16.msra.mxu0 %v2993
    %3263 = vmatpush.bf16.msra.mxu0 %v2989
    %3264 = vmatmul.bf16.gmra.mxu0 %v2511
    %v3265 = vpop.f32.mrf.mxu0
    %v3266 = vadd.f32 %v3253, %v3265
    %v3267 = vpop.f32.mrf.mxu0
    %3268 = vdwg.mxu0
    %3269 = vmatpush.bf16.msra.mxu0 0
    %3270 = vmatpush.bf16.msra.mxu0 0
    %3271 = vmatpush.bf16.msra.mxu0 0
    %3272 = vmatpush.bf16.msra.mxu0 0
    %3273 = vmatpush.bf16.msra.mxu0 0
    %3274 = vmatpush.bf16.msra.mxu0 0
    %3275 = vmatpush.bf16.msra.mxu0 0
    %3276 = vmatpush.bf16.msra.mxu0 %v3021
    %3277 = vmatmul.bf16.gmra.mxu0 %v3124
    %v3278 = vpop.f32.mrf.mxu0
    %v3279 = vadd.f32 %v3266, %v3278
    %v3280 = vpop.f32.mrf.mxu0
    %3281 = vdwg.mxu0
    %3282 = vmatpush.bf16.msra.mxu0 %v2954
    %3283 = vmatpush.bf16.msra.mxu0 %v2950
    %3284 = vmatpush.bf16.msra.mxu0 %v2946
    %3285 = vmatpush.bf16.msra.mxu0 %v2942
    %3286 = vmatpush.bf16.msra.mxu0 %v2938
    %3287 = vmatpush.bf16.msra.mxu0 %v2934
    %3288 = vmatpush.bf16.msra.mxu0 %v2930
    %3289 = vmatpush.bf16.msra.mxu0 %v2926
    %3290 = vmatmul.bf16.gmra.mxu0 %v2509
    %v3291 = vpop.f32.mrf.mxu0
    %v3292 = vadd.f32 %v2618, %v3291
    %v3293 = vpop.f32.mrf.mxu0
    %3294 = vdwg.mxu0
    %3295 = vmatpush.bf16.msra.mxu0 %v2986
    %3296 = vmatpush.bf16.msra.mxu0 %v2982
    %3297 = vmatpush.bf16.msra.mxu0 %v2978
    %3298 = vmatpush.bf16.msra.mxu0 %v2974
    %3299 = vmatpush.bf16.msra.mxu0 %v2970
    %3300 = vmatpush.bf16.msra.mxu0 %v2966
    %3301 = vmatpush.bf16.msra.mxu0 %v2962
    %3302 = vmatpush.bf16.msra.mxu0 %v2958
    %3303 = vmatmul.bf16.gmra.mxu0 %v2510
    %v3304 = vpop.f32.mrf.mxu0
    %v3305 = vadd.f32 %v3292, %v3304
    %v3306 = vpop.f32.mrf.mxu0
    %3307 = vdwg.mxu0
    %3308 = vmatpush.bf16.msra.mxu0 %v3018
    %3309 = vmatpush.bf16.msra.mxu0 %v3014
    %3310 = vmatpush.bf16.msra.mxu0 %v3010
    %3311 = vmatpush.bf16.msra.mxu0 %v3006
    %3312 = vmatpush.bf16.msra.mxu0 %v3002
    %3313 = vmatpush.bf16.msra.mxu0 %v2998
    %3314 = vmatpush.bf16.msra.mxu0 %v2994
    %3315 = vmatpush.bf16.msra.mxu0 %v2990
    %3316 = vmatmul.bf16.gmra.mxu0 %v2511
    %v3317 = vpop.f32.mrf.mxu0
    %v3318 = vadd.f32 %v3305, %v3317
    %v3319 = vpop.f32.mrf.mxu0
    %3320 = vdwg.mxu0
    %3321 = vmatpush.bf16.msra.mxu0 0
    %3322 = vmatpush.bf16.msra.mxu0 0
    %3323 = vmatpush.bf16.msra.mxu0 0
    %3324 = vmatpush.bf16.msra.mxu0 0
    %3325 = vmatpush.bf16.msra.mxu0 0
    %3326 = vmatpush.bf16.msra.mxu0 0
    %3327 = vmatpush.bf16.msra.mxu0 0
    %3328 = vmatpush.bf16.msra.mxu0 %v3022
    %3329 = vmatmul.bf16.gmra.mxu0 %v3124
    %v3330 = vpop.f32.mrf.mxu0
    %v3331 = vadd.f32 %v3318, %v3330
    %v3332 = vpop.f32.mrf.mxu0
    %3333 = vdwg.mxu0
    %v3334 = vmax.f32 %v3175, 0.0
    %v3335 = vmax.f32 %v3227, 0.0
    %v3336 = vmax.f32 %v3279, 0.0
    %v3337 = vmax.f32 %v3331, 0.0
    %v3338 = vpack.c.bf16 %v3334, %v3334
    %v3339 = vpack.c.bf16 %v3335, %v3335
    %v3340 = vpack.c.bf16 %v3336, %v3336
    %v3341 = vpack.c.bf16 %v3337, %v3337
    %v3342 = vld [vmem:[%s8] sm:$0xf]
    %v3343 = vld [vmem:[%s8 + $0x4] sm:$0xf]
    %v3344 = vld [vmem:[%s8 + $0x8] sm:$0xf]
    %v3345 = vld [vmem:[%s8 + $0xc] sm:$0xf]
    %v3346 = vld [vmem:[%s8 + $0x10] sm:$0xf]
    %v3347 = vld [vmem:[%s8 + $0x14] sm:$0xf]
    %v3348 = vld [vmem:[%s8 + $0x18] sm:$0xf]
    %v3349 = vld [vmem:[%s8 + $0x1c] sm:$0xf]
    %v3350 = vld [vmem:[%s8 + $0x20] sm:$0xf]
    %v3351 = vld [vmem:[%s8 + $0x24] sm:$0xf]
    %v3352 = vld [vmem:[%s8 + $0x28] sm:$0xf]
    %v3353 = vld [vmem:[%s8 + $0x2c] sm:$0xf]
    %v3354 = vld [vmem:[%s8 + $0x30] sm:$0xf]
    %v3355 = vld [vmem:[%s8 + $0x34] sm:$0xf]
    %v3356 = vld [vmem:[%s8 + $0x38] sm:$0xf]
    %v3357 = vld [vmem:[%s8 + $0x3c] sm:$0xf]
    %v3358 = vld [vmem:[%s8 + $0x40] sm:$0xf]
    %v3359 = vld [vmem:[%s8 + $0x44] sm:$0xf]
    %v3360 = vld [vmem:[%s8 + $0x48] sm:$0xf]
    %v3361 = vld [vmem:[%s8 + $0x4c] sm:$0xf]
    %v3362 = vld [vmem:[%s8 + $0x50] sm:$0xf]
    %v3363 = vld [vmem:[%s8 + $0x54] sm:$0xf]
    %v3364 = vld [vmem:[%s8 + $0x58] sm:$0xf]
    %v3365 = vld [vmem:[%s8 + $0x5c] sm:$0xf]
    %v3366 = vld [vmem:[%s8 + $0x60] sm:$0xf]
    %v3367 = vld [vmem:[%s8 + $0x64] sm:$0xf]
    %v3368 = vld [vmem:[%s8 + $0x68] sm:$0xf]
    %v3369 = vld [vmem:[%s8 + $0x6c] sm:$0xf]
    %v3370 = vld [vmem:[%s8 + $0x70] sm:$0xf]
    %v3371 = vld [vmem:[%s8 + $0x74] sm:$0xf]
    %v3372 = vld [vmem:[%s8 + $0x78] sm:$0xf]
    %v3373 = vld [vmem:[%s8 + $0x7c] sm:$0xf]
    %v3374 = vld [vmem:[%s8 + $0x80] sm:$0xf]
    %v3375 = vld [vmem:[%s8 + $0x84] sm:$0xf]
    %v3376 = vld [vmem:[%s8 + $0x88] sm:$0xf]
    %v3377 = vld [vmem:[%s8 + $0x8c] sm:$0xf]
    %v3378 = vld [vmem:[%s8 + $0x90] sm:$0xf]
    %v3379 = vld [vmem:[%s8 + $0x94] sm:$0xf]
    %v3380 = vld [vmem:[%s8 + $0x98] sm:$0xf]
    %v3381 = vld [vmem:[%s8 + $0x9c] sm:$0xf]
    %v3382 = vld [vmem:[%s8 + $0xa0] sm:$0xf]
    %v3383 = vld [vmem:[%s8 + $0xa4] sm:$0xf]
    %v3384 = vld [vmem:[%s8 + $0xa8] sm:$0xf]
    %v3385 = vld [vmem:[%s8 + $0xac] sm:$0xf]
    %v3386 = vld [vmem:[%s8 + $0xb0] sm:$0xf]
    %v3387 = vld [vmem:[%s8 + $0xb4] sm:$0xf]
    %v3388 = vld [vmem:[%s8 + $0xb8] sm:$0xf]
    %v3389 = vld [vmem:[%s8 + $0xbc] sm:$0xf]
    %v3390 = vld [vmem:[%s8 + $0xc0] sm:$0xf]
    %v3391 = vld [vmem:[%s8 + $0xc4] sm:$0xf]
    %v3392 = vld [vmem:[%s9] sm:$0x1]
    %v3394 = vperm.slane %v3392, 0
    %v3446 = vunpack.c.l.b16 %v3342
    %v3447 = vunpack.c.l.b16 %v3343
    %v3448 = vunpack.c.l.b16 %v3344
    %v3449 = vunpack.c.l.b16 %v3345
    %v3450 = vunpack.c.l.b16 %v3346
    %v3451 = vunpack.c.l.b16 %v3347
    %v3452 = vunpack.c.l.b16 %v3348
    %v3453 = vunpack.c.l.b16 %v3349
    %v3454 = vunpack.c.l.b16 %v3350
    %v3455 = vunpack.c.l.b16 %v3351
    %v3456 = vunpack.c.l.b16 %v3352
    %v3457 = vunpack.c.l.b16 %v3353
    %v3458 = vunpack.c.l.b16 %v3354
    %v3459 = vunpack.c.l.b16 %v3355
    %v3460 = vunpack.c.l.b16 %v3356
    %v3461 = vunpack.c.l.b16 %v3357
    %v3462 = vunpack.c.l.b16 %v3358
    %v3463 = vunpack.c.l.b16 %v3359
    %v3464 = vunpack.c.l.b16 %v3360
    %v3465 = vunpack.c.l.b16 %v3361
    %v3466 = vunpack.c.l.b16 %v3362
    %v3467 = vunpack.c.l.b16 %v3363
    %v3468 = vunpack.c.l.b16 %v3364
    %v3469 = vunpack.c.l.b16 %v3365
    %v3470 = vunpack.c.l.b16 %v3366
    %v3471 = vunpack.c.l.b16 %v3367
    %v3472 = vunpack.c.l.b16 %v3368
    %v3473 = vunpack.c.l.b16 %v3369
    %v3474 = vunpack.c.l.b16 %v3370
    %v3475 = vunpack.c.l.b16 %v3371
    %v3476 = vunpack.c.l.b16 %v3372
    %v3477 = vunpack.c.l.b16 %v3373
    %v3478 = vunpack.c.l.b16 %v3374
    %v3479 = vunpack.c.l.b16 %v3375
    %v3480 = vunpack.c.l.b16 %v3376
    %v3481 = vunpack.c.l.b16 %v3377
    %v3482 = vunpack.c.l.b16 %v3378
    %v3483 = vunpack.c.l.b16 %v3379
    %v3484 = vunpack.c.l.b16 %v3380
    %v3485 = vunpack.c.l.b16 %v3381
    %v3486 = vunpack.c.l.b16 %v3382
    %v3487 = vunpack.c.l.b16 %v3383
    %v3488 = vunpack.c.l.b16 %v3384
    %v3489 = vunpack.c.l.b16 %v3385
    %v3490 = vunpack.c.l.b16 %v3386
    %v3491 = vunpack.c.l.b16 %v3387
    %v3492 = vunpack.c.l.b16 %v3388
    %v3493 = vunpack.c.l.b16 %v3389
    %v3494 = vunpack.c.l.b16 %v3390
    %v3495 = vunpack.c.l.b16 %v3391
    %v3496 = vpack.c.b16 %v3447, %v3446
    %v3497 = vpack.c.b16 %v3449, %v3448
    %v3498 = vpack.c.b16 %v3451, %v3450
    %v3499 = vpack.c.b16 %v3453, %v3452
    %v3500 = vpack.c.b16 %v3455, %v3454
    %v3501 = vpack.c.b16 %v3457, %v3456
    %v3502 = vpack.c.b16 %v3459, %v3458
    %v3503 = vpack.c.b16 %v3461, %v3460
    %v3504 = vpack.c.b16 %v3463, %v3462
    %v3505 = vpack.c.b16 %v3465, %v3464
    %v3506 = vpack.c.b16 %v3467, %v3466
    %v3507 = vpack.c.b16 %v3469, %v3468
    %v3508 = vpack.c.b16 %v3471, %v3470
    %v3509 = vpack.c.b16 %v3473, %v3472
    %v3510 = vpack.c.b16 %v3475, %v3474
    %v3511 = vpack.c.b16 %v3477, %v3476
    %v3512 = vpack.c.b16 %v3479, %v3478
    %v3513 = vpack.c.b16 %v3481, %v3480
    %v3514 = vpack.c.b16 %v3483, %v3482
    %v3515 = vpack.c.b16 %v3485, %v3484
    %v3516 = vpack.c.b16 %v3487, %v3486
    %v3517 = vpack.c.b16 %v3489, %v3488
    %v3518 = vpack.c.b16 %v3491, %v3490
    %v3519 = vpack.c.b16 %v3493, %v3492
    %v3520 = vpack.c.b16 %v3495, %v3494
    %v3547 = vsel %vm1308, %v3341, 0
    %3549 = vmatpush.bf16.msra.mxu0 %v3503
    %3550 = vmatpush.bf16.msra.mxu0 %v3502
    %3551 = vmatpush.bf16.msra.mxu0 %v3501
    %3552 = vmatpush.bf16.msra.mxu0 %v3500
    %3553 = vmatpush.bf16.msra.mxu0 %v3499
    %3554 = vmatpush.bf16.msra.mxu0 %v3498
    %3555 = vmatpush.bf16.msra.mxu0 %v3497
    %3556 = vmatpush.bf16.msra.mxu0 %v3496
    %3557 = vmatmul.bf16.gmra.mxu0 %v3338
    %v3558 = vpop.f32.mrf.mxu0
    %v3559 = vadd.f32 %v3394, %v3558
    %v3560 = vpop.f32.mrf.mxu0
    %3561 = vdwg.mxu0
    %3562 = vmatpush.bf16.msra.mxu0 %v3511
    %3563 = vmatpush.bf16.msra.mxu0 %v3510
    %3564 = vmatpush.bf16.msra.mxu0 %v3509
    %3565 = vmatpush.bf16.msra.mxu0 %v3508
    %3566 = vmatpush.bf16.msra.mxu0 %v3507
    %3567 = vmatpush.bf16.msra.mxu0 %v3506
    %3568 = vmatpush.bf16.msra.mxu0 %v3505
    %3569 = vmatpush.bf16.msra.mxu0 %v3504
    %3570 = vmatmul.bf16.gmra.mxu0 %v3339
    %v3571 = vpop.f32.mrf.mxu0
    %v3572 = vadd.f32 %v3559, %v3571
    %v3573 = vpop.f32.mrf.mxu0
    %3574 = vdwg.mxu0
    %3575 = vmatpush.bf16.msra.mxu0 %v3519
    %3576 = vmatpush.bf16.msra.mxu0 %v3518
    %3577 = vmatpush.bf16.msra.mxu0 %v3517
    %3578 = vmatpush.bf16.msra.mxu0 %v3516
    %3579 = vmatpush.bf16.msra.mxu0 %v3515
    %3580 = vmatpush.bf16.msra.mxu0 %v3514
    %3581 = vmatpush.bf16.msra.mxu0 %v3513
    %3582 = vmatpush.bf16.msra.mxu0 %v3512
    %3583 = vmatmul.bf16.gmra.mxu0 %v3340
    %v3584 = vpop.f32.mrf.mxu0
    %v3585 = vadd.f32 %v3572, %v3584
    %v3586 = vpop.f32.mrf.mxu0
    %3587 = vdwg.mxu0
    %3588 = vmatpush.bf16.msra.mxu0 0
    %3589 = vmatpush.bf16.msra.mxu0 0
    %3590 = vmatpush.bf16.msra.mxu0 0
    %3591 = vmatpush.bf16.msra.mxu0 0
    %3592 = vmatpush.bf16.msra.mxu0 0
    %3593 = vmatpush.bf16.msra.mxu0 0
    %3594 = vmatpush.bf16.msra.mxu0 0
    %3595 = vmatpush.bf16.msra.mxu0 %v3520
    %3596 = vmatmul.bf16.gmra.mxu0 %v3547
    %v3597 = vpop.f32.mrf.mxu0
    %v3598 = vadd.f32 %v3585, %v3597
    %v3599 = vpop.f32.mrf.mxu0
    %3600 = vdwg.mxu0
    %vm3601 = vcmask 261120
    %3602 = vst.msk [vmem:[%s19] sm:$0xff] %vm3601, %v3598
    %v3603 = vmul.f32 %v3598, 0.5
    %v3604 = vmul.f32 %v3603, 1.442695
    %v3605 = vpow.pop %v3604
    %v3606 = vld [vmem:[%s1] sm:$0xff]
    %3608 = vrot.lane.b32.xlu0 %v3606, 16
    %v3609 = vpop.permute.xlu0 %3608
    %v3611 = vmul.f32 %v3605, %v3609
    %3613 = vrot.lane.b32.xlu0 %v3598, 16
    %v3614 = vpop.permute.xlu0 %3613
    %v3616 = vadd.f32 %v3611, %v3614
    %v3617 = vpack.c.bf16 %v3616, %v3616
    %v3618 = vld [vmem:[%s10] sm:$0xff]
    %v3619 = vld [vmem:[%s10 + $0x8] sm:$0xff]
    %v3620 = vld [vmem:[%s10 + $0x10] sm:$0xff]
    %v3621 = vld [vmem:[%s10 + $0x18] sm:$0xff]
    %v3622 = vld [vmem:[%s11] sm:$0xf]
    %v3624 = vperm.slane %v3622, 0
    %v3625 = vperm.slane %v3622, 1
    %v3626 = vperm.slane %v3622, 2
    %v3627 = vperm.slane %v3622, 3
    %3633 = vrot.lane.b32.xlu0 %v3617, 112
    %v3634 = vpop.permute.xlu0 %3633
    %v3639 = vunpack.c.l.b16 %v3618
    %v3640 = vunpack.c.h.b16 %v3618
    %v3641 = vunpack.c.l.b16 %v3619
    %v3642 = vunpack.c.h.b16 %v3619
    %v3643 = vunpack.c.l.b16 %v3620
    %v3644 = vunpack.c.h.b16 %v3620
    %v3645 = vunpack.c.l.b16 %v3621
    %v3646 = vunpack.c.h.b16 %v3621
    %v3647 = vpack.c.b16 %v3643, %v3639
    %v3648 = vpack.c.b16 %v3644, %v3640
    %v3649 = vpack.c.b16 %v3645, %v3641
    %v3650 = vpack.c.b16 %v3646, %v3642
    %v3656 = vsel %vm1308, %v3634, 0
    %3658 = vmatpush.bf16.msra.mxu0 0
    %3659 = vmatpush.bf16.msra.mxu0 0
    %3660 = vmatpush.bf16.msra.mxu0 0
    %3661 = vmatpush.bf16.msra.mxu0 0
    %3662 = vmatpush.bf16.msra.mxu0 0
    %3663 = vmatpush.bf16.msra.mxu0 0
    %3664 = vmatpush.bf16.msra.mxu0 0
    %3665 = vmatpush.bf16.msra.mxu0 %v3647
    %3666 = vmatmul.bf16.gmra.mxu0 %v3656
    %v3667 = vpop.f32.mrf.mxu0
    %v3668 = vadd.f32 %v3624, %v3667
    %v3669 = vpop.f32.mrf.mxu0
    %3670 = vdwg.mxu0
    %3671 = vmatpush.bf16.msra.mxu0 0
    %3672 = vmatpush.bf16.msra.mxu0 0
    %3673 = vmatpush.bf16.msra.mxu0 0
    %3674 = vmatpush.bf16.msra.mxu0 0
    %3675 = vmatpush.bf16.msra.mxu0 0
    %3676 = vmatpush.bf16.msra.mxu0 0
    %3677 = vmatpush.bf16.msra.mxu0 0
    %3678 = vmatpush.bf16.msra.mxu0 %v3648
    %3679 = vmatmul.bf16.gmra.mxu0 %v3656
    %v3680 = vpop.f32.mrf.mxu0
    %v3681 = vadd.f32 %v3625, %v3680
    %v3682 = vpop.f32.mrf.mxu0
    %3683 = vdwg.mxu0
    %3684 = vmatpush.bf16.msra.mxu0 0
    %3685 = vmatpush.bf16.msra.mxu0 0
    %3686 = vmatpush.bf16.msra.mxu0 0
    %3687 = vmatpush.bf16.msra.mxu0 0
    %3688 = vmatpush.bf16.msra.mxu0 0
    %3689 = vmatpush.bf16.msra.mxu0 0
    %3690 = vmatpush.bf16.msra.mxu0 0
    %3691 = vmatpush.bf16.msra.mxu0 %v3649
    %3692 = vmatmul.bf16.gmra.mxu0 %v3656
    %v3693 = vpop.f32.mrf.mxu0
    %v3694 = vadd.f32 %v3626, %v3693
    %v3695 = vpop.f32.mrf.mxu0
    %3696 = vdwg.mxu0
    %3697 = vmatpush.bf16.msra.mxu0 0
    %3698 = vmatpush.bf16.msra.mxu0 0
    %3699 = vmatpush.bf16.msra.mxu0 0
    %3700 = vmatpush.bf16.msra.mxu0 0
    %3701 = vmatpush.bf16.msra.mxu0 0
    %3702 = vmatpush.bf16.msra.mxu0 0
    %3703 = vmatpush.bf16.msra.mxu0 0
    %3704 = vmatpush.bf16.msra.mxu0 %v3650
    %3705 = vmatmul.bf16.gmra.mxu0 %v3656
    %v3706 = vpop.f32.mrf.mxu0
    %v3707 = vadd.f32 %v3627, %v3706
    %v3708 = vpop.f32.mrf.mxu0
    %3709 = vdwg.mxu0
    %v3710 = vmax.f32 %v3668, 0.0
    %v3711 = vmax.f32 %v3681, 0.0
    %v3712 = vmax.f32 %v3694, 0.0
    %v3713 = vmax.f32 %v3707, 0.0
    %v3714 = vpack.c.bf16 %v3710, %v3710
    %v3715 = vpack.c.bf16 %v3711, %v3711
    %v3716 = vpack.c.bf16 %v3712, %v3712
    %v3717 = vpack.c.bf16 %v3713, %v3713
    %v3718 = vld [vmem:[#allocation2] sm:$0xff]
    %v3719 = vld [vmem:[#allocation2 + $0x8] sm:$0xff]
    %v3720 = vld [vmem:[#allocation2 + $0x10] sm:$0xff]
    %v3721 = vld [vmem:[#allocation2 + $0x18] sm:$0xff]
    %v3722 = vld [vmem:[#allocation2 + $0x20] sm:$0xff]
    %v3723 = vld [vmem:[#allocation2 + $0x28] sm:$0xff]
    %v3724 = vld [vmem:[#allocation2 + $0x30] sm:$0xff]
    %v3725 = vld [vmem:[#allocation2 + $0x38] sm:$0xff]
    %v3726 = vld [vmem:[#allocation2 + $0x40] sm:$0xff]
    %v3727 = vld [vmem:[#allocation2 + $0x48] sm:$0xff]
    %v3728 = vld [vmem:[#allocation2 + $0x50] sm:$0xff]
    %v3729 = vld [vmem:[#allocation2 + $0x58] sm:$0xff]
    %v3730 = vld [vmem:[#allocation2 + $0x60] sm:$0xff]
    %v3731 = vld [vmem:[#allocation2 + $0x68] sm:$0xff]
    %v3732 = vld [vmem:[#allocation2 + $0x70] sm:$0xff]
    %v3733 = vld [vmem:[#allocation2 + $0x78] sm:$0xff]
    %v3734 = vld [vmem:[#allocation2 + $0x80] sm:$0xff]
    %v3735 = vld [vmem:[#allocation2 + $0x88] sm:$0xff]
    %v3736 = vld [vmem:[#allocation2 + $0x90] sm:$0xff]
    %v3737 = vld [vmem:[#allocation2 + $0x98] sm:$0xff]
    %v3738 = vld [vmem:[#allocation2 + $0xa0] sm:$0xff]
    %v3739 = vld [vmem:[#allocation2 + $0xa8] sm:$0xff]
    %v3740 = vld [vmem:[#allocation2 + $0xb0] sm:$0xff]
    %v3741 = vld [vmem:[#allocation2 + $0xb8] sm:$0xff]
    %v3742 = vld [vmem:[#allocation2 + $0xc0] sm:$0xff]
    %v3743 = vld [vmem:[#allocation2 + $0xc8] sm:$0xff]
    %v3744 = vld [vmem:[#allocation2 + $0xd0] sm:$0xff]
    %v3745 = vld [vmem:[#allocation2 + $0xd8] sm:$0xff]
    %v3746 = vld [vmem:[#allocation2 + $0xe0] sm:$0xff]
    %v3747 = vld [vmem:[#allocation2 + $0xe8] sm:$0xff]
    %v3748 = vld [vmem:[#allocation2 + $0xf0] sm:$0xff]
    %v3749 = vld [vmem:[#allocation2 + $0xf8] sm:$0xff]
    %v3750 = vld [vmem:[#allocation2 + $0x100] sm:$0xff]
    %v3751 = vld [vmem:[#allocation2 + $0x108] sm:$0xff]
    %v3752 = vld [vmem:[#allocation2 + $0x110] sm:$0xff]
    %v3753 = vld [vmem:[#allocation2 + $0x118] sm:$0xff]
    %v3754 = vld [vmem:[#allocation2 + $0x120] sm:$0xff]
    %v3755 = vld [vmem:[#allocation2 + $0x128] sm:$0xff]
    %v3756 = vld [vmem:[#allocation2 + $0x130] sm:$0xff]
    %v3757 = vld [vmem:[#allocation2 + $0x138] sm:$0xff]
    %v3758 = vld [vmem:[#allocation2 + $0x140] sm:$0xff]
    %v3759 = vld [vmem:[#allocation2 + $0x148] sm:$0xff]
    %v3760 = vld [vmem:[#allocation2 + $0x150] sm:$0xff]
    %v3761 = vld [vmem:[#allocation2 + $0x158] sm:$0xff]
    %v3762 = vld [vmem:[#allocation2 + $0x160] sm:$0xff]
    %v3763 = vld [vmem:[#allocation2 + $0x168] sm:$0xff]
    %v3764 = vld [vmem:[#allocation2 + $0x170] sm:$0xff]
    %v3765 = vld [vmem:[#allocation2 + $0x178] sm:$0xff]
    %v3766 = vld [vmem:[#allocation2 + $0x180] sm:$0xff]
    %v3767 = vld [vmem:[#allocation2 + $0x188] sm:$0xff]
    %v3768 = vld [vmem:[#allocation2 + $0x190] sm:$0xff]
    %v3769 = vld [vmem:[#allocation2 + $0x198] sm:$0xff]
    %v3770 = vld [vmem:[#allocation2 + $0x1a0] sm:$0xff]
    %v3771 = vld [vmem:[#allocation2 + $0x1a8] sm:$0xff]
    %v3772 = vld [vmem:[#allocation2 + $0x1b0] sm:$0xff]
    %v3773 = vld [vmem:[#allocation2 + $0x1b8] sm:$0xff]
    %v3774 = vld [vmem:[#allocation2 + $0x1c0] sm:$0xff]
    %v3775 = vld [vmem:[#allocation2 + $0x1c8] sm:$0xff]
    %v3776 = vld [vmem:[#allocation2 + $0x1d0] sm:$0xff]
    %v3777 = vld [vmem:[#allocation2 + $0x1d8] sm:$0xff]
    %v3778 = vld [vmem:[#allocation2 + $0x1e0] sm:$0xff]
    %v3779 = vld [vmem:[#allocation2 + $0x1e8] sm:$0xff]
    %v3780 = vld [vmem:[#allocation2 + $0x1f0] sm:$0xff]
    %v3781 = vld [vmem:[#allocation2 + $0x1f8] sm:$0xff]
    %v3782 = vld [vmem:[#allocation2 + $0x200] sm:$0xff]
    %v3783 = vld [vmem:[#allocation2 + $0x208] sm:$0xff]
    %v3784 = vld [vmem:[#allocation2 + $0x210] sm:$0xff]
    %v3785 = vld [vmem:[#allocation2 + $0x218] sm:$0xff]
    %v3786 = vld [vmem:[#allocation2 + $0x220] sm:$0xff]
    %v3787 = vld [vmem:[#allocation2 + $0x228] sm:$0xff]
    %v3788 = vld [vmem:[#allocation2 + $0x230] sm:$0xff]
    %v3789 = vld [vmem:[#allocation2 + $0x238] sm:$0xff]
    %v3790 = vld [vmem:[#allocation2 + $0x240] sm:$0xff]
    %v3791 = vld [vmem:[#allocation2 + $0x248] sm:$0xff]
    %v3792 = vld [vmem:[#allocation2 + $0x250] sm:$0xff]
    %v3793 = vld [vmem:[#allocation2 + $0x258] sm:$0xff]
    %v3794 = vld [vmem:[#allocation2 + $0x260] sm:$0xff]
    %v3795 = vld [vmem:[#allocation2 + $0x268] sm:$0xff]
    %v3796 = vld [vmem:[#allocation2 + $0x270] sm:$0xff]
    %v3797 = vld [vmem:[#allocation2 + $0x278] sm:$0xff]
    %v3798 = vld [vmem:[#allocation2 + $0x280] sm:$0xff]
    %v3799 = vld [vmem:[#allocation2 + $0x288] sm:$0xff]
    %v3800 = vld [vmem:[#allocation2 + $0x290] sm:$0xff]
    %v3801 = vld [vmem:[#allocation2 + $0x298] sm:$0xff]
    %v3802 = vld [vmem:[#allocation2 + $0x2a0] sm:$0xff]
    %v3803 = vld [vmem:[#allocation2 + $0x2a8] sm:$0xff]
    %v3804 = vld [vmem:[#allocation2 + $0x2b0] sm:$0xff]
    %v3805 = vld [vmem:[#allocation2 + $0x2b8] sm:$0xff]
    %v3806 = vld [vmem:[#allocation2 + $0x2c0] sm:$0xff]
    %v3807 = vld [vmem:[#allocation2 + $0x2c8] sm:$0xff]
    %v3808 = vld [vmem:[#allocation2 + $0x2d0] sm:$0xff]
    %v3809 = vld [vmem:[#allocation2 + $0x2d8] sm:$0xff]
    %v3810 = vld [vmem:[#allocation2 + $0x2e0] sm:$0xff]
    %v3811 = vld [vmem:[#allocation2 + $0x2e8] sm:$0xff]
    %v3812 = vld [vmem:[#allocation2 + $0x2f0] sm:$0xff]
    %v3813 = vld [vmem:[#allocation2 + $0x2f8] sm:$0xff]
    %v3814 = vld [vmem:[#allocation2 + $0x300] sm:$0xff]
    %v3815 = vld [vmem:[#allocation2 + $0x308] sm:$0xff]
    %v3816 = vld [vmem:[#allocation2 + $0x310] sm:$0xff]
    %v3817 = vld [vmem:[#allocation2 + $0x318] sm:$0xff]
    %v3818 = vld [vmem:[%s13] sm:$0xf]
    %v3820 = vperm.slane %v3818, 0
    %v3821 = vperm.slane %v3818, 1
    %v3822 = vperm.slane %v3818, 2
    %v3823 = vperm.slane %v3818, 3
    %v3928 = vunpack.c.l.b16 %v3718
    %v3929 = vunpack.c.h.b16 %v3718
    %v3930 = vunpack.c.l.b16 %v3719
    %v3931 = vunpack.c.h.b16 %v3719
    %v3932 = vunpack.c.l.b16 %v3720
    %v3933 = vunpack.c.h.b16 %v3720
    %v3934 = vunpack.c.l.b16 %v3721
    %v3935 = vunpack.c.h.b16 %v3721
    %v3936 = vunpack.c.l.b16 %v3722
    %v3937 = vunpack.c.h.b16 %v3722
    %v3938 = vunpack.c.l.b16 %v3723
    %v3939 = vunpack.c.h.b16 %v3723
    %v3940 = vunpack.c.l.b16 %v3724
    %v3941 = vunpack.c.h.b16 %v3724
    %v3942 = vunpack.c.l.b16 %v3725
    %v3943 = vunpack.c.h.b16 %v3725
    %v3944 = vunpack.c.l.b16 %v3726
    %v3945 = vunpack.c.h.b16 %v3726
    %v3946 = vunpack.c.l.b16 %v3727
    %v3947 = vunpack.c.h.b16 %v3727
    %v3948 = vunpack.c.l.b16 %v3728
    %v3949 = vunpack.c.h.b16 %v3728
    %v3950 = vunpack.c.l.b16 %v3729
    %v3951 = vunpack.c.h.b16 %v3729
    %v3952 = vunpack.c.l.b16 %v3730
    %v3953 = vunpack.c.h.b16 %v3730
    %v3954 = vunpack.c.l.b16 %v3731
    %v3955 = vunpack.c.h.b16 %v3731
    %v3956 = vunpack.c.l.b16 %v3732
    %v3957 = vunpack.c.h.b16 %v3732
    %v3958 = vunpack.c.l.b16 %v3733
    %v3959 = vunpack.c.h.b16 %v3733
    %v3960 = vunpack.c.l.b16 %v3734
    %v3961 = vunpack.c.h.b16 %v3734
    %v3962 = vunpack.c.l.b16 %v3735
    %v3963 = vunpack.c.h.b16 %v3735
    %v3964 = vunpack.c.l.b16 %v3736
    %v3965 = vunpack.c.h.b16 %v3736
    %v3966 = vunpack.c.l.b16 %v3737
    %v3967 = vunpack.c.h.b16 %v3737
    %v3968 = vunpack.c.l.b16 %v3738
    %v3969 = vunpack.c.h.b16 %v3738
    %v3970 = vunpack.c.l.b16 %v3739
    %v3971 = vunpack.c.h.b16 %v3739
    %v3972 = vunpack.c.l.b16 %v3740
    %v3973 = vunpack.c.h.b16 %v3740
    %v3974 = vunpack.c.l.b16 %v3741
    %v3975 = vunpack.c.h.b16 %v3741
    %v3976 = vunpack.c.l.b16 %v3742
    %v3977 = vunpack.c.h.b16 %v3742
    %v3978 = vunpack.c.l.b16 %v3743
    %v3979 = vunpack.c.h.b16 %v3743
    %v3980 = vunpack.c.l.b16 %v3744
    %v3981 = vunpack.c.h.b16 %v3744
    %v3982 = vunpack.c.l.b16 %v3745
    %v3983 = vunpack.c.h.b16 %v3745
    %v3984 = vunpack.c.l.b16 %v3746
    %v3985 = vunpack.c.h.b16 %v3746
    %v3986 = vunpack.c.l.b16 %v3747
    %v3987 = vunpack.c.h.b16 %v3747
    %v3988 = vunpack.c.l.b16 %v3748
    %v3989 = vunpack.c.h.b16 %v3748
    %v3990 = vunpack.c.l.b16 %v3749
    %v3991 = vunpack.c.h.b16 %v3749
    %v3992 = vunpack.c.l.b16 %v3750
    %v3993 = vunpack.c.h.b16 %v3750
    %v3994 = vunpack.c.l.b16 %v3751
    %v3995 = vunpack.c.h.b16 %v3751
    %v3996 = vunpack.c.l.b16 %v3752
    %v3997 = vunpack.c.h.b16 %v3752
    %v3998 = vunpack.c.l.b16 %v3753
    %v3999 = vunpack.c.h.b16 %v3753
    %v4000 = vunpack.c.l.b16 %v3754
    %v4001 = vunpack.c.h.b16 %v3754
    %v4002 = vunpack.c.l.b16 %v3755
    %v4003 = vunpack.c.h.b16 %v3755
    %v4004 = vunpack.c.l.b16 %v3756
    %v4005 = vunpack.c.h.b16 %v3756
    %v4006 = vunpack.c.l.b16 %v3757
    %v4007 = vunpack.c.h.b16 %v3757
    %v4008 = vunpack.c.l.b16 %v3758
    %v4009 = vunpack.c.h.b16 %v3758
    %v4010 = vunpack.c.l.b16 %v3759
    %v4011 = vunpack.c.h.b16 %v3759
    %v4012 = vunpack.c.l.b16 %v3760
    %v4013 = vunpack.c.h.b16 %v3760
    %v4014 = vunpack.c.l.b16 %v3761
    %v4015 = vunpack.c.h.b16 %v3761
    %v4016 = vunpack.c.l.b16 %v3762
    %v4017 = vunpack.c.h.b16 %v3762
    %v4018 = vunpack.c.l.b16 %v3763
    %v4019 = vunpack.c.h.b16 %v3763
    %v4020 = vunpack.c.l.b16 %v3764
    %v4021 = vunpack.c.h.b16 %v3764
    %v4022 = vunpack.c.l.b16 %v3765
    %v4023 = vunpack.c.h.b16 %v3765
    %v4024 = vunpack.c.l.b16 %v3766
    %v4025 = vunpack.c.h.b16 %v3766
    %v4026 = vunpack.c.l.b16 %v3767
    %v4027 = vunpack.c.h.b16 %v3767
    %v4028 = vunpack.c.l.b16 %v3768
    %v4029 = vunpack.c.h.b16 %v3768
    %v4030 = vunpack.c.l.b16 %v3769
    %v4031 = vunpack.c.h.b16 %v3769
    %v4032 = vunpack.c.l.b16 %v3770
    %v4033 = vunpack.c.h.b16 %v3770
    %v4034 = vunpack.c.l.b16 %v3771
    %v4035 = vunpack.c.h.b16 %v3771
    %v4036 = vunpack.c.l.b16 %v3772
    %v4037 = vunpack.c.h.b16 %v3772
    %v4038 = vunpack.c.l.b16 %v3773
    %v4039 = vunpack.c.h.b16 %v3773
    %v4040 = vunpack.c.l.b16 %v3774
    %v4041 = vunpack.c.h.b16 %v3774
    %v4042 = vunpack.c.l.b16 %v3775
    %v4043 = vunpack.c.h.b16 %v3775
    %v4044 = vunpack.c.l.b16 %v3776
    %v4045 = vunpack.c.h.b16 %v3776
    %v4046 = vunpack.c.l.b16 %v3777
    %v4047 = vunpack.c.h.b16 %v3777
    %v4048 = vunpack.c.l.b16 %v3778
    %v4049 = vunpack.c.h.b16 %v3778
    %v4050 = vunpack.c.l.b16 %v3779
    %v4051 = vunpack.c.h.b16 %v3779
    %v4052 = vunpack.c.l.b16 %v3780
    %v4053 = vunpack.c.h.b16 %v3780
    %v4054 = vunpack.c.l.b16 %v3781
    %v4055 = vunpack.c.h.b16 %v3781
    %v4056 = vunpack.c.l.b16 %v3782
    %v4057 = vunpack.c.h.b16 %v3782
    %v4058 = vunpack.c.l.b16 %v3783
    %v4059 = vunpack.c.h.b16 %v3783
    %v4060 = vunpack.c.l.b16 %v3784
    %v4061 = vunpack.c.h.b16 %v3784
    %v4062 = vunpack.c.l.b16 %v3785
    %v4063 = vunpack.c.h.b16 %v3785
    %v4064 = vunpack.c.l.b16 %v3786
    %v4065 = vunpack.c.h.b16 %v3786
    %v4066 = vunpack.c.l.b16 %v3787
    %v4067 = vunpack.c.h.b16 %v3787
    %v4068 = vunpack.c.l.b16 %v3788
    %v4069 = vunpack.c.h.b16 %v3788
    %v4070 = vunpack.c.l.b16 %v3789
    %v4071 = vunpack.c.h.b16 %v3789
    %v4072 = vunpack.c.l.b16 %v3790
    %v4073 = vunpack.c.h.b16 %v3790
    %v4074 = vunpack.c.l.b16 %v3791
    %v4075 = vunpack.c.h.b16 %v3791
    %v4076 = vunpack.c.l.b16 %v3792
    %v4077 = vunpack.c.h.b16 %v3792
    %v4078 = vunpack.c.l.b16 %v3793
    %v4079 = vunpack.c.h.b16 %v3793
    %v4080 = vunpack.c.l.b16 %v3794
    %v4081 = vunpack.c.h.b16 %v3794
    %v4082 = vunpack.c.l.b16 %v3795
    %v4083 = vunpack.c.h.b16 %v3795
    %v4084 = vunpack.c.l.b16 %v3796
    %v4085 = vunpack.c.h.b16 %v3796
    %v4086 = vunpack.c.l.b16 %v3797
    %v4087 = vunpack.c.h.b16 %v3797
    %v4088 = vunpack.c.l.b16 %v3798
    %v4089 = vunpack.c.h.b16 %v3798
    %v4090 = vunpack.c.l.b16 %v3799
    %v4091 = vunpack.c.h.b16 %v3799
    %v4092 = vunpack.c.l.b16 %v3800
    %v4093 = vunpack.c.h.b16 %v3800
    %v4094 = vunpack.c.l.b16 %v3801
    %v4095 = vunpack.c.h.b16 %v3801
    %v4096 = vunpack.c.l.b16 %v3802
    %v4097 = vunpack.c.h.b16 %v3802
    %v4098 = vunpack.c.l.b16 %v3803
    %v4099 = vunpack.c.h.b16 %v3803
    %v4100 = vunpack.c.l.b16 %v3804
    %v4101 = vunpack.c.h.b16 %v3804
    %v4102 = vunpack.c.l.b16 %v3805
    %v4103 = vunpack.c.h.b16 %v3805
    %v4104 = vunpack.c.l.b16 %v3806
    %v4105 = vunpack.c.h.b16 %v3806
    %v4106 = vunpack.c.l.b16 %v3807
    %v4107 = vunpack.c.h.b16 %v3807
    %v4108 = vunpack.c.l.b16 %v3808
    %v4109 = vunpack.c.h.b16 %v3808
    %v4110 = vunpack.c.l.b16 %v3809
    %v4111 = vunpack.c.h.b16 %v3809
    %v4112 = vunpack.c.l.b16 %v3810
    %v4113 = vunpack.c.h.b16 %v3810
    %v4114 = vunpack.c.l.b16 %v3811
    %v4115 = vunpack.c.h.b16 %v3811
    %v4116 = vunpack.c.l.b16 %v3812
    %v4117 = vunpack.c.h.b16 %v3812
    %v4118 = vunpack.c.l.b16 %v3813
    %v4119 = vunpack.c.h.b16 %v3813
    %v4120 = vunpack.c.l.b16 %v3814
    %v4121 = vunpack.c.h.b16 %v3814
    %v4122 = vunpack.c.l.b16 %v3815
    %v4123 = vunpack.c.h.b16 %v3815
    %v4124 = vunpack.c.l.b16 %v3816
    %v4125 = vunpack.c.h.b16 %v3816
    %v4126 = vunpack.c.l.b16 %v3817
    %v4127 = vunpack.c.h.b16 %v3817
    %v4128 = vpack.c.b16 %v3932, %v3928
    %v4129 = vpack.c.b16 %v3933, %v3929
    %v4130 = vpack.c.b16 %v3934, %v3930
    %v4131 = vpack.c.b16 %v3935, %v3931
    %v4132 = vpack.c.b16 %v3940, %v3936
    %v4133 = vpack.c.b16 %v3941, %v3937
    %v4134 = vpack.c.b16 %v3942, %v3938
    %v4135 = vpack.c.b16 %v3943, %v3939
    %v4136 = vpack.c.b16 %v3948, %v3944
    %v4137 = vpack.c.b16 %v3949, %v3945
    %v4138 = vpack.c.b16 %v3950, %v3946
    %v4139 = vpack.c.b16 %v3951, %v3947
    %v4140 = vpack.c.b16 %v3956, %v3952
    %v4141 = vpack.c.b16 %v3957, %v3953
    %v4142 = vpack.c.b16 %v3958, %v3954
    %v4143 = vpack.c.b16 %v3959, %v3955
    %v4144 = vpack.c.b16 %v3964, %v3960
    %v4145 = vpack.c.b16 %v3965, %v3961
    %v4146 = vpack.c.b16 %v3966, %v3962
    %v4147 = vpack.c.b16 %v3967, %v3963
    %v4148 = vpack.c.b16 %v3972, %v3968
    %v4149 = vpack.c.b16 %v3973, %v3969
    %v4150 = vpack.c.b16 %v3974, %v3970
    %v4151 = vpack.c.b16 %v3975, %v3971
    %v4152 = vpack.c.b16 %v3980, %v3976
    %v4153 = vpack.c.b16 %v3981, %v3977
    %v4154 = vpack.c.b16 %v3982, %v3978
    %v4155 = vpack.c.b16 %v3983, %v3979
    %v4156 = vpack.c.b16 %v3988, %v3984
    %v4157 = vpack.c.b16 %v3989, %v3985
    %v4158 = vpack.c.b16 %v3990, %v3986
    %v4159 = vpack.c.b16 %v3991, %v3987
    %v4160 = vpack.c.b16 %v3996, %v3992
    %v4161 = vpack.c.b16 %v3997, %v3993
    %v4162 = vpack.c.b16 %v3998, %v3994
    %v4163 = vpack.c.b16 %v3999, %v3995
    %v4164 = vpack.c.b16 %v4004, %v4000
    %v4165 = vpack.c.b16 %v4005, %v4001
    %v4166 = vpack.c.b16 %v4006, %v4002
    %v4167 = vpack.c.b16 %v4007, %v4003
    %v4168 = vpack.c.b16 %v4012, %v4008
    %v4169 = vpack.c.b16 %v4013, %v4009
    %v4170 = vpack.c.b16 %v4014, %v4010
    %v4171 = vpack.c.b16 %v4015, %v4011
    %v4172 = vpack.c.b16 %v4020, %v4016
    %v4173 = vpack.c.b16 %v4021, %v4017
    %v4174 = vpack.c.b16 %v4022, %v4018
    %v4175 = vpack.c.b16 %v4023, %v4019
    %v4176 = vpack.c.b16 %v4028, %v4024
    %v4177 = vpack.c.b16 %v4029, %v4025
    %v4178 = vpack.c.b16 %v4030, %v4026
    %v4179 = vpack.c.b16 %v4031, %v4027
    %v4180 = vpack.c.b16 %v4036, %v4032
    %v4181 = vpack.c.b16 %v4037, %v4033
    %v4182 = vpack.c.b16 %v4038, %v4034
    %v4183 = vpack.c.b16 %v4039, %v4035
    %v4184 = vpack.c.b16 %v4044, %v4040
    %v4185 = vpack.c.b16 %v4045, %v4041
    %v4186 = vpack.c.b16 %v4046, %v4042
    %v4187 = vpack.c.b16 %v4047, %v4043
    %v4188 = vpack.c.b16 %v4052, %v4048
    %v4189 = vpack.c.b16 %v4053, %v4049
    %v4190 = vpack.c.b16 %v4054, %v4050
    %v4191 = vpack.c.b16 %v4055, %v4051
    %v4192 = vpack.c.b16 %v4060, %v4056
    %v4193 = vpack.c.b16 %v4061, %v4057
    %v4194 = vpack.c.b16 %v4062, %v4058
    %v4195 = vpack.c.b16 %v4063, %v4059
    %v4196 = vpack.c.b16 %v4068, %v4064
    %v4197 = vpack.c.b16 %v4069, %v4065
    %v4198 = vpack.c.b16 %v4070, %v4066
    %v4199 = vpack.c.b16 %v4071, %v4067
    %v4200 = vpack.c.b16 %v4076, %v4072
    %v4201 = vpack.c.b16 %v4077, %v4073
    %v4202 = vpack.c.b16 %v4078, %v4074
    %v4203 = vpack.c.b16 %v4079, %v4075
    %v4204 = vpack.c.b16 %v4084, %v4080
    %v4205 = vpack.c.b16 %v4085, %v4081
    %v4206 = vpack.c.b16 %v4086, %v4082
    %v4207 = vpack.c.b16 %v4087, %v4083
    %v4208 = vpack.c.b16 %v4092, %v4088
    %v4209 = vpack.c.b16 %v4093, %v4089
    %v4210 = vpack.c.b16 %v4094, %v4090
    %v4211 = vpack.c.b16 %v4095, %v4091
    %v4212 = vpack.c.b16 %v4100, %v4096
    %v4213 = vpack.c.b16 %v4101, %v4097
    %v4214 = vpack.c.b16 %v4102, %v4098
    %v4215 = vpack.c.b16 %v4103, %v4099
    %v4216 = vpack.c.b16 %v4108, %v4104
    %v4217 = vpack.c.b16 %v4109, %v4105
    %v4218 = vpack.c.b16 %v4110, %v4106
    %v4219 = vpack.c.b16 %v4111, %v4107
    %v4220 = vpack.c.b16 %v4116, %v4112
    %v4221 = vpack.c.b16 %v4117, %v4113
    %v4222 = vpack.c.b16 %v4118, %v4114
    %v4223 = vpack.c.b16 %v4119, %v4115
    %v4224 = vpack.c.b16 %v4124, %v4120
    %v4225 = vpack.c.b16 %v4125, %v4121
    %v4226 = vpack.c.b16 %v4126, %v4122
    %v4227 = vpack.c.b16 %v4127, %v4123
    %v4329 = vsel %vm1308, %v3717, 0
    %4331 = vmatpush.bf16.msra.mxu0 %v4156
    %4332 = vmatpush.bf16.msra.mxu0 %v4152
    %4333 = vmatpush.bf16.msra.mxu0 %v4148
    %4334 = vmatpush.bf16.msra.mxu0 %v4144
    %4335 = vmatpush.bf16.msra.mxu0 %v4140
    %4336 = vmatpush.bf16.msra.mxu0 %v4136
    %4337 = vmatpush.bf16.msra.mxu0 %v4132
    %4338 = vmatpush.bf16.msra.mxu0 %v4128
    %4339 = vmatmul.bf16.gmra.mxu0 %v3714
    %v4340 = vpop.f32.mrf.mxu0
    %v4341 = vadd.f32 %v3820, %v4340
    %v4342 = vpop.f32.mrf.mxu0
    %4343 = vdwg.mxu0
    %4344 = vmatpush.bf16.msra.mxu0 %v4188
    %4345 = vmatpush.bf16.msra.mxu0 %v4184
    %4346 = vmatpush.bf16.msra.mxu0 %v4180
    %4347 = vmatpush.bf16.msra.mxu0 %v4176
    %4348 = vmatpush.bf16.msra.mxu0 %v4172
    %4349 = vmatpush.bf16.msra.mxu0 %v4168
    %4350 = vmatpush.bf16.msra.mxu0 %v4164
    %4351 = vmatpush.bf16.msra.mxu0 %v4160
    %4352 = vmatmul.bf16.gmra.mxu0 %v3715
    %v4353 = vpop.f32.mrf.mxu0
    %v4354 = vadd.f32 %v4341, %v4353
    %v4355 = vpop.f32.mrf.mxu0
    %4356 = vdwg.mxu0
    %4357 = vmatpush.bf16.msra.mxu0 %v4220
    %4358 = vmatpush.bf16.msra.mxu0 %v4216
    %4359 = vmatpush.bf16.msra.mxu0 %v4212
    %4360 = vmatpush.bf16.msra.mxu0 %v4208
    %4361 = vmatpush.bf16.msra.mxu0 %v4204
    %4362 = vmatpush.bf16.msra.mxu0 %v4200
    %4363 = vmatpush.bf16.msra.mxu0 %v4196
    %4364 = vmatpush.bf16.msra.mxu0 %v4192
    %4365 = vmatmul.bf16.gmra.mxu0 %v3716
    %v4366 = vpop.f32.mrf.mxu0
    %v4367 = vadd.f32 %v4354, %v4366
    %v4368 = vpop.f32.mrf.mxu0
    %4369 = vdwg.mxu0
    %4370 = vmatpush.bf16.msra.mxu0 0
    %4371 = vmatpush.bf16.msra.mxu0 0
    %4372 = vmatpush.bf16.msra.mxu0 0
    %4373 = vmatpush.bf16.msra.mxu0 0
    %4374 = vmatpush.bf16.msra.mxu0 0
    %4375 = vmatpush.bf16.msra.mxu0 0
    %4376 = vmatpush.bf16.msra.mxu0 0
    %4377 = vmatpush.bf16.msra.mxu0 %v4224
    %4378 = vmatmul.bf16.gmra.mxu0 %v4329
    %v4379 = vpop.f32.mrf.mxu0
    %v4380 = vadd.f32 %v4367, %v4379
    %v4381 = vpop.f32.mrf.mxu0
    %4382 = vdwg.mxu0
    %4383 = vmatpush.bf16.msra.mxu0 %v4157
    %4384 = vmatpush.bf16.msra.mxu0 %v4153
    %4385 = vmatpush.bf16.msra.mxu0 %v4149
    %4386 = vmatpush.bf16.msra.mxu0 %v4145
    %4387 = vmatpush.bf16.msra.mxu0 %v4141
    %4388 = vmatpush.bf16.msra.mxu0 %v4137
    %4389 = vmatpush.bf16.msra.mxu0 %v4133
    %4390 = vmatpush.bf16.msra.mxu0 %v4129
    %4391 = vmatmul.bf16.gmra.mxu0 %v3714
    %v4392 = vpop.f32.mrf.mxu0
    %v4393 = vadd.f32 %v3821, %v4392
    %v4394 = vpop.f32.mrf.mxu0
    %4395 = vdwg.mxu0
    %4396 = vmatpush.bf16.msra.mxu0 %v4189
    %4397 = vmatpush.bf16.msra.mxu0 %v4185
    %4398 = vmatpush.bf16.msra.mxu0 %v4181
    %4399 = vmatpush.bf16.msra.mxu0 %v4177
    %4400 = vmatpush.bf16.msra.mxu0 %v4173
    %4401 = vmatpush.bf16.msra.mxu0 %v4169
    %4402 = vmatpush.bf16.msra.mxu0 %v4165
    %4403 = vmatpush.bf16.msra.mxu0 %v4161
    %4404 = vmatmul.bf16.gmra.mxu0 %v3715
    %v4405 = vpop.f32.mrf.mxu0
    %v4406 = vadd.f32 %v4393, %v4405
    %v4407 = vpop.f32.mrf.mxu0
    %4408 = vdwg.mxu0
    %4409 = vmatpush.bf16.msra.mxu0 %v4221
    %4410 = vmatpush.bf16.msra.mxu0 %v4217
    %4411 = vmatpush.bf16.msra.mxu0 %v4213
    %4412 = vmatpush.bf16.msra.mxu0 %v4209
    %4413 = vmatpush.bf16.msra.mxu0 %v4205
    %4414 = vmatpush.bf16.msra.mxu0 %v4201
    %4415 = vmatpush.bf16.msra.mxu0 %v4197
    %4416 = vmatpush.bf16.msra.mxu0 %v4193
    %4417 = vmatmul.bf16.gmra.mxu0 %v3716
    %v4418 = vpop.f32.mrf.mxu0
    %v4419 = vadd.f32 %v4406, %v4418
    %v4420 = vpop.f32.mrf.mxu0
    %4421 = vdwg.mxu0
    %4422 = vmatpush.bf16.msra.mxu0 0
    %4423 = vmatpush.bf16.msra.mxu0 0
    %4424 = vmatpush.bf16.msra.mxu0 0
    %4425 = vmatpush.bf16.msra.mxu0 0
    %4426 = vmatpush.bf16.msra.mxu0 0
    %4427 = vmatpush.bf16.msra.mxu0 0
    %4428 = vmatpush.bf16.msra.mxu0 0
    %4429 = vmatpush.bf16.msra.mxu0 %v4225
    %4430 = vmatmul.bf16.gmra.mxu0 %v4329
    %v4431 = vpop.f32.mrf.mxu0
    %v4432 = vadd.f32 %v4419, %v4431
    %v4433 = vpop.f32.mrf.mxu0
    %4434 = vdwg.mxu0
    %4435 = vmatpush.bf16.msra.mxu0 %v4158
    %4436 = vmatpush.bf16.msra.mxu0 %v4154
    %4437 = vmatpush.bf16.msra.mxu0 %v4150
    %4438 = vmatpush.bf16.msra.mxu0 %v4146
    %4439 = vmatpush.bf16.msra.mxu0 %v4142
    %4440 = vmatpush.bf16.msra.mxu0 %v4138
    %4441 = vmatpush.bf16.msra.mxu0 %v4134
    %4442 = vmatpush.bf16.msra.mxu0 %v4130
    %4443 = vmatmul.bf16.gmra.mxu0 %v3714
    %v4444 = vpop.f32.mrf.mxu0
    %v4445 = vadd.f32 %v3822, %v4444
    %v4446 = vpop.f32.mrf.mxu0
    %4447 = vdwg.mxu0
    %4448 = vmatpush.bf16.msra.mxu0 %v4190
    %4449 = vmatpush.bf16.msra.mxu0 %v4186
    %4450 = vmatpush.bf16.msra.mxu0 %v4182
    %4451 = vmatpush.bf16.msra.mxu0 %v4178
    %4452 = vmatpush.bf16.msra.mxu0 %v4174
    %4453 = vmatpush.bf16.msra.mxu0 %v4170
    %4454 = vmatpush.bf16.msra.mxu0 %v4166
    %4455 = vmatpush.bf16.msra.mxu0 %v4162
    %4456 = vmatmul.bf16.gmra.mxu0 %v3715
    %v4457 = vpop.f32.mrf.mxu0
    %v4458 = vadd.f32 %v4445, %v4457
    %v4459 = vpop.f32.mrf.mxu0
    %4460 = vdwg.mxu0
    %4461 = vmatpush.bf16.msra.mxu0 %v4222
    %4462 = vmatpush.bf16.msra.mxu0 %v4218
    %4463 = vmatpush.bf16.msra.mxu0 %v4214
    %4464 = vmatpush.bf16.msra.mxu0 %v4210
    %4465 = vmatpush.bf16.msra.mxu0 %v4206
    %4466 = vmatpush.bf16.msra.mxu0 %v4202
    %4467 = vmatpush.bf16.msra.mxu0 %v4198
    %4468 = vmatpush.bf16.msra.mxu0 %v4194
    %4469 = vmatmul.bf16.gmra.mxu0 %v3716
    %v4470 = vpop.f32.mrf.mxu0
    %v4471 = vadd.f32 %v4458, %v4470
    %v4472 = vpop.f32.mrf.mxu0
    %4473 = vdwg.mxu0
    %4474 = vmatpush.bf16.msra.mxu0 0
    %4475 = vmatpush.bf16.msra.mxu0 0
    %4476 = vmatpush.bf16.msra.mxu0 0
    %4477 = vmatpush.bf16.msra.mxu0 0
    %4478 = vmatpush.bf16.msra.mxu0 0
    %4479 = vmatpush.bf16.msra.mxu0 0
    %4480 = vmatpush.bf16.msra.mxu0 0
    %4481 = vmatpush.bf16.msra.mxu0 %v4226
    %4482 = vmatmul.bf16.gmra.mxu0 %v4329
    %v4483 = vpop.f32.mrf.mxu0
    %v4484 = vadd.f32 %v4471, %v4483
    %v4485 = vpop.f32.mrf.mxu0
    %4486 = vdwg.mxu0
    %4487 = vmatpush.bf16.msra.mxu0 %v4159
    %4488 = vmatpush.bf16.msra.mxu0 %v4155
    %4489 = vmatpush.bf16.msra.mxu0 %v4151
    %4490 = vmatpush.bf16.msra.mxu0 %v4147
    %4491 = vmatpush.bf16.msra.mxu0 %v4143
    %4492 = vmatpush.bf16.msra.mxu0 %v4139
    %4493 = vmatpush.bf16.msra.mxu0 %v4135
    %4494 = vmatpush.bf16.msra.mxu0 %v4131
    %4495 = vmatmul.bf16.gmra.mxu0 %v3714
    %v4496 = vpop.f32.mrf.mxu0
    %v4497 = vadd.f32 %v3823, %v4496
    %v4498 = vpop.f32.mrf.mxu0
    %4499 = vdwg.mxu0
    %4500 = vmatpush.bf16.msra.mxu0 %v4191
    %4501 = vmatpush.bf16.msra.mxu0 %v4187
    %4502 = vmatpush.bf16.msra.mxu0 %v4183
    %4503 = vmatpush.bf16.msra.mxu0 %v4179
    %4504 = vmatpush.bf16.msra.mxu0 %v4175
    %4505 = vmatpush.bf16.msra.mxu0 %v4171
    %4506 = vmatpush.bf16.msra.mxu0 %v4167
    %4507 = vmatpush.bf16.msra.mxu0 %v4163
    %4508 = vmatmul.bf16.gmra.mxu0 %v3715
    %v4509 = vpop.f32.mrf.mxu0
    %v4510 = vadd.f32 %v4497, %v4509
    %v4511 = vpop.f32.mrf.mxu0
    %4512 = vdwg.mxu0
    %4513 = vmatpush.bf16.msra.mxu0 %v4223
    %4514 = vmatpush.bf16.msra.mxu0 %v4219
    %4515 = vmatpush.bf16.msra.mxu0 %v4215
    %4516 = vmatpush.bf16.msra.mxu0 %v4211
    %4517 = vmatpush.bf16.msra.mxu0 %v4207
    %4518 = vmatpush.bf16.msra.mxu0 %v4203
    %4519 = vmatpush.bf16.msra.mxu0 %v4199
    %4520 = vmatpush.bf16.msra.mxu0 %v4195
    %4521 = vmatmul.bf16.gmra.mxu0 %v3716
    %v4522 = vpop.f32.mrf.mxu0
    %v4523 = vadd.f32 %v4510, %v4522
    %v4524 = vpop.f32.mrf.mxu0
    %4525 = vdwg.mxu0
    %4526 = vmatpush.bf16.msra.mxu0 0
    %4527 = vmatpush.bf16.msra.mxu0 0
    %4528 = vmatpush.bf16.msra.mxu0 0
    %4529 = vmatpush.bf16.msra.mxu0 0
    %4530 = vmatpush.bf16.msra.mxu0 0
    %4531 = vmatpush.bf16.msra.mxu0 0
    %4532 = vmatpush.bf16.msra.mxu0 0
    %4533 = vmatpush.bf16.msra.mxu0 %v4227
    %4534 = vmatmul.bf16.gmra.mxu0 %v4329
    %v4535 = vpop.f32.mrf.mxu0
    %v4536 = vadd.f32 %v4523, %v4535
    %v4537 = vpop.f32.mrf.mxu0
    %4538 = vdwg.mxu0
    %v4539 = vmax.f32 %v4380, 0.0
    %v4540 = vmax.f32 %v4432, 0.0
    %v4541 = vmax.f32 %v4484, 0.0
    %v4542 = vmax.f32 %v4536, 0.0
    %v4543 = vpack.c.bf16 %v4539, %v4539
    %v4544 = vpack.c.bf16 %v4540, %v4540
    %v4545 = vpack.c.bf16 %v4541, %v4541
    %v4546 = vpack.c.bf16 %v4542, %v4542
    %v4547 = vld [vmem:[#allocation4] sm:$0xff]
    %v4548 = vld [vmem:[#allocation4 + $0x8] sm:$0xff]
    %v4549 = vld [vmem:[#allocation4 + $0x10] sm:$0xff]
    %v4550 = vld [vmem:[#allocation4 + $0x18] sm:$0xff]
    %v4551 = vld [vmem:[#allocation4 + $0x20] sm:$0xff]
    %v4552 = vld [vmem:[#allocation4 + $0x28] sm:$0xff]
    %v4553 = vld [vmem:[#allocation4 + $0x30] sm:$0xff]
    %v4554 = vld [vmem:[#allocation4 + $0x38] sm:$0xff]
    %v4555 = vld [vmem:[#allocation4 + $0x40] sm:$0xff]
    %v4556 = vld [vmem:[#allocation4 + $0x48] sm:$0xff]
    %v4557 = vld [vmem:[#allocation4 + $0x50] sm:$0xff]
    %v4558 = vld [vmem:[#allocation4 + $0x58] sm:$0xff]
    %v4559 = vld [vmem:[#allocation4 + $0x60] sm:$0xff]
    %v4560 = vld [vmem:[#allocation4 + $0x68] sm:$0xff]
    %v4561 = vld [vmem:[#allocation4 + $0x70] sm:$0xff]
    %v4562 = vld [vmem:[#allocation4 + $0x78] sm:$0xff]
    %v4563 = vld [vmem:[#allocation4 + $0x80] sm:$0xff]
    %v4564 = vld [vmem:[#allocation4 + $0x88] sm:$0xff]
    %v4565 = vld [vmem:[#allocation4 + $0x90] sm:$0xff]
    %v4566 = vld [vmem:[#allocation4 + $0x98] sm:$0xff]
    %v4567 = vld [vmem:[#allocation4 + $0xa0] sm:$0xff]
    %v4568 = vld [vmem:[#allocation4 + $0xa8] sm:$0xff]
    %v4569 = vld [vmem:[#allocation4 + $0xb0] sm:$0xff]
    %v4570 = vld [vmem:[#allocation4 + $0xb8] sm:$0xff]
    %v4571 = vld [vmem:[#allocation4 + $0xc0] sm:$0xff]
    %v4572 = vld [vmem:[#allocation4 + $0xc8] sm:$0xff]
    %v4573 = vld [vmem:[#allocation4 + $0xd0] sm:$0xff]
    %v4574 = vld [vmem:[#allocation4 + $0xd8] sm:$0xff]
    %v4575 = vld [vmem:[#allocation4 + $0xe0] sm:$0xff]
    %v4576 = vld [vmem:[#allocation4 + $0xe8] sm:$0xff]
    %v4577 = vld [vmem:[#allocation4 + $0xf0] sm:$0xff]
    %v4578 = vld [vmem:[#allocation4 + $0xf8] sm:$0xff]
    %v4579 = vld [vmem:[#allocation4 + $0x100] sm:$0xff]
    %v4580 = vld [vmem:[#allocation4 + $0x108] sm:$0xff]
    %v4581 = vld [vmem:[#allocation4 + $0x110] sm:$0xff]
    %v4582 = vld [vmem:[#allocation4 + $0x118] sm:$0xff]
    %v4583 = vld [vmem:[#allocation4 + $0x120] sm:$0xff]
    %v4584 = vld [vmem:[#allocation4 + $0x128] sm:$0xff]
    %v4585 = vld [vmem:[#allocation4 + $0x130] sm:$0xff]
    %v4586 = vld [vmem:[#allocation4 + $0x138] sm:$0xff]
    %v4587 = vld [vmem:[#allocation4 + $0x140] sm:$0xff]
    %v4588 = vld [vmem:[#allocation4 + $0x148] sm:$0xff]
    %v4589 = vld [vmem:[#allocation4 + $0x150] sm:$0xff]
    %v4590 = vld [vmem:[#allocation4 + $0x158] sm:$0xff]
    %v4591 = vld [vmem:[#allocation4 + $0x160] sm:$0xff]
    %v4592 = vld [vmem:[#allocation4 + $0x168] sm:$0xff]
    %v4593 = vld [vmem:[#allocation4 + $0x170] sm:$0xff]
    %v4594 = vld [vmem:[#allocation4 + $0x178] sm:$0xff]
    %v4595 = vld [vmem:[#allocation4 + $0x180] sm:$0xff]
    %v4596 = vld [vmem:[#allocation4 + $0x188] sm:$0xff]
    %v4597 = vld [vmem:[#allocation4 + $0x190] sm:$0xff]
    %v4598 = vld [vmem:[#allocation4 + $0x198] sm:$0xff]
    %v4599 = vld [vmem:[#allocation4 + $0x1a0] sm:$0xff]
    %v4600 = vld [vmem:[#allocation4 + $0x1a8] sm:$0xff]
    %v4601 = vld [vmem:[#allocation4 + $0x1b0] sm:$0xff]
    %v4602 = vld [vmem:[#allocation4 + $0x1b8] sm:$0xff]
    %v4603 = vld [vmem:[#allocation4 + $0x1c0] sm:$0xff]
    %v4604 = vld [vmem:[#allocation4 + $0x1c8] sm:$0xff]
    %v4605 = vld [vmem:[#allocation4 + $0x1d0] sm:$0xff]
    %v4606 = vld [vmem:[#allocation4 + $0x1d8] sm:$0xff]
    %v4607 = vld [vmem:[#allocation4 + $0x1e0] sm:$0xff]
    %v4608 = vld [vmem:[#allocation4 + $0x1e8] sm:$0xff]
    %v4609 = vld [vmem:[#allocation4 + $0x1f0] sm:$0xff]
    %v4610 = vld [vmem:[#allocation4 + $0x1f8] sm:$0xff]
    %v4611 = vld [vmem:[#allocation4 + $0x200] sm:$0xff]
    %v4612 = vld [vmem:[#allocation4 + $0x208] sm:$0xff]
    %v4613 = vld [vmem:[#allocation4 + $0x210] sm:$0xff]
    %v4614 = vld [vmem:[#allocation4 + $0x218] sm:$0xff]
    %v4615 = vld [vmem:[#allocation4 + $0x220] sm:$0xff]
    %v4616 = vld [vmem:[#allocation4 + $0x228] sm:$0xff]
    %v4617 = vld [vmem:[#allocation4 + $0x230] sm:$0xff]
    %v4618 = vld [vmem:[#allocation4 + $0x238] sm:$0xff]
    %v4619 = vld [vmem:[#allocation4 + $0x240] sm:$0xff]
    %v4620 = vld [vmem:[#allocation4 + $0x248] sm:$0xff]
    %v4621 = vld [vmem:[#allocation4 + $0x250] sm:$0xff]
    %v4622 = vld [vmem:[#allocation4 + $0x258] sm:$0xff]
    %v4623 = vld [vmem:[#allocation4 + $0x260] sm:$0xff]
    %v4624 = vld [vmem:[#allocation4 + $0x268] sm:$0xff]
    %v4625 = vld [vmem:[#allocation4 + $0x270] sm:$0xff]
    %v4626 = vld [vmem:[#allocation4 + $0x278] sm:$0xff]
    %v4627 = vld [vmem:[#allocation4 + $0x280] sm:$0xff]
    %v4628 = vld [vmem:[#allocation4 + $0x288] sm:$0xff]
    %v4629 = vld [vmem:[#allocation4 + $0x290] sm:$0xff]
    %v4630 = vld [vmem:[#allocation4 + $0x298] sm:$0xff]
    %v4631 = vld [vmem:[#allocation4 + $0x2a0] sm:$0xff]
    %v4632 = vld [vmem:[#allocation4 + $0x2a8] sm:$0xff]
    %v4633 = vld [vmem:[#allocation4 + $0x2b0] sm:$0xff]
    %v4634 = vld [vmem:[#allocation4 + $0x2b8] sm:$0xff]
    %v4635 = vld [vmem:[#allocation4 + $0x2c0] sm:$0xff]
    %v4636 = vld [vmem:[#allocation4 + $0x2c8] sm:$0xff]
    %v4637 = vld [vmem:[#allocation4 + $0x2d0] sm:$0xff]
    %v4638 = vld [vmem:[#allocation4 + $0x2d8] sm:$0xff]
    %v4639 = vld [vmem:[#allocation4 + $0x2e0] sm:$0xff]
    %v4640 = vld [vmem:[#allocation4 + $0x2e8] sm:$0xff]
    %v4641 = vld [vmem:[#allocation4 + $0x2f0] sm:$0xff]
    %v4642 = vld [vmem:[#allocation4 + $0x2f8] sm:$0xff]
    %v4643 = vld [vmem:[#allocation4 + $0x300] sm:$0xff]
    %v4644 = vld [vmem:[#allocation4 + $0x308] sm:$0xff]
    %v4645 = vld [vmem:[#allocation4 + $0x310] sm:$0xff]
    %v4646 = vld [vmem:[#allocation4 + $0x318] sm:$0xff]
    %v4647 = vld [vmem:[%s15] sm:$0xf]
    %v4649 = vperm.slane %v4647, 0
    %v4650 = vperm.slane %v4647, 1
    %v4651 = vperm.slane %v4647, 2
    %v4652 = vperm.slane %v4647, 3
    %v4757 = vunpack.c.l.b16 %v4547
    %v4758 = vunpack.c.h.b16 %v4547
    %v4759 = vunpack.c.l.b16 %v4548
    %v4760 = vunpack.c.h.b16 %v4548
    %v4761 = vunpack.c.l.b16 %v4549
    %v4762 = vunpack.c.h.b16 %v4549
    %v4763 = vunpack.c.l.b16 %v4550
    %v4764 = vunpack.c.h.b16 %v4550
    %v4765 = vunpack.c.l.b16 %v4551
    %v4766 = vunpack.c.h.b16 %v4551
    %v4767 = vunpack.c.l.b16 %v4552
    %v4768 = vunpack.c.h.b16 %v4552
    %v4769 = vunpack.c.l.b16 %v4553
    %v4770 = vunpack.c.h.b16 %v4553
    %v4771 = vunpack.c.l.b16 %v4554
    %v4772 = vunpack.c.h.b16 %v4554
    %v4773 = vunpack.c.l.b16 %v4555
    %v4774 = vunpack.c.h.b16 %v4555
    %v4775 = vunpack.c.l.b16 %v4556
    %v4776 = vunpack.c.h.b16 %v4556
    %v4777 = vunpack.c.l.b16 %v4557
    %v4778 = vunpack.c.h.b16 %v4557
    %v4779 = vunpack.c.l.b16 %v4558
    %v4780 = vunpack.c.h.b16 %v4558
    %v4781 = vunpack.c.l.b16 %v4559
    %v4782 = vunpack.c.h.b16 %v4559
    %v4783 = vunpack.c.l.b16 %v4560
    %v4784 = vunpack.c.h.b16 %v4560
    %v4785 = vunpack.c.l.b16 %v4561
    %v4786 = vunpack.c.h.b16 %v4561
    %v4787 = vunpack.c.l.b16 %v4562
    %v4788 = vunpack.c.h.b16 %v4562
    %v4789 = vunpack.c.l.b16 %v4563
    %v4790 = vunpack.c.h.b16 %v4563
    %v4791 = vunpack.c.l.b16 %v4564
    %v4792 = vunpack.c.h.b16 %v4564
    %v4793 = vunpack.c.l.b16 %v4565
    %v4794 = vunpack.c.h.b16 %v4565
    %v4795 = vunpack.c.l.b16 %v4566
    %v4796 = vunpack.c.h.b16 %v4566
    %v4797 = vunpack.c.l.b16 %v4567
    %v4798 = vunpack.c.h.b16 %v4567
    %v4799 = vunpack.c.l.b16 %v4568
    %v4800 = vunpack.c.h.b16 %v4568
    %v4801 = vunpack.c.l.b16 %v4569
    %v4802 = vunpack.c.h.b16 %v4569
    %v4803 = vunpack.c.l.b16 %v4570
    %v4804 = vunpack.c.h.b16 %v4570
    %v4805 = vunpack.c.l.b16 %v4571
    %v4806 = vunpack.c.h.b16 %v4571
    %v4807 = vunpack.c.l.b16 %v4572
    %v4808 = vunpack.c.h.b16 %v4572
    %v4809 = vunpack.c.l.b16 %v4573
    %v4810 = vunpack.c.h.b16 %v4573
    %v4811 = vunpack.c.l.b16 %v4574
    %v4812 = vunpack.c.h.b16 %v4574
    %v4813 = vunpack.c.l.b16 %v4575
    %v4814 = vunpack.c.h.b16 %v4575
    %v4815 = vunpack.c.l.b16 %v4576
    %v4816 = vunpack.c.h.b16 %v4576
    %v4817 = vunpack.c.l.b16 %v4577
    %v4818 = vunpack.c.h.b16 %v4577
    %v4819 = vunpack.c.l.b16 %v4578
    %v4820 = vunpack.c.h.b16 %v4578
    %v4821 = vunpack.c.l.b16 %v4579
    %v4822 = vunpack.c.h.b16 %v4579
    %v4823 = vunpack.c.l.b16 %v4580
    %v4824 = vunpack.c.h.b16 %v4580
    %v4825 = vunpack.c.l.b16 %v4581
    %v4826 = vunpack.c.h.b16 %v4581
    %v4827 = vunpack.c.l.b16 %v4582
    %v4828 = vunpack.c.h.b16 %v4582
    %v4829 = vunpack.c.l.b16 %v4583
    %v4830 = vunpack.c.h.b16 %v4583
    %v4831 = vunpack.c.l.b16 %v4584
    %v4832 = vunpack.c.h.b16 %v4584
    %v4833 = vunpack.c.l.b16 %v4585
    %v4834 = vunpack.c.h.b16 %v4585
    %v4835 = vunpack.c.l.b16 %v4586
    %v4836 = vunpack.c.h.b16 %v4586
    %v4837 = vunpack.c.l.b16 %v4587
    %v4838 = vunpack.c.h.b16 %v4587
    %v4839 = vunpack.c.l.b16 %v4588
    %v4840 = vunpack.c.h.b16 %v4588
    %v4841 = vunpack.c.l.b16 %v4589
    %v4842 = vunpack.c.h.b16 %v4589
    %v4843 = vunpack.c.l.b16 %v4590
    %v4844 = vunpack.c.h.b16 %v4590
    %v4845 = vunpack.c.l.b16 %v4591
    %v4846 = vunpack.c.h.b16 %v4591
    %v4847 = vunpack.c.l.b16 %v4592
    %v4848 = vunpack.c.h.b16 %v4592
    %v4849 = vunpack.c.l.b16 %v4593
    %v4850 = vunpack.c.h.b16 %v4593
    %v4851 = vunpack.c.l.b16 %v4594
    %v4852 = vunpack.c.h.b16 %v4594
    %v4853 = vunpack.c.l.b16 %v4595
    %v4854 = vunpack.c.h.b16 %v4595
    %v4855 = vunpack.c.l.b16 %v4596
    %v4856 = vunpack.c.h.b16 %v4596
    %v4857 = vunpack.c.l.b16 %v4597
    %v4858 = vunpack.c.h.b16 %v4597
    %v4859 = vunpack.c.l.b16 %v4598
    %v4860 = vunpack.c.h.b16 %v4598
    %v4861 = vunpack.c.l.b16 %v4599
    %v4862 = vunpack.c.h.b16 %v4599
    %v4863 = vunpack.c.l.b16 %v4600
    %v4864 = vunpack.c.h.b16 %v4600
    %v4865 = vunpack.c.l.b16 %v4601
    %v4866 = vunpack.c.h.b16 %v4601
    %v4867 = vunpack.c.l.b16 %v4602
    %v4868 = vunpack.c.h.b16 %v4602
    %v4869 = vunpack.c.l.b16 %v4603
    %v4870 = vunpack.c.h.b16 %v4603
    %v4871 = vunpack.c.l.b16 %v4604
    %v4872 = vunpack.c.h.b16 %v4604
    %v4873 = vunpack.c.l.b16 %v4605
    %v4874 = vunpack.c.h.b16 %v4605
    %v4875 = vunpack.c.l.b16 %v4606
    %v4876 = vunpack.c.h.b16 %v4606
    %v4877 = vunpack.c.l.b16 %v4607
    %v4878 = vunpack.c.h.b16 %v4607
    %v4879 = vunpack.c.l.b16 %v4608
    %v4880 = vunpack.c.h.b16 %v4608
    %v4881 = vunpack.c.l.b16 %v4609
    %v4882 = vunpack.c.h.b16 %v4609
    %v4883 = vunpack.c.l.b16 %v4610
    %v4884 = vunpack.c.h.b16 %v4610
    %v4885 = vunpack.c.l.b16 %v4611
    %v4886 = vunpack.c.h.b16 %v4611
    %v4887 = vunpack.c.l.b16 %v4612
    %v4888 = vunpack.c.h.b16 %v4612
    %v4889 = vunpack.c.l.b16 %v4613
    %v4890 = vunpack.c.h.b16 %v4613
    %v4891 = vunpack.c.l.b16 %v4614
    %v4892 = vunpack.c.h.b16 %v4614
    %v4893 = vunpack.c.l.b16 %v4615
    %v4894 = vunpack.c.h.b16 %v4615
    %v4895 = vunpack.c.l.b16 %v4616
    %v4896 = vunpack.c.h.b16 %v4616
    %v4897 = vunpack.c.l.b16 %v4617
    %v4898 = vunpack.c.h.b16 %v4617
    %v4899 = vunpack.c.l.b16 %v4618
    %v4900 = vunpack.c.h.b16 %v4618
    %v4901 = vunpack.c.l.b16 %v4619
    %v4902 = vunpack.c.h.b16 %v4619
    %v4903 = vunpack.c.l.b16 %v4620
    %v4904 = vunpack.c.h.b16 %v4620
    %v4905 = vunpack.c.l.b16 %v4621
    %v4906 = vunpack.c.h.b16 %v4621
    %v4907 = vunpack.c.l.b16 %v4622
    %v4908 = vunpack.c.h.b16 %v4622
    %v4909 = vunpack.c.l.b16 %v4623
    %v4910 = vunpack.c.h.b16 %v4623
    %v4911 = vunpack.c.l.b16 %v4624
    %v4912 = vunpack.c.h.b16 %v4624
    %v4913 = vunpack.c.l.b16 %v4625
    %v4914 = vunpack.c.h.b16 %v4625
    %v4915 = vunpack.c.l.b16 %v4626
    %v4916 = vunpack.c.h.b16 %v4626
    %v4917 = vunpack.c.l.b16 %v4627
    %v4918 = vunpack.c.h.b16 %v4627
    %v4919 = vunpack.c.l.b16 %v4628
    %v4920 = vunpack.c.h.b16 %v4628
    %v4921 = vunpack.c.l.b16 %v4629
    %v4922 = vunpack.c.h.b16 %v4629
    %v4923 = vunpack.c.l.b16 %v4630
    %v4924 = vunpack.c.h.b16 %v4630
    %v4925 = vunpack.c.l.b16 %v4631
    %v4926 = vunpack.c.h.b16 %v4631
    %v4927 = vunpack.c.l.b16 %v4632
    %v4928 = vunpack.c.h.b16 %v4632
    %v4929 = vunpack.c.l.b16 %v4633
    %v4930 = vunpack.c.h.b16 %v4633
    %v4931 = vunpack.c.l.b16 %v4634
    %v4932 = vunpack.c.h.b16 %v4634
    %v4933 = vunpack.c.l.b16 %v4635
    %v4934 = vunpack.c.h.b16 %v4635
    %v4935 = vunpack.c.l.b16 %v4636
    %v4936 = vunpack.c.h.b16 %v4636
    %v4937 = vunpack.c.l.b16 %v4637
    %v4938 = vunpack.c.h.b16 %v4637
    %v4939 = vunpack.c.l.b16 %v4638
    %v4940 = vunpack.c.h.b16 %v4638
    %v4941 = vunpack.c.l.b16 %v4639
    %v4942 = vunpack.c.h.b16 %v4639
    %v4943 = vunpack.c.l.b16 %v4640
    %v4944 = vunpack.c.h.b16 %v4640
    %v4945 = vunpack.c.l.b16 %v4641
    %v4946 = vunpack.c.h.b16 %v4641
    %v4947 = vunpack.c.l.b16 %v4642
    %v4948 = vunpack.c.h.b16 %v4642
    %v4949 = vunpack.c.l.b16 %v4643
    %v4950 = vunpack.c.h.b16 %v4643
    %v4951 = vunpack.c.l.b16 %v4644
    %v4952 = vunpack.c.h.b16 %v4644
    %v4953 = vunpack.c.l.b16 %v4645
    %v4954 = vunpack.c.h.b16 %v4645
    %v4955 = vunpack.c.l.b16 %v4646
    %v4956 = vunpack.c.h.b16 %v4646
    %v4957 = vpack.c.b16 %v4761, %v4757
    %v4958 = vpack.c.b16 %v4762, %v4758
    %v4959 = vpack.c.b16 %v4763, %v4759
    %v4960 = vpack.c.b16 %v4764, %v4760
    %v4961 = vpack.c.b16 %v4769, %v4765
    %v4962 = vpack.c.b16 %v4770, %v4766
    %v4963 = vpack.c.b16 %v4771, %v4767
    %v4964 = vpack.c.b16 %v4772, %v4768
    %v4965 = vpack.c.b16 %v4777, %v4773
    %v4966 = vpack.c.b16 %v4778, %v4774
    %v4967 = vpack.c.b16 %v4779, %v4775
    %v4968 = vpack.c.b16 %v4780, %v4776
    %v4969 = vpack.c.b16 %v4785, %v4781
    %v4970 = vpack.c.b16 %v4786, %v4782
    %v4971 = vpack.c.b16 %v4787, %v4783
    %v4972 = vpack.c.b16 %v4788, %v4784
    %v4973 = vpack.c.b16 %v4793, %v4789
    %v4974 = vpack.c.b16 %v4794, %v4790
    %v4975 = vpack.c.b16 %v4795, %v4791
    %v4976 = vpack.c.b16 %v4796, %v4792
    %v4977 = vpack.c.b16 %v4801, %v4797
    %v4978 = vpack.c.b16 %v4802, %v4798
    %v4979 = vpack.c.b16 %v4803, %v4799
    %v4980 = vpack.c.b16 %v4804, %v4800
    %v4981 = vpack.c.b16 %v4809, %v4805
    %v4982 = vpack.c.b16 %v4810, %v4806
    %v4983 = vpack.c.b16 %v4811, %v4807
    %v4984 = vpack.c.b16 %v4812, %v4808
    %v4985 = vpack.c.b16 %v4817, %v4813
    %v4986 = vpack.c.b16 %v4818, %v4814
    %v4987 = vpack.c.b16 %v4819, %v4815
    %v4988 = vpack.c.b16 %v4820, %v4816
    %v4989 = vpack.c.b16 %v4825, %v4821
    %v4990 = vpack.c.b16 %v4826, %v4822
    %v4991 = vpack.c.b16 %v4827, %v4823
    %v4992 = vpack.c.b16 %v4828, %v4824
    %v4993 = vpack.c.b16 %v4833, %v4829
    %v4994 = vpack.c.b16 %v4834, %v4830
    %v4995 = vpack.c.b16 %v4835, %v4831
    %v4996 = vpack.c.b16 %v4836, %v4832
    %v4997 = vpack.c.b16 %v4841, %v4837
    %v4998 = vpack.c.b16 %v4842, %v4838
    %v4999 = vpack.c.b16 %v4843, %v4839
    %v5000 = vpack.c.b16 %v4844, %v4840
    %v5001 = vpack.c.b16 %v4849, %v4845
    %v5002 = vpack.c.b16 %v4850, %v4846
    %v5003 = vpack.c.b16 %v4851, %v4847
    %v5004 = vpack.c.b16 %v4852, %v4848
    %v5005 = vpack.c.b16 %v4857, %v4853
    %v5006 = vpack.c.b16 %v4858, %v4854
    %v5007 = vpack.c.b16 %v4859, %v4855
    %v5008 = vpack.c.b16 %v4860, %v4856
    %v5009 = vpack.c.b16 %v4865, %v4861
    %v5010 = vpack.c.b16 %v4866, %v4862
    %v5011 = vpack.c.b16 %v4867, %v4863
    %v5012 = vpack.c.b16 %v4868, %v4864
    %v5013 = vpack.c.b16 %v4873, %v4869
    %v5014 = vpack.c.b16 %v4874, %v4870
    %v5015 = vpack.c.b16 %v4875, %v4871
    %v5016 = vpack.c.b16 %v4876, %v4872
    %v5017 = vpack.c.b16 %v4881, %v4877
    %v5018 = vpack.c.b16 %v4882, %v4878
    %v5019 = vpack.c.b16 %v4883, %v4879
    %v5020 = vpack.c.b16 %v4884, %v4880
    %v5021 = vpack.c.b16 %v4889, %v4885
    %v5022 = vpack.c.b16 %v4890, %v4886
    %v5023 = vpack.c.b16 %v4891, %v4887
    %v5024 = vpack.c.b16 %v4892, %v4888
    %v5025 = vpack.c.b16 %v4897, %v4893
    %v5026 = vpack.c.b16 %v4898, %v4894
    %v5027 = vpack.c.b16 %v4899, %v4895
    %v5028 = vpack.c.b16 %v4900, %v4896
    %v5029 = vpack.c.b16 %v4905, %v4901
    %v5030 = vpack.c.b16 %v4906, %v4902
    %v5031 = vpack.c.b16 %v4907, %v4903
    %v5032 = vpack.c.b16 %v4908, %v4904
    %v5033 = vpack.c.b16 %v4913, %v4909
    %v5034 = vpack.c.b16 %v4914, %v4910
    %v5035 = vpack.c.b16 %v4915, %v4911
    %v5036 = vpack.c.b16 %v4916, %v4912
    %v5037 = vpack.c.b16 %v4921, %v4917
    %v5038 = vpack.c.b16 %v4922, %v4918
    %v5039 = vpack.c.b16 %v4923, %v4919
    %v5040 = vpack.c.b16 %v4924, %v4920
    %v5041 = vpack.c.b16 %v4929, %v4925
    %v5042 = vpack.c.b16 %v4930, %v4926
    %v5043 = vpack.c.b16 %v4931, %v4927
    %v5044 = vpack.c.b16 %v4932, %v4928
    %v5045 = vpack.c.b16 %v4937, %v4933
    %v5046 = vpack.c.b16 %v4938, %v4934
    %v5047 = vpack.c.b16 %v4939, %v4935
    %v5048 = vpack.c.b16 %v4940, %v4936
    %v5049 = vpack.c.b16 %v4945, %v4941
    %v5050 = vpack.c.b16 %v4946, %v4942
    %v5051 = vpack.c.b16 %v4947, %v4943
    %v5052 = vpack.c.b16 %v4948, %v4944
    %v5053 = vpack.c.b16 %v4953, %v4949
    %v5054 = vpack.c.b16 %v4954, %v4950
    %v5055 = vpack.c.b16 %v4955, %v4951
    %v5056 = vpack.c.b16 %v4956, %v4952
    %v5158 = vsel %vm1308, %v4546, 0
    %5160 = vmatpush.bf16.msra.mxu0 %v4985
    %5161 = vmatpush.bf16.msra.mxu0 %v4981
    %5162 = vmatpush.bf16.msra.mxu0 %v4977
    %5163 = vmatpush.bf16.msra.mxu0 %v4973
    %5164 = vmatpush.bf16.msra.mxu0 %v4969
    %5165 = vmatpush.bf16.msra.mxu0 %v4965
    %5166 = vmatpush.bf16.msra.mxu0 %v4961
    %5167 = vmatpush.bf16.msra.mxu0 %v4957
    %5168 = vmatmul.bf16.gmra.mxu0 %v4543
    %v5169 = vpop.f32.mrf.mxu0
    %v5170 = vadd.f32 %v4649, %v5169
    %v5171 = vpop.f32.mrf.mxu0
    %5172 = vdwg.mxu0
    %5173 = vmatpush.bf16.msra.mxu0 %v5017
    %5174 = vmatpush.bf16.msra.mxu0 %v5013
    %5175 = vmatpush.bf16.msra.mxu0 %v5009
    %5176 = vmatpush.bf16.msra.mxu0 %v5005
    %5177 = vmatpush.bf16.msra.mxu0 %v5001
    %5178 = vmatpush.bf16.msra.mxu0 %v4997
    %5179 = vmatpush.bf16.msra.mxu0 %v4993
    %5180 = vmatpush.bf16.msra.mxu0 %v4989
    %5181 = vmatmul.bf16.gmra.mxu0 %v4544
    %v5182 = vpop.f32.mrf.mxu0
    %v5183 = vadd.f32 %v5170, %v5182
    %v5184 = vpop.f32.mrf.mxu0
    %5185 = vdwg.mxu0
    %5186 = vmatpush.bf16.msra.mxu0 %v5049
    %5187 = vmatpush.bf16.msra.mxu0 %v5045
    %5188 = vmatpush.bf16.msra.mxu0 %v5041
    %5189 = vmatpush.bf16.msra.mxu0 %v5037
    %5190 = vmatpush.bf16.msra.mxu0 %v5033
    %5191 = vmatpush.bf16.msra.mxu0 %v5029
    %5192 = vmatpush.bf16.msra.mxu0 %v5025
    %5193 = vmatpush.bf16.msra.mxu0 %v5021
    %5194 = vmatmul.bf16.gmra.mxu0 %v4545
    %v5195 = vpop.f32.mrf.mxu0
    %v5196 = vadd.f32 %v5183, %v5195
    %v5197 = vpop.f32.mrf.mxu0
    %5198 = vdwg.mxu0
    %5199 = vmatpush.bf16.msra.mxu0 0
    %5200 = vmatpush.bf16.msra.mxu0 0
    %5201 = vmatpush.bf16.msra.mxu0 0
    %5202 = vmatpush.bf16.msra.mxu0 0
    %5203 = vmatpush.bf16.msra.mxu0 0
    %5204 = vmatpush.bf16.msra.mxu0 0
    %5205 = vmatpush.bf16.msra.mxu0 0
    %5206 = vmatpush.bf16.msra.mxu0 %v5053
    %5207 = vmatmul.bf16.gmra.mxu0 %v5158
    %v5208 = vpop.f32.mrf.mxu0
    %v5209 = vadd.f32 %v5196, %v5208
    %v5210 = vpop.f32.mrf.mxu0
    %5211 = vdwg.mxu0
    %5212 = vmatpush.bf16.msra.mxu0 %v4986
    %5213 = vmatpush.bf16.msra.mxu0 %v4982
    %5214 = vmatpush.bf16.msra.mxu0 %v4978
    %5215 = vmatpush.bf16.msra.mxu0 %v4974
    %5216 = vmatpush.bf16.msra.mxu0 %v4970
    %5217 = vmatpush.bf16.msra.mxu0 %v4966
    %5218 = vmatpush.bf16.msra.mxu0 %v4962
    %5219 = vmatpush.bf16.msra.mxu0 %v4958
    %5220 = vmatmul.bf16.gmra.mxu0 %v4543
    %v5221 = vpop.f32.mrf.mxu0
    %v5222 = vadd.f32 %v4650, %v5221
    %v5223 = vpop.f32.mrf.mxu0
    %5224 = vdwg.mxu0
    %5225 = vmatpush.bf16.msra.mxu0 %v5018
    %5226 = vmatpush.bf16.msra.mxu0 %v5014
    %5227 = vmatpush.bf16.msra.mxu0 %v5010
    %5228 = vmatpush.bf16.msra.mxu0 %v5006
    %5229 = vmatpush.bf16.msra.mxu0 %v5002
    %5230 = vmatpush.bf16.msra.mxu0 %v4998
    %5231 = vmatpush.bf16.msra.mxu0 %v4994
    %5232 = vmatpush.bf16.msra.mxu0 %v4990
    %5233 = vmatmul.bf16.gmra.mxu0 %v4544
    %v5234 = vpop.f32.mrf.mxu0
    %v5235 = vadd.f32 %v5222, %v5234
    %v5236 = vpop.f32.mrf.mxu0
    %5237 = vdwg.mxu0
    %5238 = vmatpush.bf16.msra.mxu0 %v5050
    %5239 = vmatpush.bf16.msra.mxu0 %v5046
    %5240 = vmatpush.bf16.msra.mxu0 %v5042
    %5241 = vmatpush.bf16.msra.mxu0 %v5038
    %5242 = vmatpush.bf16.msra.mxu0 %v5034
    %5243 = vmatpush.bf16.msra.mxu0 %v5030
    %5244 = vmatpush.bf16.msra.mxu0 %v5026
    %5245 = vmatpush.bf16.msra.mxu0 %v5022
    %5246 = vmatmul.bf16.gmra.mxu0 %v4545
    %v5247 = vpop.f32.mrf.mxu0
    %v5248 = vadd.f32 %v5235, %v5247
    %v5249 = vpop.f32.mrf.mxu0
    %5250 = vdwg.mxu0
    %5251 = vmatpush.bf16.msra.mxu0 0
    %5252 = vmatpush.bf16.msra.mxu0 0
    %5253 = vmatpush.bf16.msra.mxu0 0
    %5254 = vmatpush.bf16.msra.mxu0 0
    %5255 = vmatpush.bf16.msra.mxu0 0
    %5256 = vmatpush.bf16.msra.mxu0 0
    %5257 = vmatpush.bf16.msra.mxu0 0
    %5258 = vmatpush.bf16.msra.mxu0 %v5054
    %5259 = vmatmul.bf16.gmra.mxu0 %v5158
    %v5260 = vpop.f32.mrf.mxu0
    %v5261 = vadd.f32 %v5248, %v5260
    %v5262 = vpop.f32.mrf.mxu0
    %5263 = vdwg.mxu0
    %5264 = vmatpush.bf16.msra.mxu0 %v4987
    %5265 = vmatpush.bf16.msra.mxu0 %v4983
    %5266 = vmatpush.bf16.msra.mxu0 %v4979
    %5267 = vmatpush.bf16.msra.mxu0 %v4975
    %5268 = vmatpush.bf16.msra.mxu0 %v4971
    %5269 = vmatpush.bf16.msra.mxu0 %v4967
    %5270 = vmatpush.bf16.msra.mxu0 %v4963
    %5271 = vmatpush.bf16.msra.mxu0 %v4959
    %5272 = vmatmul.bf16.gmra.mxu0 %v4543
    %v5273 = vpop.f32.mrf.mxu0
    %v5274 = vadd.f32 %v4651, %v5273
    %v5275 = vpop.f32.mrf.mxu0
    %5276 = vdwg.mxu0
    %5277 = vmatpush.bf16.msra.mxu0 %v5019
    %5278 = vmatpush.bf16.msra.mxu0 %v5015
    %5279 = vmatpush.bf16.msra.mxu0 %v5011
    %5280 = vmatpush.bf16.msra.mxu0 %v5007
    %5281 = vmatpush.bf16.msra.mxu0 %v5003
    %5282 = vmatpush.bf16.msra.mxu0 %v4999
    %5283 = vmatpush.bf16.msra.mxu0 %v4995
    %5284 = vmatpush.bf16.msra.mxu0 %v4991
    %5285 = vmatmul.bf16.gmra.mxu0 %v4544
    %v5286 = vpop.f32.mrf.mxu0
    %v5287 = vadd.f32 %v5274, %v5286
    %v5288 = vpop.f32.mrf.mxu0
    %5289 = vdwg.mxu0
    %5290 = vmatpush.bf16.msra.mxu0 %v5051
    %5291 = vmatpush.bf16.msra.mxu0 %v5047
    %5292 = vmatpush.bf16.msra.mxu0 %v5043
    %5293 = vmatpush.bf16.msra.mxu0 %v5039
    %5294 = vmatpush.bf16.msra.mxu0 %v5035
    %5295 = vmatpush.bf16.msra.mxu0 %v5031
    %5296 = vmatpush.bf16.msra.mxu0 %v5027
    %5297 = vmatpush.bf16.msra.mxu0 %v5023
    %5298 = vmatmul.bf16.gmra.mxu0 %v4545
    %v5299 = vpop.f32.mrf.mxu0
    %v5300 = vadd.f32 %v5287, %v5299
    %v5301 = vpop.f32.mrf.mxu0
    %5302 = vdwg.mxu0
    %5303 = vmatpush.bf16.msra.mxu0 0
    %5304 = vmatpush.bf16.msra.mxu0 0
    %5305 = vmatpush.bf16.msra.mxu0 0
    %5306 = vmatpush.bf16.msra.mxu0 0
    %5307 = vmatpush.bf16.msra.mxu0 0
    %5308 = vmatpush.bf16.msra.mxu0 0
    %5309 = vmatpush.bf16.msra.mxu0 0
    %5310 = vmatpush.bf16.msra.mxu0 %v5055
    %5311 = vmatmul.bf16.gmra.mxu0 %v5158
    %v5312 = vpop.f32.mrf.mxu0
    %v5313 = vadd.f32 %v5300, %v5312
    %v5314 = vpop.f32.mrf.mxu0
    %5315 = vdwg.mxu0
    %5316 = vmatpush.bf16.msra.mxu0 %v4988
    %5317 = vmatpush.bf16.msra.mxu0 %v4984
    %5318 = vmatpush.bf16.msra.mxu0 %v4980
    %5319 = vmatpush.bf16.msra.mxu0 %v4976
    %5320 = vmatpush.bf16.msra.mxu0 %v4972
    %5321 = vmatpush.bf16.msra.mxu0 %v4968
    %5322 = vmatpush.bf16.msra.mxu0 %v4964
    %5323 = vmatpush.bf16.msra.mxu0 %v4960
    %5324 = vmatmul.bf16.gmra.mxu0 %v4543
    %v5325 = vpop.f32.mrf.mxu0
    %v5326 = vadd.f32 %v4652, %v5325
    %v5327 = vpop.f32.mrf.mxu0
    %5328 = vdwg.mxu0
    %5329 = vmatpush.bf16.msra.mxu0 %v5020
    %5330 = vmatpush.bf16.msra.mxu0 %v5016
    %5331 = vmatpush.bf16.msra.mxu0 %v5012
    %5332 = vmatpush.bf16.msra.mxu0 %v5008
    %5333 = vmatpush.bf16.msra.mxu0 %v5004
    %5334 = vmatpush.bf16.msra.mxu0 %v5000
    %5335 = vmatpush.bf16.msra.mxu0 %v4996
    %5336 = vmatpush.bf16.msra.mxu0 %v4992
    %5337 = vmatmul.bf16.gmra.mxu0 %v4544
    %v5338 = vpop.f32.mrf.mxu0
    %v5339 = vadd.f32 %v5326, %v5338
    %v5340 = vpop.f32.mrf.mxu0
    %5341 = vdwg.mxu0
    %5342 = vmatpush.bf16.msra.mxu0 %v5052
    %5343 = vmatpush.bf16.msra.mxu0 %v5048
    %5344 = vmatpush.bf16.msra.mxu0 %v5044
    %5345 = vmatpush.bf16.msra.mxu0 %v5040
    %5346 = vmatpush.bf16.msra.mxu0 %v5036
    %5347 = vmatpush.bf16.msra.mxu0 %v5032
    %5348 = vmatpush.bf16.msra.mxu0 %v5028
    %5349 = vmatpush.bf16.msra.mxu0 %v5024
    %5350 = vmatmul.bf16.gmra.mxu0 %v4545
    %v5351 = vpop.f32.mrf.mxu0
    %v5352 = vadd.f32 %v5339, %v5351
    %v5353 = vpop.f32.mrf.mxu0
    %5354 = vdwg.mxu0
    %5355 = vmatpush.bf16.msra.mxu0 0
    %5356 = vmatpush.bf16.msra.mxu0 0
    %5357 = vmatpush.bf16.msra.mxu0 0
    %5358 = vmatpush.bf16.msra.mxu0 0
    %5359 = vmatpush.bf16.msra.mxu0 0
    %5360 = vmatpush.bf16.msra.mxu0 0
    %5361 = vmatpush.bf16.msra.mxu0 0
    %5362 = vmatpush.bf16.msra.mxu0 %v5056
    %5363 = vmatmul.bf16.gmra.mxu0 %v5158
    %v5364 = vpop.f32.mrf.mxu0
    %v5365 = vadd.f32 %v5352, %v5364
    %v5366 = vpop.f32.mrf.mxu0
    %5367 = vdwg.mxu0
    %v5368 = vmax.f32 %v5209, 0.0
    %v5369 = vmax.f32 %v5261, 0.0
    %v5370 = vmax.f32 %v5313, 0.0
    %v5371 = vmax.f32 %v5365, 0.0
    %v5372 = vpack.c.bf16 %v5368, %v5368
    %v5373 = vpack.c.bf16 %v5369, %v5369
    %v5374 = vpack.c.bf16 %v5370, %v5370
    %v5375 = vpack.c.bf16 %v5371, %v5371
    %v5376 = vld [vmem:[%s16] sm:$0xff]
    %v5377 = vld [vmem:[%s16 + $0x8] sm:$0xff]
    %v5378 = vld [vmem:[%s16 + $0x10] sm:$0xff]
    %v5379 = vld [vmem:[%s16 + $0x18] sm:$0xf]
    %v5380 = vld [vmem:[%s16 + $0x1c] sm:$0xff]
    %v5381 = vld [vmem:[%s16 + $0x24] sm:$0xff]
    %v5382 = vld [vmem:[%s16 + $0x2c] sm:$0xff]
    %v5383 = vld [vmem:[%s16 + $0x34] sm:$0xf]
    %v5384 = vld [vmem:[%s16 + $0x38] sm:$0xff]
    %v5385 = vld [vmem:[%s16 + $0x40] sm:$0xff]
    %v5386 = vld [vmem:[%s16 + $0x48] sm:$0xff]
    %v5387 = vld [vmem:[%s16 + $0x50] sm:$0xf]
    %v5388 = vld [vmem:[%s16 + $0x54] sm:$0xff]
    %v5389 = vld [vmem:[%s16 + $0x5c] sm:$0xff]
    %v5390 = vld [vmem:[%s16 + $0x64] sm:$0xff]
    %v5391 = vld [vmem:[%s16 + $0x6c] sm:$0xf]
    %v5392 = vld [vmem:[%s16 + $0x70] sm:$0xff]
    %v5393 = vld [vmem:[%s16 + $0x78] sm:$0xff]
    %v5394 = vld [vmem:[%s16 + $0x80] sm:$0xff]
    %v5395 = vld [vmem:[%s16 + $0x88] sm:$0xf]
    %v5396 = vld [vmem:[%s16 + $0x8c] sm:$0xff]
    %v5397 = vld [vmem:[%s16 + $0x94] sm:$0xff]
    %v5398 = vld [vmem:[%s16 + $0x9c] sm:$0xff]
    %v5399 = vld [vmem:[%s16 + $0xa4] sm:$0xf]
    %v5400 = vld [vmem:[%s16 + $0xa8] sm:$0xff]
    %v5401 = vld [vmem:[%s16 + $0xb0] sm:$0xff]
    %v5402 = vld [vmem:[%s16 + $0xb8] sm:$0xff]
    %v5403 = vld [vmem:[%s16 + $0xc0] sm:$0xf]
    %v5404 = vld [vmem:[%s16 + $0xc4] sm:$0xff]
    %v5405 = vld [vmem:[%s16 + $0xcc] sm:$0xff]
    %v5406 = vld [vmem:[%s16 + $0xd4] sm:$0xff]
    %v5407 = vld [vmem:[%s16 + $0xdc] sm:$0xf]
    %v5408 = vld [vmem:[%s16 + $0xe0] sm:$0xff]
    %v5409 = vld [vmem:[%s16 + $0xe8] sm:$0xff]
    %v5410 = vld [vmem:[%s16 + $0xf0] sm:$0xff]
    %v5411 = vld [vmem:[%s16 + $0xf8] sm:$0xf]
    %v5412 = vld [vmem:[%s16 + $0xfc] sm:$0xff]
    %v5413 = vld [vmem:[%s16 + $0x104] sm:$0xff]
    %v5414 = vld [vmem:[%s16 + $0x10c] sm:$0xff]
    %v5415 = vld [vmem:[%s16 + $0x114] sm:$0xf]
    %v5416 = vld [vmem:[%s16 + $0x118] sm:$0xff]
    %v5417 = vld [vmem:[%s16 + $0x120] sm:$0xff]
    %v5418 = vld [vmem:[%s16 + $0x128] sm:$0xff]
    %v5419 = vld [vmem:[%s16 + $0x130] sm:$0xf]
    %v5420 = vld [vmem:[%s16 + $0x134] sm:$0xff]
    %v5421 = vld [vmem:[%s16 + $0x13c] sm:$0xff]
    %v5422 = vld [vmem:[%s16 + $0x144] sm:$0xff]
    %v5423 = vld [vmem:[%s16 + $0x14c] sm:$0xf]
    %v5424 = vld [vmem:[%s16 + $0x150] sm:$0xff]
    %v5425 = vld [vmem:[%s16 + $0x158] sm:$0xff]
    %v5426 = vld [vmem:[%s16 + $0x160] sm:$0xff]
    %v5427 = vld [vmem:[%s16 + $0x168] sm:$0xf]
    %v5428 = vld [vmem:[%s16 + $0x16c] sm:$0xff]
    %v5429 = vld [vmem:[%s16 + $0x174] sm:$0xff]
    %v5430 = vld [vmem:[%s16 + $0x17c] sm:$0xff]
    %v5431 = vld [vmem:[%s16 + $0x184] sm:$0xf]
    %v5432 = vld [vmem:[%s16 + $0x188] sm:$0xff]
    %v5433 = vld [vmem:[%s16 + $0x190] sm:$0xff]
    %v5434 = vld [vmem:[%s16 + $0x198] sm:$0xff]
    %v5435 = vld [vmem:[%s16 + $0x1a0] sm:$0xf]
    %v5436 = vld [vmem:[%s16 + $0x1a4] sm:$0xff]
    %v5437 = vld [vmem:[%s16 + $0x1ac] sm:$0xff]
    %v5438 = vld [vmem:[%s16 + $0x1b4] sm:$0xff]
    %v5439 = vld [vmem:[%s16 + $0x1bc] sm:$0xf]
    %v5440 = vld [vmem:[%s16 + $0x1c0] sm:$0xff]
    %v5441 = vld [vmem:[%s16 + $0x1c8] sm:$0xff]
    %v5442 = vld [vmem:[%s16 + $0x1d0] sm:$0xff]
    %v5443 = vld [vmem:[%s16 + $0x1d8] sm:$0xf]
    %v5444 = vld [vmem:[%s16 + $0x1dc] sm:$0xff]
    %v5445 = vld [vmem:[%s16 + $0x1e4] sm:$0xff]
    %v5446 = vld [vmem:[%s16 + $0x1ec] sm:$0xff]
    %v5447 = vld [vmem:[%s16 + $0x1f4] sm:$0xf]
    %v5448 = vld [vmem:[%s16 + $0x1f8] sm:$0xff]
    %v5449 = vld [vmem:[%s16 + $0x200] sm:$0xff]
    %v5450 = vld [vmem:[%s16 + $0x208] sm:$0xff]
    %v5451 = vld [vmem:[%s16 + $0x210] sm:$0xf]
    %v5452 = vld [vmem:[%s16 + $0x214] sm:$0xff]
    %v5453 = vld [vmem:[%s16 + $0x21c] sm:$0xff]
    %v5454 = vld [vmem:[%s16 + $0x224] sm:$0xff]
    %v5455 = vld [vmem:[%s16 + $0x22c] sm:$0xf]
    %v5456 = vld [vmem:[%s16 + $0x230] sm:$0xff]
    %v5457 = vld [vmem:[%s16 + $0x238] sm:$0xff]
    %v5458 = vld [vmem:[%s16 + $0x240] sm:$0xff]
    %v5459 = vld [vmem:[%s16 + $0x248] sm:$0xf]
    %v5460 = vld [vmem:[%s16 + $0x24c] sm:$0xff]
    %v5461 = vld [vmem:[%s16 + $0x254] sm:$0xff]
    %v5462 = vld [vmem:[%s16 + $0x25c] sm:$0xff]
    %v5463 = vld [vmem:[%s16 + $0x264] sm:$0xf]
    %v5464 = vld [vmem:[%s16 + $0x268] sm:$0xff]
    %v5465 = vld [vmem:[%s16 + $0x270] sm:$0xff]
    %v5466 = vld [vmem:[%s16 + $0x278] sm:$0xff]
    %v5467 = vld [vmem:[%s16 + $0x280] sm:$0xf]
    %v5468 = vld [vmem:[%s16 + $0x284] sm:$0xff]
    %v5469 = vld [vmem:[%s16 + $0x28c] sm:$0xff]
    %v5470 = vld [vmem:[%s16 + $0x294] sm:$0xff]
    %v5471 = vld [vmem:[%s16 + $0x29c] sm:$0xf]
    %v5472 = vld [vmem:[%s16 + $0x2a0] sm:$0xff]
    %v5473 = vld [vmem:[%s16 + $0x2a8] sm:$0xff]
    %v5474 = vld [vmem:[%s16 + $0x2b0] sm:$0xff]
    %v5475 = vld [vmem:[%s16 + $0x2b8] sm:$0xf]
    %v5476 = vld [vmem:[%s16 + $0x2bc] sm:$0xff]
    %v5477 = vld [vmem:[%s16 + $0x2c4] sm:$0xff]
    %v5478 = vld [vmem:[%s16 + $0x2cc] sm:$0xff]
    %v5479 = vld [vmem:[%s16 + $0x2d4] sm:$0xf]
    %v5480 = vld [vmem:[%s16 + $0x2d8] sm:$0xff]
    %v5481 = vld [vmem:[%s16 + $0x2e0] sm:$0xff]
    %v5482 = vld [vmem:[%s16 + $0x2e8] sm:$0xff]
    %v5483 = vld [vmem:[%s16 + $0x2f0] sm:$0xf]
    %v5484 = vld [vmem:[%s16 + $0x2f4] sm:$0xff]
    %v5485 = vld [vmem:[%s16 + $0x2fc] sm:$0xff]
    %v5486 = vld [vmem:[%s16 + $0x304] sm:$0xff]
    %v5487 = vld [vmem:[%s16 + $0x30c] sm:$0xf]
    %v5488 = vld [vmem:[%s16 + $0x310] sm:$0xff]
    %v5489 = vld [vmem:[%s16 + $0x318] sm:$0xff]
    %v5490 = vld [vmem:[%s16 + $0x320] sm:$0xff]
    %v5491 = vld [vmem:[%s16 + $0x328] sm:$0xf]
    %v5492 = vld [vmem:[%s16 + $0x32c] sm:$0xff]
    %v5493 = vld [vmem:[%s16 + $0x334] sm:$0xff]
    %v5494 = vld [vmem:[%s16 + $0x33c] sm:$0xff]
    %v5495 = vld [vmem:[%s16 + $0x344] sm:$0xf]
    %v5496 = vld [vmem:[%s16 + $0x348] sm:$0xff]
    %v5497 = vld [vmem:[%s16 + $0x350] sm:$0xff]
    %v5498 = vld [vmem:[%s16 + $0x358] sm:$0xff]
    %v5499 = vld [vmem:[%s16 + $0x360] sm:$0xf]
    %v5500 = vld [vmem:[%s16 + $0x364] sm:$0xff]
    %v5501 = vld [vmem:[%s16 + $0x36c] sm:$0xff]
    %v5502 = vld [vmem:[%s16 + $0x374] sm:$0xff]
    %v5503 = vld [vmem:[%s16 + $0x37c] sm:$0xf]
    %v5504 = vld [vmem:[%s16 + $0x380] sm:$0xff]
    %v5505 = vld [vmem:[%s16 + $0x388] sm:$0xff]
    %v5506 = vld [vmem:[%s16 + $0x390] sm:$0xff]
    %v5507 = vld [vmem:[%s16 + $0x398] sm:$0xf]
    %v5508 = vld [vmem:[%s16 + $0x39c] sm:$0xff]
    %v5509 = vld [vmem:[%s16 + $0x3a4] sm:$0xff]
    %v5510 = vld [vmem:[%s16 + $0x3ac] sm:$0xff]
    %v5511 = vld [vmem:[%s16 + $0x3b4] sm:$0xf]
    %v5512 = vld [vmem:[%s16 + $0x3b8] sm:$0xff]
    %v5513 = vld [vmem:[%s16 + $0x3c0] sm:$0xff]
    %v5514 = vld [vmem:[%s16 + $0x3c8] sm:$0xff]
    %v5515 = vld [vmem:[%s16 + $0x3d0] sm:$0xf]
    %v5516 = vld [vmem:[%s16 + $0x3d4] sm:$0xff]
    %v5517 = vld [vmem:[%s16 + $0x3dc] sm:$0xff]
    %v5518 = vld [vmem:[%s16 + $0x3e4] sm:$0xff]
    %v5519 = vld [vmem:[%s16 + $0x3ec] sm:$0xf]
    %v5520 = vld [vmem:[%s16 + $0x3f0] sm:$0xff]
    %v5521 = vld [vmem:[%s16 + $0x3f8] sm:$0xff]
    %v5522 = vld [vmem:[%s16 + $0x400] sm:$0xff]
    %v5523 = vld [vmem:[%s16 + $0x408] sm:$0xf]
    %v5524 = vld [vmem:[%s16 + $0x40c] sm:$0xff]
    %v5525 = vld [vmem:[%s16 + $0x414] sm:$0xff]
    %v5526 = vld [vmem:[%s16 + $0x41c] sm:$0xff]
    %v5527 = vld [vmem:[%s16 + $0x424] sm:$0xf]
    %v5528 = vld [vmem:[%s16 + $0x428] sm:$0xff]
    %v5529 = vld [vmem:[%s16 + $0x430] sm:$0xff]
    %v5530 = vld [vmem:[%s16 + $0x438] sm:$0xff]
    %v5531 = vld [vmem:[%s16 + $0x440] sm:$0xf]
    %v5532 = vld [vmem:[%s16 + $0x444] sm:$0xff]
    %v5533 = vld [vmem:[%s16 + $0x44c] sm:$0xff]
    %v5534 = vld [vmem:[%s16 + $0x454] sm:$0xff]
    %v5535 = vld [vmem:[%s16 + $0x45c] sm:$0xf]
    %v5536 = vld [vmem:[%s16 + $0x460] sm:$0xff]
    %v5537 = vld [vmem:[%s16 + $0x468] sm:$0xff]
    %v5538 = vld [vmem:[%s16 + $0x470] sm:$0xff]
    %v5539 = vld [vmem:[%s16 + $0x478] sm:$0xf]
    %v5540 = vld [vmem:[%s16 + $0x47c] sm:$0xff]
    %v5541 = vld [vmem:[%s16 + $0x484] sm:$0xff]
    %v5542 = vld [vmem:[%s16 + $0x48c] sm:$0xff]
    %v5543 = vld [vmem:[%s16 + $0x494] sm:$0xf]
    %v5544 = vld [vmem:[%s16 + $0x498] sm:$0xff]
    %v5545 = vld [vmem:[%s16 + $0x4a0] sm:$0xff]
    %v5546 = vld [vmem:[%s16 + $0x4a8] sm:$0xff]
    %v5547 = vld [vmem:[%s16 + $0x4b0] sm:$0xf]
    %v5548 = vld [vmem:[%s16 + $0x4b4] sm:$0xff]
    %v5549 = vld [vmem:[%s16 + $0x4bc] sm:$0xff]
    %v5550 = vld [vmem:[%s16 + $0x4c4] sm:$0xff]
    %v5551 = vld [vmem:[%s16 + $0x4cc] sm:$0xf]
    %v5552 = vld [vmem:[%s16 + $0x4d0] sm:$0xff]
    %v5553 = vld [vmem:[%s16 + $0x4d8] sm:$0xff]
    %v5554 = vld [vmem:[%s16 + $0x4e0] sm:$0xff]
    %v5555 = vld [vmem:[%s16 + $0x4e8] sm:$0xf]
    %v5556 = vld [vmem:[%s16 + $0x4ec] sm:$0xff]
    %v5557 = vld [vmem:[%s16 + $0x4f4] sm:$0xff]
    %v5558 = vld [vmem:[%s16 + $0x4fc] sm:$0xff]
    %v5559 = vld [vmem:[%s16 + $0x504] sm:$0xf]
    %v5560 = vld [vmem:[%s16 + $0x508] sm:$0xff]
    %v5561 = vld [vmem:[%s16 + $0x510] sm:$0xff]
    %v5562 = vld [vmem:[%s16 + $0x518] sm:$0xff]
    %v5563 = vld [vmem:[%s16 + $0x520] sm:$0xf]
    %v5564 = vld [vmem:[%s16 + $0x524] sm:$0xff]
    %v5565 = vld [vmem:[%s16 + $0x52c] sm:$0xff]
    %v5566 = vld [vmem:[%s16 + $0x534] sm:$0xff]
    %v5567 = vld [vmem:[%s16 + $0x53c] sm:$0xf]
    %v5568 = vld [vmem:[%s16 + $0x540] sm:$0xff]
    %v5569 = vld [vmem:[%s16 + $0x548] sm:$0xff]
    %v5570 = vld [vmem:[%s16 + $0x550] sm:$0xff]
    %v5571 = vld [vmem:[%s16 + $0x558] sm:$0xf]
    %v5572 = vld [vmem:[%s16 + $0x55c] sm:$0xff]
    %v5573 = vld [vmem:[%s16 + $0x564] sm:$0xff]
    %v5574 = vld [vmem:[%s16 + $0x56c] sm:$0xff]
    %v5575 = vld [vmem:[%s16 + $0x574] sm:$0xf]
    %v5576 = vld [vmem:[%s17] sm:$0x7f]
    %v5578 = vperm.slane %v5576, 0
    %v5579 = vperm.slane %v5576, 1
    %v5580 = vperm.slane %v5576, 2
    %v5581 = vperm.slane %v5576, 3
    %v5582 = vperm.slane %v5576, 4
    %v5583 = vperm.slane %v5576, 5
    %v5584 = vperm.slane %v5576, 6
    %v5792 = vunpack.c.l.b16 %v5376
    %v5793 = vunpack.c.h.b16 %v5376
    %v5794 = vunpack.c.l.b16 %v5377
    %v5795 = vunpack.c.h.b16 %v5377
    %v5796 = vunpack.c.l.b16 %v5378
    %v5797 = vunpack.c.h.b16 %v5378
    %v5798 = vunpack.c.l.b16 %v5379
    %v5799 = vunpack.c.l.b16 %v5380
    %v5800 = vunpack.c.h.b16 %v5380
    %v5801 = vunpack.c.l.b16 %v5381
    %v5802 = vunpack.c.h.b16 %v5381
    %v5803 = vunpack.c.l.b16 %v5382
    %v5804 = vunpack.c.h.b16 %v5382
    %v5805 = vunpack.c.l.b16 %v5383
    %v5806 = vunpack.c.l.b16 %v5384
    %v5807 = vunpack.c.h.b16 %v5384
    %v5808 = vunpack.c.l.b16 %v5385
    %v5809 = vunpack.c.h.b16 %v5385
    %v5810 = vunpack.c.l.b16 %v5386
    %v5811 = vunpack.c.h.b16 %v5386
    %v5812 = vunpack.c.l.b16 %v5387
    %v5813 = vunpack.c.l.b16 %v5388
    %v5814 = vunpack.c.h.b16 %v5388
    %v5815 = vunpack.c.l.b16 %v5389
    %v5816 = vunpack.c.h.b16 %v5389
    %v5817 = vunpack.c.l.b16 %v5390
    %v5818 = vunpack.c.h.b16 %v5390
    %v5819 = vunpack.c.l.b16 %v5391
    %v5820 = vunpack.c.l.b16 %v5392
    %v5821 = vunpack.c.h.b16 %v5392
    %v5822 = vunpack.c.l.b16 %v5393
    %v5823 = vunpack.c.h.b16 %v5393
    %v5824 = vunpack.c.l.b16 %v5394
    %v5825 = vunpack.c.h.b16 %v5394
    %v5826 = vunpack.c.l.b16 %v5395
    %v5827 = vunpack.c.l.b16 %v5396
    %v5828 = vunpack.c.h.b16 %v5396
    %v5829 = vunpack.c.l.b16 %v5397
    %v5830 = vunpack.c.h.b16 %v5397
    %v5831 = vunpack.c.l.b16 %v5398
    %v5832 = vunpack.c.h.b16 %v5398
    %v5833 = vunpack.c.l.b16 %v5399
    %v5834 = vunpack.c.l.b16 %v5400
    %v5835 = vunpack.c.h.b16 %v5400
    %v5836 = vunpack.c.l.b16 %v5401
    %v5837 = vunpack.c.h.b16 %v5401
    %v5838 = vunpack.c.l.b16 %v5402
    %v5839 = vunpack.c.h.b16 %v5402
    %v5840 = vunpack.c.l.b16 %v5403
    %v5841 = vunpack.c.l.b16 %v5404
    %v5842 = vunpack.c.h.b16 %v5404
    %v5843 = vunpack.c.l.b16 %v5405
    %v5844 = vunpack.c.h.b16 %v5405
    %v5845 = vunpack.c.l.b16 %v5406
    %v5846 = vunpack.c.h.b16 %v5406
    %v5847 = vunpack.c.l.b16 %v5407
    %v5848 = vunpack.c.l.b16 %v5408
    %v5849 = vunpack.c.h.b16 %v5408
    %v5850 = vunpack.c.l.b16 %v5409
    %v5851 = vunpack.c.h.b16 %v5409
    %v5852 = vunpack.c.l.b16 %v5410
    %v5853 = vunpack.c.h.b16 %v5410
    %v5854 = vunpack.c.l.b16 %v5411
    %v5855 = vunpack.c.l.b16 %v5412
    %v5856 = vunpack.c.h.b16 %v5412
    %v5857 = vunpack.c.l.b16 %v5413
    %v5858 = vunpack.c.h.b16 %v5413
    %v5859 = vunpack.c.l.b16 %v5414
    %v5860 = vunpack.c.h.b16 %v5414
    %v5861 = vunpack.c.l.b16 %v5415
    %v5862 = vunpack.c.l.b16 %v5416
    %v5863 = vunpack.c.h.b16 %v5416
    %v5864 = vunpack.c.l.b16 %v5417
    %v5865 = vunpack.c.h.b16 %v5417
    %v5866 = vunpack.c.l.b16 %v5418
    %v5867 = vunpack.c.h.b16 %v5418
    %v5868 = vunpack.c.l.b16 %v5419
    %v5869 = vunpack.c.l.b16 %v5420
    %v5870 = vunpack.c.h.b16 %v5420
    %v5871 = vunpack.c.l.b16 %v5421
    %v5872 = vunpack.c.h.b16 %v5421
    %v5873 = vunpack.c.l.b16 %v5422
    %v5874 = vunpack.c.h.b16 %v5422
    %v5875 = vunpack.c.l.b16 %v5423
    %v5876 = vunpack.c.l.b16 %v5424
    %v5877 = vunpack.c.h.b16 %v5424
    %v5878 = vunpack.c.l.b16 %v5425
    %v5879 = vunpack.c.h.b16 %v5425
    %v5880 = vunpack.c.l.b16 %v5426
    %v5881 = vunpack.c.h.b16 %v5426
    %v5882 = vunpack.c.l.b16 %v5427
    %v5883 = vunpack.c.l.b16 %v5428
    %v5884 = vunpack.c.h.b16 %v5428
    %v5885 = vunpack.c.l.b16 %v5429
    %v5886 = vunpack.c.h.b16 %v5429
    %v5887 = vunpack.c.l.b16 %v5430
    %v5888 = vunpack.c.h.b16 %v5430
    %v5889 = vunpack.c.l.b16 %v5431
    %v5890 = vunpack.c.l.b16 %v5432
    %v5891 = vunpack.c.h.b16 %v5432
    %v5892 = vunpack.c.l.b16 %v5433
    %v5893 = vunpack.c.h.b16 %v5433
    %v5894 = vunpack.c.l.b16 %v5434
    %v5895 = vunpack.c.h.b16 %v5434
    %v5896 = vunpack.c.l.b16 %v5435
    %v5897 = vunpack.c.l.b16 %v5436
    %v5898 = vunpack.c.h.b16 %v5436
    %v5899 = vunpack.c.l.b16 %v5437
    %v5900 = vunpack.c.h.b16 %v5437
    %v5901 = vunpack.c.l.b16 %v5438
    %v5902 = vunpack.c.h.b16 %v5438
    %v5903 = vunpack.c.l.b16 %v5439
    %v5904 = vunpack.c.l.b16 %v5440
    %v5905 = vunpack.c.h.b16 %v5440
    %v5906 = vunpack.c.l.b16 %v5441
    %v5907 = vunpack.c.h.b16 %v5441
    %v5908 = vunpack.c.l.b16 %v5442
    %v5909 = vunpack.c.h.b16 %v5442
    %v5910 = vunpack.c.l.b16 %v5443
    %v5911 = vunpack.c.l.b16 %v5444
    %v5912 = vunpack.c.h.b16 %v5444
    %v5913 = vunpack.c.l.b16 %v5445
    %v5914 = vunpack.c.h.b16 %v5445
    %v5915 = vunpack.c.l.b16 %v5446
    %v5916 = vunpack.c.h.b16 %v5446
    %v5917 = vunpack.c.l.b16 %v5447
    %v5918 = vunpack.c.l.b16 %v5448
    %v5919 = vunpack.c.h.b16 %v5448
    %v5920 = vunpack.c.l.b16 %v5449
    %v5921 = vunpack.c.h.b16 %v5449
    %v5922 = vunpack.c.l.b16 %v5450
    %v5923 = vunpack.c.h.b16 %v5450
    %v5924 = vunpack.c.l.b16 %v5451
    %v5925 = vunpack.c.l.b16 %v5452
    %v5926 = vunpack.c.h.b16 %v5452
    %v5927 = vunpack.c.l.b16 %v5453
    %v5928 = vunpack.c.h.b16 %v5453
    %v5929 = vunpack.c.l.b16 %v5454
    %v5930 = vunpack.c.h.b16 %v5454
    %v5931 = vunpack.c.l.b16 %v5455
    %v5932 = vunpack.c.l.b16 %v5456
    %v5933 = vunpack.c.h.b16 %v5456
    %v5934 = vunpack.c.l.b16 %v5457
    %v5935 = vunpack.c.h.b16 %v5457
    %v5936 = vunpack.c.l.b16 %v5458
    %v5937 = vunpack.c.h.b16 %v5458
    %v5938 = vunpack.c.l.b16 %v5459
    %v5939 = vunpack.c.l.b16 %v5460
    %v5940 = vunpack.c.h.b16 %v5460
    %v5941 = vunpack.c.l.b16 %v5461
    %v5942 = vunpack.c.h.b16 %v5461
    %v5943 = vunpack.c.l.b16 %v5462
    %v5944 = vunpack.c.h.b16 %v5462
    %v5945 = vunpack.c.l.b16 %v5463
    %v5946 = vunpack.c.l.b16 %v5464
    %v5947 = vunpack.c.h.b16 %v5464
    %v5948 = vunpack.c.l.b16 %v5465
    %v5949 = vunpack.c.h.b16 %v5465
    %v5950 = vunpack.c.l.b16 %v5466
    %v5951 = vunpack.c.h.b16 %v5466
    %v5952 = vunpack.c.l.b16 %v5467
    %v5953 = vunpack.c.l.b16 %v5468
    %v5954 = vunpack.c.h.b16 %v5468
    %v5955 = vunpack.c.l.b16 %v5469
    %v5956 = vunpack.c.h.b16 %v5469
    %v5957 = vunpack.c.l.b16 %v5470
    %v5958 = vunpack.c.h.b16 %v5470
    %v5959 = vunpack.c.l.b16 %v5471
    %v5960 = vunpack.c.l.b16 %v5472
    %v5961 = vunpack.c.h.b16 %v5472
    %v5962 = vunpack.c.l.b16 %v5473
    %v5963 = vunpack.c.h.b16 %v5473
    %v5964 = vunpack.c.l.b16 %v5474
    %v5965 = vunpack.c.h.b16 %v5474
    %v5966 = vunpack.c.l.b16 %v5475
    %v5967 = vunpack.c.l.b16 %v5476
    %v5968 = vunpack.c.h.b16 %v5476
    %v5969 = vunpack.c.l.b16 %v5477
    %v5970 = vunpack.c.h.b16 %v5477
    %v5971 = vunpack.c.l.b16 %v5478
    %v5972 = vunpack.c.h.b16 %v5478
    %v5973 = vunpack.c.l.b16 %v5479
    %v5974 = vunpack.c.l.b16 %v5480
    %v5975 = vunpack.c.h.b16 %v5480
    %v5976 = vunpack.c.l.b16 %v5481
    %v5977 = vunpack.c.h.b16 %v5481
    %v5978 = vunpack.c.l.b16 %v5482
    %v5979 = vunpack.c.h.b16 %v5482
    %v5980 = vunpack.c.l.b16 %v5483
    %v5981 = vunpack.c.l.b16 %v5484
    %v5982 = vunpack.c.h.b16 %v5484
    %v5983 = vunpack.c.l.b16 %v5485
    %v5984 = vunpack.c.h.b16 %v5485
    %v5985 = vunpack.c.l.b16 %v5486
    %v5986 = vunpack.c.h.b16 %v5486
    %v5987 = vunpack.c.l.b16 %v5487
    %v5988 = vunpack.c.l.b16 %v5488
    %v5989 = vunpack.c.h.b16 %v5488
    %v5990 = vunpack.c.l.b16 %v5489
    %v5991 = vunpack.c.h.b16 %v5489
    %v5992 = vunpack.c.l.b16 %v5490
    %v5993 = vunpack.c.h.b16 %v5490
    %v5994 = vunpack.c.l.b16 %v5491
    %v5995 = vunpack.c.l.b16 %v5492
    %v5996 = vunpack.c.h.b16 %v5492
    %v5997 = vunpack.c.l.b16 %v5493
    %v5998 = vunpack.c.h.b16 %v5493
    %v5999 = vunpack.c.l.b16 %v5494
    %v6000 = vunpack.c.h.b16 %v5494
    %v6001 = vunpack.c.l.b16 %v5495
    %v6002 = vunpack.c.l.b16 %v5496
    %v6003 = vunpack.c.h.b16 %v5496
    %v6004 = vunpack.c.l.b16 %v5497
    %v6005 = vunpack.c.h.b16 %v5497
    %v6006 = vunpack.c.l.b16 %v5498
    %v6007 = vunpack.c.h.b16 %v5498
    %v6008 = vunpack.c.l.b16 %v5499
    %v6009 = vunpack.c.l.b16 %v5500
    %v6010 = vunpack.c.h.b16 %v5500
    %v6011 = vunpack.c.l.b16 %v5501
    %v6012 = vunpack.c.h.b16 %v5501
    %v6013 = vunpack.c.l.b16 %v5502
    %v6014 = vunpack.c.h.b16 %v5502
    %v6015 = vunpack.c.l.b16 %v5503
    %v6016 = vunpack.c.l.b16 %v5504
    %v6017 = vunpack.c.h.b16 %v5504
    %v6018 = vunpack.c.l.b16 %v5505
    %v6019 = vunpack.c.h.b16 %v5505
    %v6020 = vunpack.c.l.b16 %v5506
    %v6021 = vunpack.c.h.b16 %v5506
    %v6022 = vunpack.c.l.b16 %v5507
    %v6023 = vunpack.c.l.b16 %v5508
    %v6024 = vunpack.c.h.b16 %v5508
    %v6025 = vunpack.c.l.b16 %v5509
    %v6026 = vunpack.c.h.b16 %v5509
    %v6027 = vunpack.c.l.b16 %v5510
    %v6028 = vunpack.c.h.b16 %v5510
    %v6029 = vunpack.c.l.b16 %v5511
    %v6030 = vunpack.c.l.b16 %v5512
    %v6031 = vunpack.c.h.b16 %v5512
    %v6032 = vunpack.c.l.b16 %v5513
    %v6033 = vunpack.c.h.b16 %v5513
    %v6034 = vunpack.c.l.b16 %v5514
    %v6035 = vunpack.c.h.b16 %v5514
    %v6036 = vunpack.c.l.b16 %v5515
    %v6037 = vunpack.c.l.b16 %v5516
    %v6038 = vunpack.c.h.b16 %v5516
    %v6039 = vunpack.c.l.b16 %v5517
    %v6040 = vunpack.c.h.b16 %v5517
    %v6041 = vunpack.c.l.b16 %v5518
    %v6042 = vunpack.c.h.b16 %v5518
    %v6043 = vunpack.c.l.b16 %v5519
    %v6044 = vunpack.c.l.b16 %v5520
    %v6045 = vunpack.c.h.b16 %v5520
    %v6046 = vunpack.c.l.b16 %v5521
    %v6047 = vunpack.c.h.b16 %v5521
    %v6048 = vunpack.c.l.b16 %v5522
    %v6049 = vunpack.c.h.b16 %v5522
    %v6050 = vunpack.c.l.b16 %v5523
    %v6051 = vunpack.c.l.b16 %v5524
    %v6052 = vunpack.c.h.b16 %v5524
    %v6053 = vunpack.c.l.b16 %v5525
    %v6054 = vunpack.c.h.b16 %v5525
    %v6055 = vunpack.c.l.b16 %v5526
    %v6056 = vunpack.c.h.b16 %v5526
    %v6057 = vunpack.c.l.b16 %v5527
    %v6058 = vunpack.c.l.b16 %v5528
    %v6059 = vunpack.c.h.b16 %v5528
    %v6060 = vunpack.c.l.b16 %v5529
    %v6061 = vunpack.c.h.b16 %v5529
    %v6062 = vunpack.c.l.b16 %v5530
    %v6063 = vunpack.c.h.b16 %v5530
    %v6064 = vunpack.c.l.b16 %v5531
    %v6065 = vunpack.c.l.b16 %v5532
    %v6066 = vunpack.c.h.b16 %v5532
    %v6067 = vunpack.c.l.b16 %v5533
    %v6068 = vunpack.c.h.b16 %v5533
    %v6069 = vunpack.c.l.b16 %v5534
    %v6070 = vunpack.c.h.b16 %v5534
    %v6071 = vunpack.c.l.b16 %v5535
    %v6072 = vunpack.c.l.b16 %v5536
    %v6073 = vunpack.c.h.b16 %v5536
    %v6074 = vunpack.c.l.b16 %v5537
    %v6075 = vunpack.c.h.b16 %v5537
    %v6076 = vunpack.c.l.b16 %v5538
    %v6077 = vunpack.c.h.b16 %v5538
    %v6078 = vunpack.c.l.b16 %v5539
    %v6079 = vunpack.c.l.b16 %v5540
    %v6080 = vunpack.c.h.b16 %v5540
    %v6081 = vunpack.c.l.b16 %v5541
    %v6082 = vunpack.c.h.b16 %v5541
    %v6083 = vunpack.c.l.b16 %v5542
    %v6084 = vunpack.c.h.b16 %v5542
    %v6085 = vunpack.c.l.b16 %v5543
    %v6086 = vunpack.c.l.b16 %v5544
    %v6087 = vunpack.c.h.b16 %v5544
    %v6088 = vunpack.c.l.b16 %v5545
    %v6089 = vunpack.c.h.b16 %v5545
    %v6090 = vunpack.c.l.b16 %v5546
    %v6091 = vunpack.c.h.b16 %v5546
    %v6092 = vunpack.c.l.b16 %v5547
    %v6093 = vunpack.c.l.b16 %v5548
    %v6094 = vunpack.c.h.b16 %v5548
    %v6095 = vunpack.c.l.b16 %v5549
    %v6096 = vunpack.c.h.b16 %v5549
    %v6097 = vunpack.c.l.b16 %v5550
    %v6098 = vunpack.c.h.b16 %v5550
    %v6099 = vunpack.c.l.b16 %v5551
    %v6100 = vunpack.c.l.b16 %v5552
    %v6101 = vunpack.c.h.b16 %v5552
    %v6102 = vunpack.c.l.b16 %v5553
    %v6103 = vunpack.c.h.b16 %v5553
    %v6104 = vunpack.c.l.b16 %v5554
    %v6105 = vunpack.c.h.b16 %v5554
    %v6106 = vunpack.c.l.b16 %v5555
    %v6107 = vunpack.c.l.b16 %v5556
    %v6108 = vunpack.c.h.b16 %v5556
    %v6109 = vunpack.c.l.b16 %v5557
    %v6110 = vunpack.c.h.b16 %v5557
    %v6111 = vunpack.c.l.b16 %v5558
    %v6112 = vunpack.c.h.b16 %v5558
    %v6113 = vunpack.c.l.b16 %v5559
    %v6114 = vunpack.c.l.b16 %v5560
    %v6115 = vunpack.c.h.b16 %v5560
    %v6116 = vunpack.c.l.b16 %v5561
    %v6117 = vunpack.c.h.b16 %v5561
    %v6118 = vunpack.c.l.b16 %v5562
    %v6119 = vunpack.c.h.b16 %v5562
    %v6120 = vunpack.c.l.b16 %v5563
    %v6121 = vunpack.c.l.b16 %v5564
    %v6122 = vunpack.c.h.b16 %v5564
    %v6123 = vunpack.c.l.b16 %v5565
    %v6124 = vunpack.c.h.b16 %v5565
    %v6125 = vunpack.c.l.b16 %v5566
    %v6126 = vunpack.c.h.b16 %v5566
    %v6127 = vunpack.c.l.b16 %v5567
    %v6128 = vunpack.c.l.b16 %v5568
    %v6129 = vunpack.c.h.b16 %v5568
    %v6130 = vunpack.c.l.b16 %v5569
    %v6131 = vunpack.c.h.b16 %v5569
    %v6132 = vunpack.c.l.b16 %v5570
    %v6133 = vunpack.c.h.b16 %v5570
    %v6134 = vunpack.c.l.b16 %v5571
    %v6135 = vunpack.c.l.b16 %v5572
    %v6136 = vunpack.c.h.b16 %v5572
    %v6137 = vunpack.c.l.b16 %v5573
    %v6138 = vunpack.c.h.b16 %v5573
    %v6139 = vunpack.c.l.b16 %v5574
    %v6140 = vunpack.c.h.b16 %v5574
    %v6141 = vunpack.c.l.b16 %v5575
    %v6142 = vpack.c.b16 %v5799, %v5792
    %v6143 = vpack.c.b16 %v5800, %v5793
    %v6144 = vpack.c.b16 %v5801, %v5794
    %v6145 = vpack.c.b16 %v5802, %v5795
    %v6146 = vpack.c.b16 %v5803, %v5796
    %v6147 = vpack.c.b16 %v5804, %v5797
    %v6148 = vpack.c.b16 %v5805, %v5798
    %v6149 = vpack.c.b16 %v5813, %v5806
    %v6150 = vpack.c.b16 %v5814, %v5807
    %v6151 = vpack.c.b16 %v5815, %v5808
    %v6152 = vpack.c.b16 %v5816, %v5809
    %v6153 = vpack.c.b16 %v5817, %v5810
    %v6154 = vpack.c.b16 %v5818, %v5811
    %v6155 = vpack.c.b16 %v5819, %v5812
    %v6156 = vpack.c.b16 %v5827, %v5820
    %v6157 = vpack.c.b16 %v5828, %v5821
    %v6158 = vpack.c.b16 %v5829, %v5822
    %v6159 = vpack.c.b16 %v5830, %v5823
    %v6160 = vpack.c.b16 %v5831, %v5824
    %v6161 = vpack.c.b16 %v5832, %v5825
    %v6162 = vpack.c.b16 %v5833, %v5826
    %v6163 = vpack.c.b16 %v5841, %v5834
    %v6164 = vpack.c.b16 %v5842, %v5835
    %v6165 = vpack.c.b16 %v5843, %v5836
    %v6166 = vpack.c.b16 %v5844, %v5837
    %v6167 = vpack.c.b16 %v5845, %v5838
    %v6168 = vpack.c.b16 %v5846, %v5839
    %v6169 = vpack.c.b16 %v5847, %v5840
    %v6170 = vpack.c.b16 %v5855, %v5848
    %v6171 = vpack.c.b16 %v5856, %v5849
    %v6172 = vpack.c.b16 %v5857, %v5850
    %v6173 = vpack.c.b16 %v5858, %v5851
    %v6174 = vpack.c.b16 %v5859, %v5852
    %v6175 = vpack.c.b16 %v5860, %v5853
    %v6176 = vpack.c.b16 %v5861, %v5854
    %v6177 = vpack.c.b16 %v5869, %v5862
    %v6178 = vpack.c.b16 %v5870, %v5863
    %v6179 = vpack.c.b16 %v5871, %v5864
    %v6180 = vpack.c.b16 %v5872, %v5865
    %v6181 = vpack.c.b16 %v5873, %v5866
    %v6182 = vpack.c.b16 %v5874, %v5867
    %v6183 = vpack.c.b16 %v5875, %v5868
    %v6184 = vpack.c.b16 %v5883, %v5876
    %v6185 = vpack.c.b16 %v5884, %v5877
    %v6186 = vpack.c.b16 %v5885, %v5878
    %v6187 = vpack.c.b16 %v5886, %v5879
    %v6188 = vpack.c.b16 %v5887, %v5880
    %v6189 = vpack.c.b16 %v5888, %v5881
    %v6190 = vpack.c.b16 %v5889, %v5882
    %v6191 = vpack.c.b16 %v5897, %v5890
    %v6192 = vpack.c.b16 %v5898, %v5891
    %v6193 = vpack.c.b16 %v5899, %v5892
    %v6194 = vpack.c.b16 %v5900, %v5893
    %v6195 = vpack.c.b16 %v5901, %v5894
    %v6196 = vpack.c.b16 %v5902, %v5895
    %v6197 = vpack.c.b16 %v5903, %v5896
    %v6198 = vpack.c.b16 %v5911, %v5904
    %v6199 = vpack.c.b16 %v5912, %v5905
    %v6200 = vpack.c.b16 %v5913, %v5906
    %v6201 = vpack.c.b16 %v5914, %v5907
    %v6202 = vpack.c.b16 %v5915, %v5908
    %v6203 = vpack.c.b16 %v5916, %v5909
    %v6204 = vpack.c.b16 %v5917, %v5910
    %v6205 = vpack.c.b16 %v5925, %v5918
    %v6206 = vpack.c.b16 %v5926, %v5919
    %v6207 = vpack.c.b16 %v5927, %v5920
    %v6208 = vpack.c.b16 %v5928, %v5921
    %v6209 = vpack.c.b16 %v5929, %v5922
    %v6210 = vpack.c.b16 %v5930, %v5923
    %v6211 = vpack.c.b16 %v5931, %v5924
    %v6212 = vpack.c.b16 %v5939, %v5932
    %v6213 = vpack.c.b16 %v5940, %v5933
    %v6214 = vpack.c.b16 %v5941, %v5934
    %v6215 = vpack.c.b16 %v5942, %v5935
    %v6216 = vpack.c.b16 %v5943, %v5936
    %v6217 = vpack.c.b16 %v5944, %v5937
    %v6218 = vpack.c.b16 %v5945, %v5938
    %v6219 = vpack.c.b16 %v5953, %v5946
    %v6220 = vpack.c.b16 %v5954, %v5947
    %v6221 = vpack.c.b16 %v5955, %v5948
    %v6222 = vpack.c.b16 %v5956, %v5949
    %v6223 = vpack.c.b16 %v5957, %v5950
    %v6224 = vpack.c.b16 %v5958, %v5951
    %v6225 = vpack.c.b16 %v5959, %v5952
    %v6226 = vpack.c.b16 %v5967, %v5960
    %v6227 = vpack.c.b16 %v5968, %v5961
    %v6228 = vpack.c.b16 %v5969, %v5962
    %v6229 = vpack.c.b16 %v5970, %v5963
    %v6230 = vpack.c.b16 %v5971, %v5964
    %v6231 = vpack.c.b16 %v5972, %v5965
    %v6232 = vpack.c.b16 %v5973, %v5966
    %v6233 = vpack.c.b16 %v5981, %v5974
    %v6234 = vpack.c.b16 %v5982, %v5975
    %v6235 = vpack.c.b16 %v5983, %v5976
    %v6236 = vpack.c.b16 %v5984, %v5977
    %v6237 = vpack.c.b16 %v5985, %v5978
    %v6238 = vpack.c.b16 %v5986, %v5979
    %v6239 = vpack.c.b16 %v5987, %v5980
    %v6240 = vpack.c.b16 %v5995, %v5988
    %v6241 = vpack.c.b16 %v5996, %v5989
    %v6242 = vpack.c.b16 %v5997, %v5990
    %v6243 = vpack.c.b16 %v5998, %v5991
    %v6244 = vpack.c.b16 %v5999, %v5992
    %v6245 = vpack.c.b16 %v6000, %v5993
    %v6246 = vpack.c.b16 %v6001, %v5994
    %v6247 = vpack.c.b16 %v6009, %v6002
    %v6248 = vpack.c.b16 %v6010, %v6003
    %v6249 = vpack.c.b16 %v6011, %v6004
    %v6250 = vpack.c.b16 %v6012, %v6005
    %v6251 = vpack.c.b16 %v6013, %v6006
    %v6252 = vpack.c.b16 %v6014, %v6007
    %v6253 = vpack.c.b16 %v6015, %v6008
    %v6254 = vpack.c.b16 %v6023, %v6016
    %v6255 = vpack.c.b16 %v6024, %v6017
    %v6256 = vpack.c.b16 %v6025, %v6018
    %v6257 = vpack.c.b16 %v6026, %v6019
    %v6258 = vpack.c.b16 %v6027, %v6020
    %v6259 = vpack.c.b16 %v6028, %v6021
    %v6260 = vpack.c.b16 %v6029, %v6022
    %v6261 = vpack.c.b16 %v6037, %v6030
    %v6262 = vpack.c.b16 %v6038, %v6031
    %v6263 = vpack.c.b16 %v6039, %v6032
    %v6264 = vpack.c.b16 %v6040, %v6033
    %v6265 = vpack.c.b16 %v6041, %v6034
    %v6266 = vpack.c.b16 %v6042, %v6035
    %v6267 = vpack.c.b16 %v6043, %v6036
    %v6268 = vpack.c.b16 %v6051, %v6044
    %v6269 = vpack.c.b16 %v6052, %v6045
    %v6270 = vpack.c.b16 %v6053, %v6046
    %v6271 = vpack.c.b16 %v6054, %v6047
    %v6272 = vpack.c.b16 %v6055, %v6048
    %v6273 = vpack.c.b16 %v6056, %v6049
    %v6274 = vpack.c.b16 %v6057, %v6050
    %v6275 = vpack.c.b16 %v6065, %v6058
    %v6276 = vpack.c.b16 %v6066, %v6059
    %v6277 = vpack.c.b16 %v6067, %v6060
    %v6278 = vpack.c.b16 %v6068, %v6061
    %v6279 = vpack.c.b16 %v6069, %v6062
    %v6280 = vpack.c.b16 %v6070, %v6063
    %v6281 = vpack.c.b16 %v6071, %v6064
    %v6282 = vpack.c.b16 %v6079, %v6072
    %v6283 = vpack.c.b16 %v6080, %v6073
    %v6284 = vpack.c.b16 %v6081, %v6074
    %v6285 = vpack.c.b16 %v6082, %v6075
    %v6286 = vpack.c.b16 %v6083, %v6076
    %v6287 = vpack.c.b16 %v6084, %v6077
    %v6288 = vpack.c.b16 %v6085, %v6078
    %v6289 = vpack.c.b16 %v6093, %v6086
    %v6290 = vpack.c.b16 %v6094, %v6087
    %v6291 = vpack.c.b16 %v6095, %v6088
    %v6292 = vpack.c.b16 %v6096, %v6089
    %v6293 = vpack.c.b16 %v6097, %v6090
    %v6294 = vpack.c.b16 %v6098, %v6091
    %v6295 = vpack.c.b16 %v6099, %v6092
    %v6296 = vpack.c.b16 %v6107, %v6100
    %v6297 = vpack.c.b16 %v6108, %v6101
    %v6298 = vpack.c.b16 %v6109, %v6102
    %v6299 = vpack.c.b16 %v6110, %v6103
    %v6300 = vpack.c.b16 %v6111, %v6104
    %v6301 = vpack.c.b16 %v6112, %v6105
    %v6302 = vpack.c.b16 %v6113, %v6106
    %v6303 = vpack.c.b16 %v6121, %v6114
    %v6304 = vpack.c.b16 %v6122, %v6115
    %v6305 = vpack.c.b16 %v6123, %v6116
    %v6306 = vpack.c.b16 %v6124, %v6117
    %v6307 = vpack.c.b16 %v6125, %v6118
    %v6308 = vpack.c.b16 %v6126, %v6119
    %v6309 = vpack.c.b16 %v6127, %v6120
    %v6310 = vpack.c.b16 %v6135, %v6128
    %v6311 = vpack.c.b16 %v6136, %v6129
    %v6312 = vpack.c.b16 %v6137, %v6130
    %v6313 = vpack.c.b16 %v6138, %v6131
    %v6314 = vpack.c.b16 %v6139, %v6132
    %v6315 = vpack.c.b16 %v6140, %v6133
    %v6316 = vpack.c.b16 %v6141, %v6134
    %v6493 = vsel %vm1308, %v5375, 0
    %6495 = vmatpush.bf16.msra.mxu0 %v6191
    %6496 = vmatpush.bf16.msra.mxu0 %v6184
    %6497 = vmatpush.bf16.msra.mxu0 %v6177
    %6498 = vmatpush.bf16.msra.mxu0 %v6170
    %6499 = vmatpush.bf16.msra.mxu0 %v6163
    %6500 = vmatpush.bf16.msra.mxu0 %v6156
    %6501 = vmatpush.bf16.msra.mxu0 %v6149
    %6502 = vmatpush.bf16.msra.mxu0 %v6142
    %6503 = vmatmul.bf16.gmra.mxu0 %v5372
    %v6504 = vpop.f32.mrf.mxu0
    %v6505 = vadd.f32 %v5578, %v6504
    %v6506 = vpop.f32.mrf.mxu0
    %6507 = vdwg.mxu0
    %6508 = vmatpush.bf16.msra.mxu0 %v6247
    %6509 = vmatpush.bf16.msra.mxu0 %v6240
    %6510 = vmatpush.bf16.msra.mxu0 %v6233
    %6511 = vmatpush.bf16.msra.mxu0 %v6226
    %6512 = vmatpush.bf16.msra.mxu0 %v6219
    %6513 = vmatpush.bf16.msra.mxu0 %v6212
    %6514 = vmatpush.bf16.msra.mxu0 %v6205
    %6515 = vmatpush.bf16.msra.mxu0 %v6198
    %6516 = vmatmul.bf16.gmra.mxu0 %v5373
    %v6517 = vpop.f32.mrf.mxu0
    %v6518 = vadd.f32 %v6505, %v6517
    %v6519 = vpop.f32.mrf.mxu0
    %6520 = vdwg.mxu0
    %6521 = vmatpush.bf16.msra.mxu0 %v6303
    %6522 = vmatpush.bf16.msra.mxu0 %v6296
    %6523 = vmatpush.bf16.msra.mxu0 %v6289
    %6524 = vmatpush.bf16.msra.mxu0 %v6282
    %6525 = vmatpush.bf16.msra.mxu0 %v6275
    %6526 = vmatpush.bf16.msra.mxu0 %v6268
    %6527 = vmatpush.bf16.msra.mxu0 %v6261
    %6528 = vmatpush.bf16.msra.mxu0 %v6254
    %6529 = vmatmul.bf16.gmra.mxu0 %v5374
    %v6530 = vpop.f32.mrf.mxu0
    %v6531 = vadd.f32 %v6518, %v6530
    %v6532 = vpop.f32.mrf.mxu0
    %6533 = vdwg.mxu0
    %6534 = vmatpush.bf16.msra.mxu0 0
    %6535 = vmatpush.bf16.msra.mxu0 0
    %6536 = vmatpush.bf16.msra.mxu0 0
    %6537 = vmatpush.bf16.msra.mxu0 0
    %6538 = vmatpush.bf16.msra.mxu0 0
    %6539 = vmatpush.bf16.msra.mxu0 0
    %6540 = vmatpush.bf16.msra.mxu0 0
    %6541 = vmatpush.bf16.msra.mxu0 %v6310
    %6542 = vmatmul.bf16.gmra.mxu0 %v6493
    %v6543 = vpop.f32.mrf.mxu0
    %v6544 = vadd.f32 %v6531, %v6543
    %v6545 = vpop.f32.mrf.mxu0
    %6546 = vdwg.mxu0
    %6547 = vmatpush.bf16.msra.mxu0 %v6192
    %6548 = vmatpush.bf16.msra.mxu0 %v6185
    %6549 = vmatpush.bf16.msra.mxu0 %v6178
    %6550 = vmatpush.bf16.msra.mxu0 %v6171
    %6551 = vmatpush.bf16.msra.mxu0 %v6164
    %6552 = vmatpush.bf16.msra.mxu0 %v6157
    %6553 = vmatpush.bf16.msra.mxu0 %v6150
    %6554 = vmatpush.bf16.msra.mxu0 %v6143
    %6555 = vmatmul.bf16.gmra.mxu0 %v5372
    %v6556 = vpop.f32.mrf.mxu0
    %v6557 = vadd.f32 %v5579, %v6556
    %v6558 = vpop.f32.mrf.mxu0
    %6559 = vdwg.mxu0
    %6560 = vmatpush.bf16.msra.mxu0 %v6248
    %6561 = vmatpush.bf16.msra.mxu0 %v6241
    %6562 = vmatpush.bf16.msra.mxu0 %v6234
    %6563 = vmatpush.bf16.msra.mxu0 %v6227
    %6564 = vmatpush.bf16.msra.mxu0 %v6220
    %6565 = vmatpush.bf16.msra.mxu0 %v6213
    %6566 = vmatpush.bf16.msra.mxu0 %v6206
    %6567 = vmatpush.bf16.msra.mxu0 %v6199
    %6568 = vmatmul.bf16.gmra.mxu0 %v5373
    %v6569 = vpop.f32.mrf.mxu0
    %v6570 = vadd.f32 %v6557, %v6569
    %v6571 = vpop.f32.mrf.mxu0
    %6572 = vdwg.mxu0
    %6573 = vmatpush.bf16.msra.mxu0 %v6304
    %6574 = vmatpush.bf16.msra.mxu0 %v6297
    %6575 = vmatpush.bf16.msra.mxu0 %v6290
    %6576 = vmatpush.bf16.msra.mxu0 %v6283
    %6577 = vmatpush.bf16.msra.mxu0 %v6276
    %6578 = vmatpush.bf16.msra.mxu0 %v6269
    %6579 = vmatpush.bf16.msra.mxu0 %v6262
    %6580 = vmatpush.bf16.msra.mxu0 %v6255
    %6581 = vmatmul.bf16.gmra.mxu0 %v5374
    %v6582 = vpop.f32.mrf.mxu0
    %v6583 = vadd.f32 %v6570, %v6582
    %v6584 = vpop.f32.mrf.mxu0
    %6585 = vdwg.mxu0
    %6586 = vmatpush.bf16.msra.mxu0 0
    %6587 = vmatpush.bf16.msra.mxu0 0
    %6588 = vmatpush.bf16.msra.mxu0 0
    %6589 = vmatpush.bf16.msra.mxu0 0
    %6590 = vmatpush.bf16.msra.mxu0 0
    %6591 = vmatpush.bf16.msra.mxu0 0
    %6592 = vmatpush.bf16.msra.mxu0 0
    %6593 = vmatpush.bf16.msra.mxu0 %v6311
    %6594 = vmatmul.bf16.gmra.mxu0 %v6493
    %v6595 = vpop.f32.mrf.mxu0
    %v6596 = vadd.f32 %v6583, %v6595
    %v6597 = vpop.f32.mrf.mxu0
    %6598 = vdwg.mxu0
    %6599 = vmatpush.bf16.msra.mxu0 %v6193
    %6600 = vmatpush.bf16.msra.mxu0 %v6186
    %6601 = vmatpush.bf16.msra.mxu0 %v6179
    %6602 = vmatpush.bf16.msra.mxu0 %v6172
    %6603 = vmatpush.bf16.msra.mxu0 %v6165
    %6604 = vmatpush.bf16.msra.mxu0 %v6158
    %6605 = vmatpush.bf16.msra.mxu0 %v6151
    %6606 = vmatpush.bf16.msra.mxu0 %v6144
    %6607 = vmatmul.bf16.gmra.mxu0 %v5372
    %v6608 = vpop.f32.mrf.mxu0
    %v6609 = vadd.f32 %v5580, %v6608
    %v6610 = vpop.f32.mrf.mxu0
    %6611 = vdwg.mxu0
    %6612 = vmatpush.bf16.msra.mxu0 %v6249
    %6613 = vmatpush.bf16.msra.mxu0 %v6242
    %6614 = vmatpush.bf16.msra.mxu0 %v6235
    %6615 = vmatpush.bf16.msra.mxu0 %v6228
    %6616 = vmatpush.bf16.msra.mxu0 %v6221
    %6617 = vmatpush.bf16.msra.mxu0 %v6214
    %6618 = vmatpush.bf16.msra.mxu0 %v6207
    %6619 = vmatpush.bf16.msra.mxu0 %v6200
    %6620 = vmatmul.bf16.gmra.mxu0 %v5373
    %v6621 = vpop.f32.mrf.mxu0
    %v6622 = vadd.f32 %v6609, %v6621
    %v6623 = vpop.f32.mrf.mxu0
    %6624 = vdwg.mxu0
    %6625 = vmatpush.bf16.msra.mxu0 %v6305
    %6626 = vmatpush.bf16.msra.mxu0 %v6298
    %6627 = vmatpush.bf16.msra.mxu0 %v6291
    %6628 = vmatpush.bf16.msra.mxu0 %v6284
    %6629 = vmatpush.bf16.msra.mxu0 %v6277
    %6630 = vmatpush.bf16.msra.mxu0 %v6270
    %6631 = vmatpush.bf16.msra.mxu0 %v6263
    %6632 = vmatpush.bf16.msra.mxu0 %v6256
    %6633 = vmatmul.bf16.gmra.mxu0 %v5374
    %v6634 = vpop.f32.mrf.mxu0
    %v6635 = vadd.f32 %v6622, %v6634
    %v6636 = vpop.f32.mrf.mxu0
    %6637 = vdwg.mxu0
    %6638 = vmatpush.bf16.msra.mxu0 0
    %6639 = vmatpush.bf16.msra.mxu0 0
    %6640 = vmatpush.bf16.msra.mxu0 0
    %6641 = vmatpush.bf16.msra.mxu0 0
    %6642 = vmatpush.bf16.msra.mxu0 0
    %6643 = vmatpush.bf16.msra.mxu0 0
    %6644 = vmatpush.bf16.msra.mxu0 0
    %6645 = vmatpush.bf16.msra.mxu0 %v6312
    %6646 = vmatmul.bf16.gmra.mxu0 %v6493
    %v6647 = vpop.f32.mrf.mxu0
    %v6648 = vadd.f32 %v6635, %v6647
    %v6649 = vpop.f32.mrf.mxu0
    %6650 = vdwg.mxu0
    %6651 = vmatpush.bf16.msra.mxu0 %v6194
    %6652 = vmatpush.bf16.msra.mxu0 %v6187
    %6653 = vmatpush.bf16.msra.mxu0 %v6180
    %6654 = vmatpush.bf16.msra.mxu0 %v6173
    %6655 = vmatpush.bf16.msra.mxu0 %v6166
    %6656 = vmatpush.bf16.msra.mxu0 %v6159
    %6657 = vmatpush.bf16.msra.mxu0 %v6152
    %6658 = vmatpush.bf16.msra.mxu0 %v6145
    %6659 = vmatmul.bf16.gmra.mxu0 %v5372
    %v6660 = vpop.f32.mrf.mxu0
    %v6661 = vadd.f32 %v5581, %v6660
    %v6662 = vpop.f32.mrf.mxu0
    %6663 = vdwg.mxu0
    %6664 = vmatpush.bf16.msra.mxu0 %v6250
    %6665 = vmatpush.bf16.msra.mxu0 %v6243
    %6666 = vmatpush.bf16.msra.mxu0 %v6236
    %6667 = vmatpush.bf16.msra.mxu0 %v6229
    %6668 = vmatpush.bf16.msra.mxu0 %v6222
    %6669 = vmatpush.bf16.msra.mxu0 %v6215
    %6670 = vmatpush.bf16.msra.mxu0 %v6208
    %6671 = vmatpush.bf16.msra.mxu0 %v6201
    %6672 = vmatmul.bf16.gmra.mxu0 %v5373
    %v6673 = vpop.f32.mrf.mxu0
    %v6674 = vadd.f32 %v6661, %v6673
    %v6675 = vpop.f32.mrf.mxu0
    %6676 = vdwg.mxu0
    %6677 = vmatpush.bf16.msra.mxu0 %v6306
    %6678 = vmatpush.bf16.msra.mxu0 %v6299
    %6679 = vmatpush.bf16.msra.mxu0 %v6292
    %6680 = vmatpush.bf16.msra.mxu0 %v6285
    %6681 = vmatpush.bf16.msra.mxu0 %v6278
    %6682 = vmatpush.bf16.msra.mxu0 %v6271
    %6683 = vmatpush.bf16.msra.mxu0 %v6264
    %6684 = vmatpush.bf16.msra.mxu0 %v6257
    %6685 = vmatmul.bf16.gmra.mxu0 %v5374
    %v6686 = vpop.f32.mrf.mxu0
    %v6687 = vadd.f32 %v6674, %v6686
    %v6688 = vpop.f32.mrf.mxu0
    %6689 = vdwg.mxu0
    %6690 = vmatpush.bf16.msra.mxu0 0
    %6691 = vmatpush.bf16.msra.mxu0 0
    %6692 = vmatpush.bf16.msra.mxu0 0
    %6693 = vmatpush.bf16.msra.mxu0 0
    %6694 = vmatpush.bf16.msra.mxu0 0
    %6695 = vmatpush.bf16.msra.mxu0 0
    %6696 = vmatpush.bf16.msra.mxu0 0
    %6697 = vmatpush.bf16.msra.mxu0 %v6313
    %6698 = vmatmul.bf16.gmra.mxu0 %v6493
    %v6699 = vpop.f32.mrf.mxu0
    %v6700 = vadd.f32 %v6687, %v6699
    %v6701 = vpop.f32.mrf.mxu0
    %6702 = vdwg.mxu0
    %6703 = vmatpush.bf16.msra.mxu0 %v6195
    %6704 = vmatpush.bf16.msra.mxu0 %v6188
    %6705 = vmatpush.bf16.msra.mxu0 %v6181
    %6706 = vmatpush.bf16.msra.mxu0 %v6174
    %6707 = vmatpush.bf16.msra.mxu0 %v6167
    %6708 = vmatpush.bf16.msra.mxu0 %v6160
    %6709 = vmatpush.bf16.msra.mxu0 %v6153
    %6710 = vmatpush.bf16.msra.mxu0 %v6146
    %6711 = vmatmul.bf16.gmra.mxu0 %v5372
    %v6712 = vpop.f32.mrf.mxu0
    %v6713 = vadd.f32 %v5582, %v6712
    %v6714 = vpop.f32.mrf.mxu0
    %6715 = vdwg.mxu0
    %6716 = vmatpush.bf16.msra.mxu0 %v6251
    %6717 = vmatpush.bf16.msra.mxu0 %v6244
    %6718 = vmatpush.bf16.msra.mxu0 %v6237
    %6719 = vmatpush.bf16.msra.mxu0 %v6230
    %6720 = vmatpush.bf16.msra.mxu0 %v6223
    %6721 = vmatpush.bf16.msra.mxu0 %v6216
    %6722 = vmatpush.bf16.msra.mxu0 %v6209
    %6723 = vmatpush.bf16.msra.mxu0 %v6202
    %6724 = vmatmul.bf16.gmra.mxu0 %v5373
    %v6725 = vpop.f32.mrf.mxu0
    %v6726 = vadd.f32 %v6713, %v6725
    %v6727 = vpop.f32.mrf.mxu0
    %6728 = vdwg.mxu0
    %6729 = vmatpush.bf16.msra.mxu0 %v6307
    %6730 = vmatpush.bf16.msra.mxu0 %v6300
    %6731 = vmatpush.bf16.msra.mxu0 %v6293
    %6732 = vmatpush.bf16.msra.mxu0 %v6286
    %6733 = vmatpush.bf16.msra.mxu0 %v6279
    %6734 = vmatpush.bf16.msra.mxu0 %v6272
    %6735 = vmatpush.bf16.msra.mxu0 %v6265
    %6736 = vmatpush.bf16.msra.mxu0 %v6258
    %6737 = vmatmul.bf16.gmra.mxu0 %v5374
    %v6738 = vpop.f32.mrf.mxu0
    %v6739 = vadd.f32 %v6726, %v6738
    %v6740 = vpop.f32.mrf.mxu0
    %6741 = vdwg.mxu0
    %6742 = vmatpush.bf16.msra.mxu0 0
    %6743 = vmatpush.bf16.msra.mxu0 0
    %6744 = vmatpush.bf16.msra.mxu0 0
    %6745 = vmatpush.bf16.msra.mxu0 0
    %6746 = vmatpush.bf16.msra.mxu0 0
    %6747 = vmatpush.bf16.msra.mxu0 0
    %6748 = vmatpush.bf16.msra.mxu0 0
    %6749 = vmatpush.bf16.msra.mxu0 %v6314
    %6750 = vmatmul.bf16.gmra.mxu0 %v6493
    %v6751 = vpop.f32.mrf.mxu0
    %v6752 = vadd.f32 %v6739, %v6751
    %v6753 = vpop.f32.mrf.mxu0
    %6754 = vdwg.mxu0
    %6755 = vmatpush.bf16.msra.mxu0 %v6196
    %6756 = vmatpush.bf16.msra.mxu0 %v6189
    %6757 = vmatpush.bf16.msra.mxu0 %v6182
    %6758 = vmatpush.bf16.msra.mxu0 %v6175
    %6759 = vmatpush.bf16.msra.mxu0 %v6168
    %6760 = vmatpush.bf16.msra.mxu0 %v6161
    %6761 = vmatpush.bf16.msra.mxu0 %v6154
    %6762 = vmatpush.bf16.msra.mxu0 %v6147
    %6763 = vmatmul.bf16.gmra.mxu0 %v5372
    %v6764 = vpop.f32.mrf.mxu0
    %v6765 = vadd.f32 %v5583, %v6764
    %v6766 = vpop.f32.mrf.mxu0
    %6767 = vdwg.mxu0
    %6768 = vmatpush.bf16.msra.mxu0 %v6252
    %6769 = vmatpush.bf16.msra.mxu0 %v6245
    %6770 = vmatpush.bf16.msra.mxu0 %v6238
    %6771 = vmatpush.bf16.msra.mxu0 %v6231
    %6772 = vmatpush.bf16.msra.mxu0 %v6224
    %6773 = vmatpush.bf16.msra.mxu0 %v6217
    %6774 = vmatpush.bf16.msra.mxu0 %v6210
    %6775 = vmatpush.bf16.msra.mxu0 %v6203
    %6776 = vmatmul.bf16.gmra.mxu0 %v5373
    %v6777 = vpop.f32.mrf.mxu0
    %v6778 = vadd.f32 %v6765, %v6777
    %v6779 = vpop.f32.mrf.mxu0
    %6780 = vdwg.mxu0
    %6781 = vmatpush.bf16.msra.mxu0 %v6308
    %6782 = vmatpush.bf16.msra.mxu0 %v6301
    %6783 = vmatpush.bf16.msra.mxu0 %v6294
    %6784 = vmatpush.bf16.msra.mxu0 %v6287
    %6785 = vmatpush.bf16.msra.mxu0 %v6280
    %6786 = vmatpush.bf16.msra.mxu0 %v6273
    %6787 = vmatpush.bf16.msra.mxu0 %v6266
    %6788 = vmatpush.bf16.msra.mxu0 %v6259
    %6789 = vmatmul.bf16.gmra.mxu0 %v5374
    %v6790 = vpop.f32.mrf.mxu0
    %v6791 = vadd.f32 %v6778, %v6790
    %v6792 = vpop.f32.mrf.mxu0
    %6793 = vdwg.mxu0
    %6794 = vmatpush.bf16.msra.mxu0 0
    %6795 = vmatpush.bf16.msra.mxu0 0
    %6796 = vmatpush.bf16.msra.mxu0 0
    %6797 = vmatpush.bf16.msra.mxu0 0
    %6798 = vmatpush.bf16.msra.mxu0 0
    %6799 = vmatpush.bf16.msra.mxu0 0
    %6800 = vmatpush.bf16.msra.mxu0 0
    %6801 = vmatpush.bf16.msra.mxu0 %v6315
    %6802 = vmatmul.bf16.gmra.mxu0 %v6493
    %v6803 = vpop.f32.mrf.mxu0
    %v6804 = vadd.f32 %v6791, %v6803
    %v6805 = vpop.f32.mrf.mxu0
    %6806 = vdwg.mxu0
    %6807 = vmatpush.bf16.msra.mxu0 %v6197
    %6808 = vmatpush.bf16.msra.mxu0 %v6190
    %6809 = vmatpush.bf16.msra.mxu0 %v6183
    %6810 = vmatpush.bf16.msra.mxu0 %v6176
    %6811 = vmatpush.bf16.msra.mxu0 %v6169
    %6812 = vmatpush.bf16.msra.mxu0 %v6162
    %6813 = vmatpush.bf16.msra.mxu0 %v6155
    %6814 = vmatpush.bf16.msra.mxu0 %v6148
    %6815 = vmatmul.bf16.gmra.mxu0 %v5372
    %v6816 = vpop.f32.mrf.mxu0
    %v6817 = vadd.f32 %v5584, %v6816
    %v6818 = vpop.f32.mrf.mxu0
    %6819 = vdwg.mxu0
    %6820 = vmatpush.bf16.msra.mxu0 %v6253
    %6821 = vmatpush.bf16.msra.mxu0 %v6246
    %6822 = vmatpush.bf16.msra.mxu0 %v6239
    %6823 = vmatpush.bf16.msra.mxu0 %v6232
    %6824 = vmatpush.bf16.msra.mxu0 %v6225
    %6825 = vmatpush.bf16.msra.mxu0 %v6218
    %6826 = vmatpush.bf16.msra.mxu0 %v6211
    %6827 = vmatpush.bf16.msra.mxu0 %v6204
    %6828 = vmatmul.bf16.gmra.mxu0 %v5373
    %v6829 = vpop.f32.mrf.mxu0
    %v6830 = vadd.f32 %v6817, %v6829
    %v6831 = vpop.f32.mrf.mxu0
    %6832 = vdwg.mxu0
    %6833 = vmatpush.bf16.msra.mxu0 %v6309
    %6834 = vmatpush.bf16.msra.mxu0 %v6302
    %6835 = vmatpush.bf16.msra.mxu0 %v6295
    %6836 = vmatpush.bf16.msra.mxu0 %v6288
    %6837 = vmatpush.bf16.msra.mxu0 %v6281
    %6838 = vmatpush.bf16.msra.mxu0 %v6274
    %6839 = vmatpush.bf16.msra.mxu0 %v6267
    %6840 = vmatpush.bf16.msra.mxu0 %v6260
    %6841 = vmatmul.bf16.gmra.mxu0 %v5374
    %v6842 = vpop.f32.mrf.mxu0
    %v6843 = vadd.f32 %v6830, %v6842
    %v6844 = vpop.f32.mrf.mxu0
    %6845 = vdwg.mxu0
    %6846 = vmatpush.bf16.msra.mxu0 0
    %6847 = vmatpush.bf16.msra.mxu0 0
    %6848 = vmatpush.bf16.msra.mxu0 0
    %6849 = vmatpush.bf16.msra.mxu0 0
    %6850 = vmatpush.bf16.msra.mxu0 0
    %6851 = vmatpush.bf16.msra.mxu0 0
    %6852 = vmatpush.bf16.msra.mxu0 0
    %6853 = vmatpush.bf16.msra.mxu0 %v6316
    %6854 = vmatmul.bf16.gmra.mxu0 %v6493
    %v6855 = vpop.f32.mrf.mxu0
    %v6856 = vadd.f32 %v6843, %v6855
    %v6857 = vpop.f32.mrf.mxu0
    %6858 = vdwg.mxu0
    %v6859 = vsub.f32 0.0, %v6544
    %v6860 = vsub.f32 0.0, %v6596
    %v6861 = vsub.f32 0.0, %v6648
    %v6862 = vsub.f32 0.0, %v6700
    %v6863 = vsub.f32 0.0, %v6752
    %v6864 = vsub.f32 0.0, %v6804
    %v6865 = vsub.f32 0.0, %v6856
    %v6866 = vmul.f32 %v6859, 1.442695
    %v6867 = vpow.pop %v6866
    %v6868 = vmul.f32 %v6860, 1.442695
    %v6869 = vpow.pop %v6868
    %v6870 = vmul.f32 %v6861, 1.442695
    %v6871 = vpow.pop %v6870
    %v6872 = vmul.f32 %v6862, 1.442695
    %v6873 = vpow.pop %v6872
    %v6874 = vmul.f32 %v6863, 1.442695
    %v6875 = vpow.pop %v6874
    %v6876 = vmul.f32 %v6864, 1.442695
    %v6877 = vpow.pop %v6876
    %v6878 = vmul.f32 %v6865, 1.442695
    %v6879 = vpow.pop %v6878
    %v6880 = vadd.f32 %v6867, 1.0
    %v6881 = vadd.f32 %v6869, 1.0
    %v6882 = vadd.f32 %v6871, 1.0
    %v6883 = vadd.f32 %v6873, 1.0
    %v6884 = vadd.f32 %v6875, 1.0
    %v6885 = vadd.f32 %v6877, 1.0
    %v6886 = vadd.f32 %v6879, 1.0
    %v6887 = vrcp.pop %v6880
    %v6888 = vrcp.pop %v6881
    %v6889 = vrcp.pop %v6882
    %v6890 = vrcp.pop %v6883
    %v6891 = vrcp.pop %v6884
    %v6892 = vrcp.pop %v6885
    %v6893 = vrcp.pop %v6886
    %v6894 = vpack.c.bf16 %v6888, %v6887
    %v6895 = vpack.c.bf16 %v6890, %v6889
    %v6896 = vpack.c.bf16 %v6892, %v6891
    %v6897 = vpack.c.bf16 %v6893, %v6893
    %6898 = vst [vmem:[%s18] sm:$0xff] %v6894
    %6899 = vst [vmem:[%s18 + $0x8] sm:$0xff] %v6895
    %6900 = vst [vmem:[%s18 + $0x10] sm:$0xff] %v6896
    %vm6901 = vcmask 125952
    %6902 = vst.msk [vmem:[%s18 + $0x18] sm:$0xf] %vm6901, %v6897
    // Predicated region
    $region82: #{vae_forward.1} parent=1 // pred_check
      _
    $region83: #{vae_forward.1} parent=1 // pred_check_branch
      %6904 = sbr.rel (0) target = $region85
    $region84: #{vae_forward.1} parent=1 // pred_region
      _
    $region85: #{vae_forward.1} parent=1 // pred_fallthru
      _
    // Predicated region
    $region86: #{vae_forward.1} parent=1 // pred_check
      _
    $region87: #{vae_forward.1} parent=1 // pred_check_branch
      %6906 = sbr.rel (0) target = $region89
    $region88: #{vae_forward.1} parent=1 // pred_region
      _
    $region89: #{vae_forward.1} parent=1 // pred_fallthru
      _
    // Predicated region
    $region90: #{vae_forward.1} parent=1 // pred_check
      _
    $region91: #{vae_forward.1} parent=1 // pred_check_branch
      %6908 = sbr.rel (0) target = $region93
    $region92: #{vae_forward.1} parent=1 // pred_region
      _
    $region93: #{vae_forward.1} parent=1 // pred_fallthru
      _
    // Predicated region
    $region94: #{vae_forward.1} parent=1 // pred_check
      _
    $region95: #{vae_forward.1} parent=1 // pred_check_branch
      %6910 = sbr.rel (0) target = $region97
    $region96: #{vae_forward.1} parent=1 // pred_region
      _
    $region97: #{vae_forward.1} parent=1 // pred_fallthru
      _
    %6911 = vsyncpa [#allocation3], 1
    %6912 = vsyncpa [#allocation5], 1

</llo_original>
